<compile_context>
chip_gen: v5e
topology: v5e:2x2
jax: 0.10.0
libtpu: 0.0.40
codegen_flags: <defaults>
</compile_context>

<pallas_src>
import functools

import jax
import jax.numpy as jnp
from jax import lax
from jax.experimental import pallas as pl
from jax.experimental.pallas import tpu as pltpu


def _resblock_e_kernel(x_ref, w1_ref, w2_ref, m_ref, o_ref, patches_ref,
                       *, H, W, C, K, n_body):
    """Full ResBlock_E forward on a (C, NB*HW) channel-major, batch-fused slab."""
    HW = H * W
    L = x_ref.shape[-1]               # NB * HW (batch fused into lanes)
    KK = K * K
    KKC = KK * C
    KKCE = patches_ref.shape[0]       # KKC + bias row + pad (multiple of 8)
    P = K // 2

    x = x_ref[0].astype(jnp.float32)  # (C, L) channel-major, lane-dense
    w1 = w1_ref[...]                  # (C, KKCE), bias folded into tail column
    w2 = w2_ref[...]

    # Constant tail rows of the patch matrix: one all-ones row (bias) + zero pad.
    n_ext = KKCE - KKC
    ext = (lax.broadcasted_iota(jnp.int32, (n_ext, L), 0) == 0)
    patches_ref[pl.ds(KKC, n_ext), :] = ext.astype(patches_ref.dtype)

    def conv(a, wmat):
        # Roll-based im2col written straight into the persistent VMEM buffer the
        # MXU will read: K*K XLU lane-rolls + dense border-mask multiplies.
        for kh in range(K):
            for kw in range(K):
                dh, dw = kh - P, kw - P
                j = kh * K + kw
                s = (-(dh * W + dw)) % L
                t = a if s == 0 else pltpu.roll(a, s, 1)        # XLU lane roll
                if dh != 0 or dw != 0:
                    t = t * m_ref[pl.ds(j * C, C), :]           # dense (C,L) mask
                patches_ref[pl.ds(j * C, C), :] = t.astype(patches_ref.dtype)
        # ONE fused MXU matmul per conv; bias comes from the ones row.
        return jnp.dot(wmat, patches_ref[...],
                       preferred_element_type=jnp.float32)       # (C, L)

    leaky = lambda v: jnp.maximum(v, 0.2 * v)                    # LeakyReLU(0.2)

    res = leaky(x)
    for _ in range(n_body):                                      # shared body, 3x
        t = conv(res, w1)
        t = jnp.maximum(t, 0.0)  # TODO(synk): injected `act` module assumed ReLU
        t = conv(t, w2)
        res = leaky(t) + res
    o_ref[0] = res.astype(o_ref.dtype)


def _make_tap_masks(H, W, K):
    """(K*K, H*W) f32 masks: 1 where tap (kh,kw) reads in-bounds, 0 on border."""
    P = K // 2
    hh = jnp.arange(H)[:, None]
    ww = jnp.arange(W)[None, :]
    masks = []
    for kh in range(K):
        for kw in range(K):
            dh, dw = kh - P, kw - P
            valid = ((hh + dh >= 0) & (hh + dh < H) &
                     (ww + dw >= 0) & (ww + dw < W))
            masks.append(valid.reshape(H * W))
    return jnp.stack(masks, axis=0).astype(jnp.float32)


def _default_grid_steps(N):
    """2 grid steps on v7x (2 TensorCores/chip), otherwise 1."""
    try:
        kind = jax.devices()[0].device_kind.lower()
    except Exception:
        kind = ""
    cores = 2 if ("v7" in kind or "7x" in kind) else 1
    return cores if (cores > 1 and N % cores == 0) else 1


def resblock_e_pallas(x_nchw, w1_oihw, b1, w2_oihw, b2, *, n_body=3,
                      grid_steps=None, matmul_dtype=jnp.float32):
    """x: (N,C,H,W) NCHW; w*: (O,I,K,K) OIHW (folded DOConv); b*: (C,)."""
    N, C, H, W = x_nchw.shape
    K = w1_oihw.shape[-1]
    assert K % 2 == 1, "residual add requires SAME padding (odd kernel size)"
    HW = H * W
    KK = K * K
    KKC = KK * C
    KKCE = ((KKC + 1 + 7) // 8) * 8          # + bias row, padded to sublane mult.

    G = grid_steps if grid_steps is not None else _default_grid_steps(N)
    assert N % G == 0
    NB = N // G
    L = NB * HW                               # fused lane width per grid step

    # Channel-major, batch-fused lanes: x_fold[g, c, b*HW + p] = x[g*NB+b, c, p].
    # (Wrapper-side layout plumbing only; tiny array.)
    x_fold = (x_nchw.reshape(G, NB, C, HW)
                     .transpose(0, 2, 1, 3)
                     .reshape(G, C, L))

    # Weight matrix for the fused-tap matmul, with bias folded into an extra
    # column (matched by the constant ones row of the patch matrix):
    #   w[o, (kh*K+kw)*C + i] = w_oihw[o, i, kh, kw];  w[o, KKC] = bias[o]
    def fold_w(w_oihw, b):
        wm = jnp.transpose(w_oihw, (0, 2, 3, 1)).reshape(C, KKC).astype(jnp.float32)
        ext = jnp.zeros((C, KKCE - KKC), jnp.float32).at[:, 0].set(
            b.astype(jnp.float32))
        return jnp.concatenate([wm, ext], axis=1).astype(matmul_dtype)

    w1e = fold_w(w1_oihw, b1)
    w2e = fold_w(w2_oihw, b2)

    # Border masks, tiled over the NB fused batch elements (lanes) and over the
    # C channels (sublanes) so the in-kernel multiply needs no broadcasts.
    tap_masks = _make_tap_masks(H, W, K)                       # (KK, HW)
    mask = jnp.repeat(jnp.tile(tap_masks, (1, NB)), C, axis=0)  # (KKC, L)

    kernel = functools.partial(_resblock_e_kernel, H=H, W=W, C=C, K=K,
                               n_body=n_body)
    out = pl.pallas_call(
        kernel,
        out_shape=jax.ShapeDtypeStruct((G, C, L), x_nchw.dtype),
        grid_spec=pltpu.PrefetchScalarGridSpec(
            num_scalar_prefetch=0,
            grid=(G,),
            in_specs=[
                pl.BlockSpec((1, C, L), lambda g: (g, 0, 0)),     # x slab
                pl.BlockSpec((C, KKCE), lambda g: (0, 0)),        # w1 (+bias)
                pl.BlockSpec((C, KKCE), lambda g: (0, 0)),        # w2 (+bias)
                pl.BlockSpec((KKC, L), lambda g: (0, 0)),         # border masks
            ],
            out_specs=pl.BlockSpec((1, C, L), lambda g: (g, 0, 0)),
            scratch_shapes=[pltpu.VMEM((KKCE, L), matmul_dtype)],  # patch buffer
        ),
        compiler_params=pltpu.CompilerParams(
            dimension_semantics=("parallel",)),                   # v7x: 2 TCs
    )(x_fold, w1e, w2e, mask)

    return (out.reshape(G, C, NB, HW)
               .transpose(0, 2, 1, 3)
               .reshape(N, C, H, W))


def fold_doconv_weight(key, cin, cout, k, scale):
    """DOConv2d eval-time fold: effective W = einsum('ims,ois->oim', D, W) -> OIHW."""
    mn = k * k
    d_mul = mn                                             # DOConv default D_mul = M*N
    k_w, k_d = jax.random.split(key)
    w_param = jax.random.normal(k_w, (cout, cin, d_mul), jnp.float32) * scale
    d_diff = jax.random.normal(k_d, (cin, mn, d_mul), jnp.float32) * 0.01
    d_diag = jnp.tile(jnp.eye(mn, d_mul, dtype=jnp.float32)[None], (cin, 1, 1))
    d = d_diag + d_diff
    dow = jnp.einsum('ims,ois->oim', d, w_param)           # (cout, cin, M*N)
    return dow.reshape(cout, cin, k, k)                    # torch OIHW


if __name__ == "__main__":
    # ResBlock_E(wf=8, kernel_size=3, reduction=unused, bias=True, act=ReLU)
    N, C, H, W, K = 2, 8, 16, 16, 3
    key = jax.random.PRNGKey(0)
    kx, k1, kb1, k2, kb2 = jax.random.split(key, 5)

    x = jax.random.normal(kx, (N, C, H, W), jnp.float32)   # PyTorch NCHW layout
    scale = float((C * K * K) ** -0.5)
    w1 = fold_doconv_weight(k1, C, C, K, scale)            # (O, I, K, K)
    w2 = fold_doconv_weight(k2, C, C, K, scale)
    b1 = (jax.random.uniform(kb1, (C,), jnp.float32) - 0.5) * 2.0 * scale
    b2 = (jax.random.uniform(kb2, (C,), jnp.float32) - 0.5) * 2.0 * scale

    out = jax.block_until_ready(resblock_e_pallas(x, w1, b1, w2, b2))

    # Pure-JAX reference of the full ResBlock_E forward (f32-precision convs).
    dn = ("NCHW", "OIHW", "NCHW")

    def conv_ref(z, w, b):
        y = lax.conv_general_dilated(z, w, (1, 1), "SAME", dimension_numbers=dn,
                                     precision=lax.Precision.HIGHEST)
        return y + b.reshape(1, C, 1, 1)

    leaky = lambda v: jnp.maximum(v, 0.2 * v)
    ref = leaky(x)
    for _ in range(3):
        t = jnp.maximum(conv_ref(ref, w1, b1), 0.0)
        t = conv_ref(t, w2, b2)
        ref = leaky(t) + ref

    err = float(jnp.max(jnp.abs(out - ref)))
    assert jnp.allclose(out, ref, atol=1e-3, rtol=1e-3), f"max abs err {err}"
    print("KERNEL_OK")
</pallas_src>

<mosaic_0001>
module attributes {stable_mosaic.version = 11 : i64} {
  func.func @_resblock_e_kernel(%arg0: i32, %arg1: memref<1x8x512xf32, #tpu.memory_space<vmem>>, %arg2: memref<8x80xf32, #tpu.memory_space<vmem>>, %arg3: memref<8x80xf32, #tpu.memory_space<vmem>>, %arg4: memref<72x512xf32, #tpu.memory_space<vmem>>, %arg5: memref<1x8x512xf32, #tpu.memory_space<vmem>>, %arg6: memref<80x512xf32, #tpu.memory_space<vmem>>) attributes {dimension_semantics = [#tpu.dimension_semantics<parallel>], iteration_bounds = array<i64: 1>, scalar_prefetch = 0 : i64, scratch_operands = 1 : i64, tpu.core_type = #tpu.core_type<tc>, window_params = [{transform_indices = @transform_0, window_bounds = array<i64: 1, 8, 512>}, {pipeline_mode = #tpu.pipeline_mode<synchronous>, transform_indices = @transform_1, window_bounds = array<i64: 8, 80>}, {pipeline_mode = #tpu.pipeline_mode<synchronous>, transform_indices = @transform_2, window_bounds = array<i64: 8, 80>}, {pipeline_mode = #tpu.pipeline_mode<synchronous>, transform_indices = @transform_3, window_bounds = array<i64: 72, 512>}, {transform_indices = @transform_4, window_bounds = array<i64: 1, 8, 512>}]} {
    %c0 = arith.constant 0 : index
    %c0_0 = arith.constant 0 : index
    %c0_1 = arith.constant 0 : index
    %0 = vector.load %arg1[%c0, %c0_0, %c0_1] : memref<1x8x512xf32, #tpu.memory_space<vmem>>, vector<1x8x512xf32>
    %1 = vector.shape_cast %0 : vector<1x8x512xf32> to vector<8x512xf32>
    %c0_2 = arith.constant 0 : index
    %c0_3 = arith.constant 0 : index
    %2 = vector.load %arg2[%c0_2, %c0_3] : memref<8x80xf32, #tpu.memory_space<vmem>>, vector<8x80xf32>
    %c0_4 = arith.constant 0 : index
    %c0_5 = arith.constant 0 : index
    %3 = vector.load %arg3[%c0_4, %c0_5] : memref<8x80xf32, #tpu.memory_space<vmem>>, vector<8x80xf32>
    %4 = tpu.iota {dimensions = array<i32: 0>} : vector<8x512xi32>
    %c0_i32 = arith.constant 0 : i32
    %5 = vector.broadcast %c0_i32 : i32 to vector<8x512xi32>
    %6 = arith.cmpi eq, %4, %5 : vector<8x512xi32>
    %7 = arith.extui %6 : vector<8x512xi1> to vector<8x512xi32>
    %8 = arith.sitofp %7 : vector<8x512xi32> to vector<8x512xf32>
    %c72 = arith.constant 72 : index
    %c0_6 = arith.constant 0 : index
    %9 = vector.load %arg6[%c72, %c0_6] : memref<80x512xf32, #tpu.memory_space<vmem>>, vector<8x512xf32>
    tpu.vector_store %arg6[%c72, %c0_6], %8 {strides = array<i32>} : memref<80x512xf32, #tpu.memory_space<vmem>>, vector<8x512xf32>,
    %cst = arith.constant 2.000000e-01 : f32
    %10 = vector.broadcast %cst : f32 to vector<8x512xf32>
    %11 = arith.mulf %10, %1 : vector<8x512xf32>
    %12 = arith.maximumf %1, %11 : vector<8x512xf32>
    %c17_i32 = arith.constant 17 : i32
    %13 = tpu.dynamic_rotate %12 by %c17_i32 dim 1 : vector<8x512xf32>, i32 -> vector<8x512xf32>
    %c0_7 = arith.constant 0 : index
    %c0_8 = arith.constant 0 : index
    %14 = vector.load %arg4[%c0_7, %c0_8] : memref<72x512xf32, #tpu.memory_space<vmem>>, vector<8x512xf32>
    %15 = arith.mulf %13, %14 : vector<8x512xf32>
    %c0_9 = arith.constant 0 : index
    %c0_10 = arith.constant 0 : index
    %16 = vector.load %arg6[%c0_9, %c0_10] : memref<80x512xf32, #tpu.memory_space<vmem>>, vector<8x512xf32>
    tpu.vector_store %arg6[%c0_9, %c0_10], %15 {strides = array<i32>} : memref<80x512xf32, #tpu.memory_space<vmem>>, vector<8x512xf32>,
    %c16_i32 = arith.constant 16 : i32
    %17 = tpu.dynamic_rotate %12 by %c16_i32 dim 1 : vector<8x512xf32>, i32 -> vector<8x512xf32>
    %c8 = arith.constant 8 : index
    %c0_11 = arith.constant 0 : index
    %18 = vector.load %arg4[%c8, %c0_11] : memref<72x512xf32, #tpu.memory_space<vmem>>, vector<8x512xf32>
    %19 = arith.mulf %17, %18 : vector<8x512xf32>
    %c8_12 = arith.constant 8 : index
    %c0_13 = arith.constant 0 : index
    %20 = vector.load %arg6[%c8_12, %c0_13] : memref<80x512xf32, #tpu.memory_space<vmem>>, vector<8x512xf32>
    tpu.vector_store %arg6[%c8_12, %c0_13], %19 {strides = array<i32>} : memref<80x512xf32, #tpu.memory_space<vmem>>, vector<8x512xf32>,
    %c15_i32 = arith.constant 15 : i32
    %21 = tpu.dynamic_rotate %12 by %c15_i32 dim 1 : vector<8x512xf32>, i32 -> vector<8x512xf32>
    %c16 = arith.constant 16 : index
    %c0_14 = arith.constant 0 : index
    %22 = vector.load %arg4[%c16, %c0_14] : memref<72x512xf32, #tpu.memory_space<vmem>>, vector<8x512xf32>
    %23 = arith.mulf %21, %22 : vector<8x512xf32>
    %c16_15 = arith.constant 16 : index
    %c0_16 = arith.constant 0 : index
    %24 = vector.load %arg6[%c16_15, %c0_16] : memref<80x512xf32, #tpu.memory_space<vmem>>, vector<8x512xf32>
    tpu.vector_store %arg6[%c16_15, %c0_16], %23 {strides = array<i32>} : memref<80x512xf32, #tpu.memory_space<vmem>>, vector<8x512xf32>,
    %c1_i32 = arith.constant 1 : i32
    %25 = tpu.dynamic_rotate %12 by %c1_i32 dim 1 : vector<8x512xf32>, i32 -> vector<8x512xf32>
    %c24 = arith.constant 24 : index
    %c0_17 = arith.constant 0 : index
    %26 = vector.load %arg4[%c24, %c0_17] : memref<72x512xf32, #tpu.memory_space<vmem>>, vector<8x512xf32>
    %27 = arith.mulf %25, %26 : vector<8x512xf32>
    %c24_18 = arith.constant 24 : index
    %c0_19 = arith.constant 0 : index
    %28 = vector.load %arg6[%c24_18, %c0_19] : memref<80x512xf32, #tpu.memory_space<vmem>>, vector<8x512xf32>
    tpu.vector_store %arg6[%c24_18, %c0_19], %27 {strides = array<i32>} : memref<80x512xf32, #tpu.memory_space<vmem>>, vector<8x512xf32>,
    %c32 = arith.constant 32 : index
    %c0_20 = arith.constant 0 : index
    %29 = vector.load %arg6[%c32, %c0_20] : memref<80x512xf32, #tpu.memory_space<vmem>>, vector<8x512xf32>
    tpu.vector_store %arg6[%c32, %c0_20], %12 {strides = array<i32>} : memref<80x512xf32, #tpu.memory_space<vmem>>, vector<8x512xf32>,
    %c511_i32 = arith.constant 511 : i32
    %30 = tpu.dynamic_rotate %12 by %c511_i32 dim 1 : vector<8x512xf32>, i32 -> vector<8x512xf32>
    %c40 = arith.constant 40 : index
    %c0_21 = arith.constant 0 : index
    %31 = vector.load %arg4[%c40, %c0_21] : memref<72x512xf32, #tpu.memory_space<vmem>>, vector<8x512xf32>
    %32 = arith.mulf %30, %31 : vector<8x512xf32>
    %c40_22 = arith.constant 40 : index
    %c0_23 = arith.constant 0 : index
    %33 = vector.load %arg6[%c40_22, %c0_23] : memref<80x512xf32, #tpu.memory_space<vmem>>, vector<8x512xf32>
    tpu.vector_store %arg6[%c40_22, %c0_23], %32 {strides = array<i32>} : memref<80x512xf32, #tpu.memory_space<vmem>>, vector<8x512xf32>,
    %c497_i32 = arith.constant 497 : i32
    %34 = tpu.dynamic_rotate %12 by %c497_i32 dim 1 : vector<8x512xf32>, i32 -> vector<8x512xf32>
    %c48 = arith.constant 48 : index
    %c0_24 = arith.constant 0 : index
    %35 = vector.load %arg4[%c48, %c0_24] : memref<72x512xf32, #tpu.memory_space<vmem>>, vector<8x512xf32>
    %36 = arith.mulf %34, %35 : vector<8x512xf32>
    %c48_25 = arith.constant 48 : index
    %c0_26 = arith.constant 0 : index
    %37 = vector.load %arg6[%c48_25, %c0_26] : memref<80x512xf32, #tpu.memory_space<vmem>>, vector<8x512xf32>
    tpu.vector_store %arg6[%c48_25, %c0_26], %36 {strides = array<i32>} : memref<80x512xf32, #tpu.memory_space<vmem>>, vector<8x512xf32>,
    %c496_i32 = arith.constant 496 : i32
    %38 = tpu.dynamic_rotate %12 by %c496_i32 dim 1 : vector<8x512xf32>, i32 -> vector<8x512xf32>
    %c56 = arith.constant 56 : index
    %c0_27 = arith.constant 0 : index
    %39 = vector.load %arg4[%c56, %c0_27] : memref<72x512xf32, #tpu.memory_space<vmem>>, vector<8x512xf32>
    %40 = arith.mulf %38, %39 : vector<8x512xf32>
    %c56_28 = arith.constant 56 : index
    %c0_29 = arith.constant 0 : index
    %41 = vector.load %arg6[%c56_28, %c0_29] : memref<80x512xf32, #tpu.memory_space<vmem>>, vector<8x512xf32>
    tpu.vector_store %arg6[%c56_28, %c0_29], %40 {strides = array<i32>} : memref<80x512xf32, #tpu.memory_space<vmem>>, vector<8x512xf32>,
    %c495_i32 = arith.constant 495 : i32
    %42 = tpu.dynamic_rotate %12 by %c495_i32 dim 1 : vector<8x512xf32>, i32 -> vector<8x512xf32>
    %c64 = arith.constant 64 : index
    %c0_30 = arith.constant 0 : index
    %43 = vector.load %arg4[%c64, %c0_30] : memref<72x512xf32, #tpu.memory_space<vmem>>, vector<8x512xf32>
    %44 = arith.mulf %42, %43 : vector<8x512xf32>
    %c64_31 = arith.constant 64 : index
    %c0_32 = arith.constant 0 : index
    %45 = vector.load %arg6[%c64_31, %c0_32] : memref<80x512xf32, #tpu.memory_space<vmem>>, vector<8x512xf32>
    tpu.vector_store %arg6[%c64_31, %c0_32], %44 {strides = array<i32>} : memref<80x512xf32, #tpu.memory_space<vmem>>, vector<8x512xf32>,
    %c0_33 = arith.constant 0 : index
    %c0_34 = arith.constant 0 : index
    %46 = vector.load %arg6[%c0_33, %c0_34] : memref<80x512xf32, #tpu.memory_space<vmem>>, vector<80x512xf32>
    %cst_35 = arith.constant dense<0.000000e+00> : vector<8x512xf32>
    %47 = tpu.matmul %2, %46, %cst_35 {dimension_numbers = #tpu.dot_dimension_numbers<[1], [0], [0], [1], [0, 0, 1, 1], [], []>} : vector<8x80xf32>, vector<80x512xf32>, vector<8x512xf32> -> vector<8x512xf32>
    %cst_36 = arith.constant 0.000000e+00 : f32
    %48 = vector.broadcast %cst_36 : f32 to vector<8x512xf32>
    %49 = arith.maximumf %47, %48 : vector<8x512xf32>
    %c17_i32_37 = arith.constant 17 : i32
    %50 = tpu.dynamic_rotate %49 by %c17_i32_37 dim 1 : vector<8x512xf32>, i32 -> vector<8x512xf32>
    %c0_38 = arith.constant 0 : index
    %c0_39 = arith.constant 0 : index
    %51 = vector.load %arg4[%c0_38, %c0_39] : memref<72x512xf32, #tpu.memory_space<vmem>>, vector<8x512xf32>
    %52 = arith.mulf %50, %51 : vector<8x512xf32>
    %c0_40 = arith.constant 0 : index
    %c0_41 = arith.constant 0 : index
    %53 = vector.load %arg6[%c0_40, %c0_41] : memref<80x512xf32, #tpu.memory_space<vmem>>, vector<8x512xf32>
    tpu.vector_store %arg6[%c0_40, %c0_41], %52 {strides = array<i32>} : memref<80x512xf32, #tpu.memory_space<vmem>>, vector<8x512xf32>,
    %c16_i32_42 = arith.constant 16 : i32
    %54 = tpu.dynamic_rotate %49 by %c16_i32_42 dim 1 : vector<8x512xf32>, i32 -> vector<8x512xf32>
    %c8_43 = arith.constant 8 : index
    %c0_44 = arith.constant 0 : index
    %55 = vector.load %arg4[%c8_43, %c0_44] : memref<72x512xf32, #tpu.memory_space<vmem>>, vector<8x512xf32>
    %56 = arith.mulf %54, %55 : vector<8x512xf32>
    %c8_45 = arith.constant 8 : index
    %c0_46 = arith.constant 0 : index
    %57 = vector.load %arg6[%c8_45, %c0_46] : memref<80x512xf32, #tpu.memory_space<vmem>>, vector<8x512xf32>
    tpu.vector_store %arg6[%c8_45, %c0_46], %56 {strides = array<i32>} : memref<80x512xf32, #tpu.memory_space<vmem>>, vector<8x512xf32>,
    %c15_i32_47 = arith.constant 15 : i32
    %58 = tpu.dynamic_rotate %49 by %c15_i32_47 dim 1 : vector<8x512xf32>, i32 -> vector<8x512xf32>
    %c16_48 = arith.constant 16 : index
    %c0_49 = arith.constant 0 : index
    %59 = vector.load %arg4[%c16_48, %c0_49] : memref<72x512xf32, #tpu.memory_space<vmem>>, vector<8x512xf32>
    %60 = arith.mulf %58, %59 : vector<8x512xf32>
    %c16_50 = arith.constant 16 : index
    %c0_51 = arith.constant 0 : index
    %61 = vector.load %arg6[%c16_50, %c0_51] : memref<80x512xf32, #tpu.memory_space<vmem>>, vector<8x512xf32>
    tpu.vector_store %arg6[%c16_50, %c0_51], %60 {strides = array<i32>} : memref<80x512xf32, #tpu.memory_space<vmem>>, vector<8x512xf32>,
    %c1_i32_52 = arith.constant 1 : i32
    %62 = tpu.dynamic_rotate %49 by %c1_i32_52 dim 1 : vector<8x512xf32>, i32 -> vector<8x512xf32>
    %c24_53 = arith.constant 24 : index
    %c0_54 = arith.constant 0 : index
    %63 = vector.load %arg4[%c24_53, %c0_54] : memref<72x512xf32, #tpu.memory_space<vmem>>, vector<8x512xf32>
    %64 = arith.mulf %62, %63 : vector<8x512xf32>
    %c24_55 = arith.constant 24 : index
    %c0_56 = arith.constant 0 : index
    %65 = vector.load %arg6[%c24_55, %c0_56] : memref<80x512xf32, #tpu.memory_space<vmem>>, vector<8x512xf32>
    tpu.vector_store %arg6[%c24_55, %c0_56], %64 {strides = array<i32>} : memref<80x512xf32, #tpu.memory_space<vmem>>, vector<8x512xf32>,
    %c32_57 = arith.constant 32 : index
    %c0_58 = arith.constant 0 : index
    %66 = vector.load %arg6[%c32_57, %c0_58] : memref<80x512xf32, #tpu.memory_space<vmem>>, vector<8x512xf32>
    tpu.vector_store %arg6[%c32_57, %c0_58], %49 {strides = array<i32>} : memref<80x512xf32, #tpu.memory_space<vmem>>, vector<8x512xf32>,
    %c511_i32_59 = arith.constant 511 : i32
    %67 = tpu.dynamic_rotate %49 by %c511_i32_59 dim 1 : vector<8x512xf32>, i32 -> vector<8x512xf32>
    %c40_60 = arith.constant 40 : index
    %c0_61 = arith.constant 0 : index
    %68 = vector.load %arg4[%c40_60, %c0_61] : memref<72x512xf32, #tpu.memory_space<vmem>>, vector<8x512xf32>
    %69 = arith.mulf %67, %68 : vector<8x512xf32>
    %c40_62 = arith.constant 40 : index
    %c0_63 = arith.constant 0 : index
    %70 = vector.load %arg6[%c40_62, %c0_63] : memref<80x512xf32, #tpu.memory_space<vmem>>, vector<8x512xf32>
    tpu.vector_store %arg6[%c40_62, %c0_63], %69 {strides = array<i32>} : memref<80x512xf32, #tpu.memory_space<vmem>>, vector<8x512xf32>,
    %c497_i32_64 = arith.constant 497 : i32
    %71 = tpu.dynamic_rotate %49 by %c497_i32_64 dim 1 : vector<8x512xf32>, i32 -> vector<8x512xf32>
    %c48_65 = arith.constant 48 : index
    %c0_66 = arith.constant 0 : index
    %72 = vector.load %arg4[%c48_65, %c0_66] : memref<72x512xf32, #tpu.memory_space<vmem>>, vector<8x512xf32>
    %73 = arith.mulf %71, %72 : vector<8x512xf32>
    %c48_67 = arith.constant 48 : index
    %c0_68 = arith.constant 0 : index
    %74 = vector.load %arg6[%c48_67, %c0_68] : memref<80x512xf32, #tpu.memory_space<vmem>>, vector<8x512xf32>
    tpu.vector_store %arg6[%c48_67, %c0_68], %73 {strides = array<i32>} : memref<80x512xf32, #tpu.memory_space<vmem>>, vector<8x512xf32>,
    %c496_i32_69 = arith.constant 496 : i32
    %75 = tpu.dynamic_rotate %49 by %c496_i32_69 dim 1 : vector<8x512xf32>, i32 -> vector<8x512xf32>
    %c56_70 = arith.constant 56 : index
    %c0_71 = arith.constant 0 : index
    %76 = vector.load %arg4[%c56_70, %c0_71] : memref<72x512xf32, #tpu.memory_space<vmem>>, vector<8x512xf32>
    %77 = arith.mulf %75, %76 : vector<8x512xf32>
    %c56_72 = arith.constant 56 : index
    %c0_73 = arith.constant 0 : index
    %78 = vector.load %arg6[%c56_72, %c0_73] : memref<80x512xf32, #tpu.memory_space<vmem>>, vector<8x512xf32>
    tpu.vector_store %arg6[%c56_72, %c0_73], %77 {strides = array<i32>} : memref<80x512xf32, #tpu.memory_space<vmem>>, vector<8x512xf32>,
    %c495_i32_74 = arith.constant 495 : i32
    %79 = tpu.dynamic_rotate %49 by %c495_i32_74 dim 1 : vector<8x512xf32>, i32 -> vector<8x512xf32>
    %c64_75 = arith.constant 64 : index
    %c0_76 = arith.constant 0 : index
    %80 = vector.load %arg4[%c64_75, %c0_76] : memref<72x512xf32, #tpu.memory_space<vmem>>, vector<8x512xf32>
    %81 = arith.mulf %79, %80 : vector<8x512xf32>
    %c64_77 = arith.constant 64 : index
    %c0_78 = arith.constant 0 : index
    %82 = vector.load %arg6[%c64_77, %c0_78] : memref<80x512xf32, #tpu.memory_space<vmem>>, vector<8x512xf32>
    tpu.vector_store %arg6[%c64_77, %c0_78], %81 {strides = array<i32>} : memref<80x512xf32, #tpu.memory_space<vmem>>, vector<8x512xf32>,
    %c0_79 = arith.constant 0 : index
    %c0_80 = arith.constant 0 : index
    %83 = vector.load %arg6[%c0_79, %c0_80] : memref<80x512xf32, #tpu.memory_space<vmem>>, vector<80x512xf32>
    %cst_81 = arith.constant dense<0.000000e+00> : vector<8x512xf32>
    %84 = tpu.matmul %3, %83, %cst_81 {dimension_numbers = #tpu.dot_dimension_numbers<[1], [0], [0], [1], [0, 0, 1, 1], [], []>} : vector<8x80xf32>, vector<80x512xf32>, vector<8x512xf32> -> vector<8x512xf32>
    %cst_82 = arith.constant 2.000000e-01 : f32
    %85 = vector.broadcast %cst_82 : f32 to vector<8x512xf32>
    %86 = arith.mulf %85, %84 : vector<8x512xf32>
    %87 = arith.maximumf %84, %86 : vector<8x512xf32>
    %88 = arith.addf %87, %12 : vector<8x512xf32>
    %c17_i32_83 = arith.constant 17 : i32
    %89 = tpu.dynamic_rotate %88 by %c17_i32_83 dim 1 : vector<8x512xf32>, i32 -> vector<8x512xf32>
    %c0_84 = arith.constant 0 : index
    %c0_85 = arith.constant 0 : index
    %90 = vector.load %arg4[%c0_84, %c0_85] : memref<72x512xf32, #tpu.memory_space<vmem>>, vector<8x512xf32>
    %91 = arith.mulf %89, %90 : vector<8x512xf32>
    %c0_86 = arith.constant 0 : index
    %c0_87 = arith.constant 0 : index
    %92 = vector.load %arg6[%c0_86, %c0_87] : memref<80x512xf32, #tpu.memory_space<vmem>>, vector<8x512xf32>
    tpu.vector_store %arg6[%c0_86, %c0_87], %91 {strides = array<i32>} : memref<80x512xf32, #tpu.memory_space<vmem>>, vector<8x512xf32>,
    %c16_i32_88 = arith.constant 16 : i32
    %93 = tpu.dynamic_rotate %88 by %c16_i32_88 dim 1 : vector<8x512xf32>, i32 -> vector<8x512xf32>
    %c8_89 = arith.constant 8 : index
    %c0_90 = arith.constant 0 : index
    %94 = vector.load %arg4[%c8_89, %c0_90] : memref<72x512xf32, #tpu.memory_space<vmem>>, vector<8x512xf32>
    %95 = arith.mulf %93, %94 : vector<8x512xf32>
    %c8_91 = arith.constant 8 : index
    %c0_92 = arith.constant 0 : index
    %96 = vector.load %arg6[%c8_91, %c0_92] : memref<80x512xf32, #tpu.memory_space<vmem>>, vector<8x512xf32>
    tpu.vector_store %arg6[%c8_91, %c0_92], %95 {strides = array<i32>} : memref<80x512xf32, #tpu.memory_space<vmem>>, vector<8x512xf32>,
    %c15_i32_93 = arith.constant 15 : i32
    %97 = tpu.dynamic_rotate %88 by %c15_i32_93 dim 1 : vector<8x512xf32>, i32 -> vector<8x512xf32>
    %c16_94 = arith.constant 16 : index
    %c0_95 = arith.constant 0 : index
    %98 = vector.load %arg4[%c16_94, %c0_95] : memref<72x512xf32, #tpu.memory_space<vmem>>, vector<8x512xf32>
    %99 = arith.mulf %97, %98 : vector<8x512xf32>
    %c16_96 = arith.constant 16 : index
    %c0_97 = arith.constant 0 : index
    %100 = vector.load %arg6[%c16_96, %c0_97] : memref<80x512xf32, #tpu.memory_space<vmem>>, vector<8x512xf32>
    tpu.vector_store %arg6[%c16_96, %c0_97], %99 {strides = array<i32>} : memref<80x512xf32, #tpu.memory_space<vmem>>, vector<8x512xf32>,
    %c1_i32_98 = arith.constant 1 : i32
    %101 = tpu.dynamic_rotate %88 by %c1_i32_98 dim 1 : vector<8x512xf32>, i32 -> vector<8x512xf32>
    %c24_99 = arith.constant 24 : index
    %c0_100 = arith.constant 0 : index
    %102 = vector.load %arg4[%c24_99, %c0_100] : memref<72x512xf32, #tpu.memory_space<vmem>>, vector<8x512xf32>
    %103 = arith.mulf %101, %102 : vector<8x512xf32>
    %c24_101 = arith.constant 24 : index
    %c0_102 = arith.constant 0 : index
    %104 = vector.load %arg6[%c24_101, %c0_102] : memref<80x512xf32, #tpu.memory_space<vmem>>, vector<8x512xf32>
    tpu.vector_store %arg6[%c24_101, %c0_102], %103 {strides = array<i32>} : memref<80x512xf32, #tpu.memory_space<vmem>>, vector<8x512xf32>,
    %c32_103 = arith.constant 32 : index
    %c0_104 = arith.constant 0 : index
    %105 = vector.load %arg6[%c32_103, %c0_104] : memref<80x512xf32, #tpu.memory_space<vmem>>, vector<8x512xf32>
    tpu.vector_store %arg6[%c32_103, %c0_104], %88 {strides = array<i32>} : memref<80x512xf32, #tpu.memory_space<vmem>>, vector<8x512xf32>,
    %c511_i32_105 = arith.constant 511 : i32
    %106 = tpu.dynamic_rotate %88 by %c511_i32_105 dim 1 : vector<8x512xf32>, i32 -> vector<8x512xf32>
    %c40_106 = arith.constant 40 : index
    %c0_107 = arith.constant 0 : index
    %107 = vector.load %arg4[%c40_106, %c0_107] : memref<72x512xf32, #tpu.memory_space<vmem>>, vector<8x512xf32>
    %108 = arith.mulf %106, %107 : vector<8x512xf32>
    %c40_108 = arith.constant 40 : index
    %c0_109 = arith.constant 0 : index
    %109 = vector.load %arg6[%c40_108, %c0_109] : memref<80x512xf32, #tpu.memory_space<vmem>>, vector<8x512xf32>
    tpu.vector_store %arg6[%c40_108, %c0_109], %108 {strides = array<i32>} : memref<80x512xf32, #tpu.memory_space<vmem>>, vector<8x512xf32>,
    %c497_i32_110 = arith.constant 497 : i32
    %110 = tpu.dynamic_rotate %88 by %c497_i32_110 dim 1 : vector<8x512xf32>, i32 -> vector<8x512xf32>
    %c48_111 = arith.constant 48 : index
    %c0_112 = arith.constant 0 : index
    %111 = vector.load %arg4[%c48_111, %c0_112] : memref<72x512xf32, #tpu.memory_space<vmem>>, vector<8x512xf32>
    %112 = arith.mulf %110, %111 : vector<8x512xf32>
    %c48_113 = arith.constant 48 : index
    %c0_114 = arith.constant 0 : index
    %113 = vector.load %arg6[%c48_113, %c0_114] : memref<80x512xf32, #tpu.memory_space<vmem>>, vector<8x512xf32>
    tpu.vector_store %arg6[%c48_113, %c0_114], %112 {strides = array<i32>} : memref<80x512xf32, #tpu.memory_space<vmem>>, vector<8x512xf32>,
    %c496_i32_115 = arith.constant 496 : i32
    %114 = tpu.dynamic_rotate %88 by %c496_i32_115 dim 1 : vector<8x512xf32>, i32 -> vector<8x512xf32>
    %c56_116 = arith.constant 56 : index
    %c0_117 = arith.constant 0 : index
    %115 = vector.load %arg4[%c56_116, %c0_117] : memref<72x512xf32, #tpu.memory_space<vmem>>, vector<8x512xf32>
    %116 = arith.mulf %114, %115 : vector<8x512xf32>
    %c56_118 = arith.constant 56 : index
    %c0_119 = arith.constant 0 : index
    %117 = vector.load %arg6[%c56_118, %c0_119] : memref<80x512xf32, #tpu.memory_space<vmem>>, vector<8x512xf32>
    tpu.vector_store %arg6[%c56_118, %c0_119], %116 {strides = array<i32>} : memref<80x512xf32, #tpu.memory_space<vmem>>, vector<8x512xf32>,
    %c495_i32_120 = arith.constant 495 : i32
    %118 = tpu.dynamic_rotate %88 by %c495_i32_120 dim 1 : vector<8x512xf32>, i32 -> vector<8x512xf32>
    %c64_121 = arith.constant 64 : index
    %c0_122 = arith.constant 0 : index
    %119 = vector.load %arg4[%c64_121, %c0_122] : memref<72x512xf32, #tpu.memory_space<vmem>>, vector<8x512xf32>
    %120 = arith.mulf %118, %119 : vector<8x512xf32>
    %c64_123 = arith.constant 64 : index
    %c0_124 = arith.constant 0 : index
    %121 = vector.load %arg6[%c64_123, %c0_124] : memref<80x512xf32, #tpu.memory_space<vmem>>, vector<8x512xf32>
    tpu.vector_store %arg6[%c64_123, %c0_124], %120 {strides = array<i32>} : memref<80x512xf32, #tpu.memory_space<vmem>>, vector<8x512xf32>,
    %c0_125 = arith.constant 0 : index
    %c0_126 = arith.constant 0 : index
    %122 = vector.load %arg6[%c0_125, %c0_126] : memref<80x512xf32, #tpu.memory_space<vmem>>, vector<80x512xf32>
    %cst_127 = arith.constant dense<0.000000e+00> : vector<8x512xf32>
    %123 = tpu.matmul %2, %122, %cst_127 {dimension_numbers = #tpu.dot_dimension_numbers<[1], [0], [0], [1], [0, 0, 1, 1], [], []>} : vector<8x80xf32>, vector<80x512xf32>, vector<8x512xf32> -> vector<8x512xf32>
    %cst_128 = arith.constant 0.000000e+00 : f32
    %124 = vector.broadcast %cst_128 : f32 to vector<8x512xf32>
    %125 = arith.maximumf %123, %124 : vector<8x512xf32>
    %c17_i32_129 = arith.constant 17 : i32
    %126 = tpu.dynamic_rotate %125 by %c17_i32_129 dim 1 : vector<8x512xf32>, i32 -> vector<8x512xf32>
    %c0_130 = arith.constant 0 : index
    %c0_131 = arith.constant 0 : index
    %127 = vector.load %arg4[%c0_130, %c0_131] : memref<72x512xf32, #tpu.memory_space<vmem>>, vector<8x512xf32>
    %128 = arith.mulf %126, %127 : vector<8x512xf32>
    %c0_132 = arith.constant 0 : index
    %c0_133 = arith.constant 0 : index
    %129 = vector.load %arg6[%c0_132, %c0_133] : memref<80x512xf32, #tpu.memory_space<vmem>>, vector<8x512xf32>
    tpu.vector_store %arg6[%c0_132, %c0_133], %128 {strides = array<i32>} : memref<80x512xf32, #tpu.memory_space<vmem>>, vector<8x512xf32>,
    %c16_i32_134 = arith.constant 16 : i32
    %130 = tpu.dynamic_rotate %125 by %c16_i32_134 dim 1 : vector<8x512xf32>, i32 -> vector<8x512xf32>
    %c8_135 = arith.constant 8 : index
    %c0_136 = arith.constant 0 : index
    %131 = vector.load %arg4[%c8_135, %c0_136] : memref<72x512xf32, #tpu.memory_space<vmem>>, vector<8x512xf32>
    %132 = arith.mulf %130, %131 : vector<8x512xf32>
    %c8_137 = arith.constant 8 : index
    %c0_138 = arith.constant 0 : index
    %133 = vector.load %arg6[%c8_137, %c0_138] : memref<80x512xf32, #tpu.memory_space<vmem>>, vector<8x512xf32>
    tpu.vector_store %arg6[%c8_137, %c0_138], %132 {strides = array<i32>} : memref<80x512xf32, #tpu.memory_space<vmem>>, vector<8x512xf32>,
    %c15_i32_139 = arith.constant 15 : i32
    %134 = tpu.dynamic_rotate %125 by %c15_i32_139 dim 1 : vector<8x512xf32>, i32 -> vector<8x512xf32>
    %c16_140 = arith.constant 16 : index
    %c0_141 = arith.constant 0 : index
    %135 = vector.load %arg4[%c16_140, %c0_141] : memref<72x512xf32, #tpu.memory_space<vmem>>, vector<8x512xf32>
    %136 = arith.mulf %134, %135 : vector<8x512xf32>
    %c16_142 = arith.constant 16 : index
    %c0_143 = arith.constant 0 : index
    %137 = vector.load %arg6[%c16_142, %c0_143] : memref<80x512xf32, #tpu.memory_space<vmem>>, vector<8x512xf32>
    tpu.vector_store %arg6[%c16_142, %c0_143], %136 {strides = array<i32>} : memref<80x512xf32, #tpu.memory_space<vmem>>, vector<8x512xf32>,
    %c1_i32_144 = arith.constant 1 : i32
    %138 = tpu.dynamic_rotate %125 by %c1_i32_144 dim 1 : vector<8x512xf32>, i32 -> vector<8x512xf32>
    %c24_145 = arith.constant 24 : index
    %c0_146 = arith.constant 0 : index
    %139 = vector.load %arg4[%c24_145, %c0_146] : memref<72x512xf32, #tpu.memory_space<vmem>>, vector<8x512xf32>
    %140 = arith.mulf %138, %139 : vector<8x512xf32>
    %c24_147 = arith.constant 24 : index
    %c0_148 = arith.constant 0 : index
    %141 = vector.load %arg6[%c24_147, %c0_148] : memref<80x512xf32, #tpu.memory_space<vmem>>, vector<8x512xf32>
    tpu.vector_store %arg6[%c24_147, %c0_148], %140 {strides = array<i32>} : memref<80x512xf32, #tpu.memory_space<vmem>>, vector<8x512xf32>,
    %c32_149 = arith.constant 32 : index
    %c0_150 = arith.constant 0 : index
    %142 = vector.load %arg6[%c32_149, %c0_150] : memref<80x512xf32, #tpu.memory_space<vmem>>, vector<8x512xf32>
    tpu.vector_store %arg6[%c32_149, %c0_150], %125 {strides = array<i32>} : memref<80x512xf32, #tpu.memory_space<vmem>>, vector<8x512xf32>,
    %c511_i32_151 = arith.constant 511 : i32
    %143 = tpu.dynamic_rotate %125 by %c511_i32_151 dim 1 : vector<8x512xf32>, i32 -> vector<8x512xf32>
    %c40_152 = arith.constant 40 : index
    %c0_153 = arith.constant 0 : index
    %144 = vector.load %arg4[%c40_152, %c0_153] : memref<72x512xf32, #tpu.memory_space<vmem>>, vector<8x512xf32>
    %145 = arith.mulf %143, %144 : vector<8x512xf32>
    %c40_154 = arith.constant 40 : index
    %c0_155 = arith.constant 0 : index
    %146 = vector.load %arg6[%c40_154, %c0_155] : memref<80x512xf32, #tpu.memory_space<vmem>>, vector<8x512xf32>
    tpu.vector_store %arg6[%c40_154, %c0_155], %145 {strides = array<i32>} : memref<80x512xf32, #tpu.memory_space<vmem>>, vector<8x512xf32>,
    %c497_i32_156 = arith.constant 497 : i32
    %147 = tpu.dynamic_rotate %125 by %c497_i32_156 dim 1 : vector<8x512xf32>, i32 -> vector<8x512xf32>
    %c48_157 = arith.constant 48 : index
    %c0_158 = arith.constant 0 : index
    %148 = vector.load %arg4[%c48_157, %c0_158] : memref<72x512xf32, #tpu.memory_space<vmem>>, vector<8x512xf32>
    %149 = arith.mulf %147, %148 : vector<8x512xf32>
    %c48_159 = arith.constant 48 : index
    %c0_160 = arith.constant 0 : index
    %150 = vector.load %arg6[%c48_159, %c0_160] : memref<80x512xf32, #tpu.memory_space<vmem>>, vector<8x512xf32>
    tpu.vector_store %arg6[%c48_159, %c0_160], %149 {strides = array<i32>} : memref<80x512xf32, #tpu.memory_space<vmem>>, vector<8x512xf32>,
    %c496_i32_161 = arith.constant 496 : i32
    %151 = tpu.dynamic_rotate %125 by %c496_i32_161 dim 1 : vector<8x512xf32>, i32 -> vector<8x512xf32>
    %c56_162 = arith.constant 56 : index
    %c0_163 = arith.constant 0 : index
    %152 = vector.load %arg4[%c56_162, %c0_163] : memref<72x512xf32, #tpu.memory_space<vmem>>, vector<8x512xf32>
    %153 = arith.mulf %151, %152 : vector<8x512xf32>
    %c56_164 = arith.constant 56 : index
    %c0_165 = arith.constant 0 : index
    %154 = vector.load %arg6[%c56_164, %c0_165] : memref<80x512xf32, #tpu.memory_space<vmem>>, vector<8x512xf32>
    tpu.vector_store %arg6[%c56_164, %c0_165], %153 {strides = array<i32>} : memref<80x512xf32, #tpu.memory_space<vmem>>, vector<8x512xf32>,
    %c495_i32_166 = arith.constant 495 : i32
    %155 = tpu.dynamic_rotate %125 by %c495_i32_166 dim 1 : vector<8x512xf32>, i32 -> vector<8x512xf32>
    %c64_167 = arith.constant 64 : index
    %c0_168 = arith.constant 0 : index
    %156 = vector.load %arg4[%c64_167, %c0_168] : memref<72x512xf32, #tpu.memory_space<vmem>>, vector<8x512xf32>
    %157 = arith.mulf %155, %156 : vector<8x512xf32>
    %c64_169 = arith.constant 64 : index
    %c0_170 = arith.constant 0 : index
    %158 = vector.load %arg6[%c64_169, %c0_170] : memref<80x512xf32, #tpu.memory_space<vmem>>, vector<8x512xf32>
    tpu.vector_store %arg6[%c64_169, %c0_170], %157 {strides = array<i32>} : memref<80x512xf32, #tpu.memory_space<vmem>>, vector<8x512xf32>,
    %c0_171 = arith.constant 0 : index
    %c0_172 = arith.constant 0 : index
    %159 = vector.load %arg6[%c0_171, %c0_172] : memref<80x512xf32, #tpu.memory_space<vmem>>, vector<80x512xf32>
    %cst_173 = arith.constant dense<0.000000e+00> : vector<8x512xf32>
    %160 = tpu.matmul %3, %159, %cst_173 {dimension_numbers = #tpu.dot_dimension_numbers<[1], [0], [0], [1], [0, 0, 1, 1], [], []>} : vector<8x80xf32>, vector<80x512xf32>, vector<8x512xf32> -> vector<8x512xf32>
    %cst_174 = arith.constant 2.000000e-01 : f32
    %161 = vector.broadcast %cst_174 : f32 to vector<8x512xf32>
    %162 = arith.mulf %161, %160 : vector<8x512xf32>
    %163 = arith.maximumf %160, %162 : vector<8x512xf32>
    %164 = arith.addf %163, %88 : vector<8x512xf32>
    %c17_i32_175 = arith.constant 17 : i32
    %165 = tpu.dynamic_rotate %164 by %c17_i32_175 dim 1 : vector<8x512xf32>, i32 -> vector<8x512xf32>
    %c0_176 = arith.constant 0 : index
    %c0_177 = arith.constant 0 : index
    %166 = vector.load %arg4[%c0_176, %c0_177] : memref<72x512xf32, #tpu.memory_space<vmem>>, vector<8x512xf32>
    %167 = arith.mulf %165, %166 : vector<8x512xf32>
    %c0_178 = arith.constant 0 : index
    %c0_179 = arith.constant 0 : index
    %168 = vector.load %arg6[%c0_178, %c0_179] : memref<80x512xf32, #tpu.memory_space<vmem>>, vector<8x512xf32>
    tpu.vector_store %arg6[%c0_178, %c0_179], %167 {strides = array<i32>} : memref<80x512xf32, #tpu.memory_space<vmem>>, vector<8x512xf32>,
    %c16_i32_180 = arith.constant 16 : i32
    %169 = tpu.dynamic_rotate %164 by %c16_i32_180 dim 1 : vector<8x512xf32>, i32 -> vector<8x512xf32>
    %c8_181 = arith.constant 8 : index
    %c0_182 = arith.constant 0 : index
    %170 = vector.load %arg4[%c8_181, %c0_182] : memref<72x512xf32, #tpu.memory_space<vmem>>, vector<8x512xf32>
    %171 = arith.mulf %169, %170 : vector<8x512xf32>
    %c8_183 = arith.constant 8 : index
    %c0_184 = arith.constant 0 : index
    %172 = vector.load %arg6[%c8_183, %c0_184] : memref<80x512xf32, #tpu.memory_space<vmem>>, vector<8x512xf32>
    tpu.vector_store %arg6[%c8_183, %c0_184], %171 {strides = array<i32>} : memref<80x512xf32, #tpu.memory_space<vmem>>, vector<8x512xf32>,
    %c15_i32_185 = arith.constant 15 : i32
    %173 = tpu.dynamic_rotate %164 by %c15_i32_185 dim 1 : vector<8x512xf32>, i32 -> vector<8x512xf32>
    %c16_186 = arith.constant 16 : index
    %c0_187 = arith.constant 0 : index
    %174 = vector.load %arg4[%c16_186, %c0_187] : memref<72x512xf32, #tpu.memory_space<vmem>>, vector<8x512xf32>
    %175 = arith.mulf %173, %174 : vector<8x512xf32>
    %c16_188 = arith.constant 16 : index
    %c0_189 = arith.constant 0 : index
    %176 = vector.load %arg6[%c16_188, %c0_189] : memref<80x512xf32, #tpu.memory_space<vmem>>, vector<8x512xf32>
    tpu.vector_store %arg6[%c16_188, %c0_189], %175 {strides = array<i32>} : memref<80x512xf32, #tpu.memory_space<vmem>>, vector<8x512xf32>,
    %c1_i32_190 = arith.constant 1 : i32
    %177 = tpu.dynamic_rotate %164 by %c1_i32_190 dim 1 : vector<8x512xf32>, i32 -> vector<8x512xf32>
    %c24_191 = arith.constant 24 : index
    %c0_192 = arith.constant 0 : index
    %178 = vector.load %arg4[%c24_191, %c0_192] : memref<72x512xf32, #tpu.memory_space<vmem>>, vector<8x512xf32>
    %179 = arith.mulf %177, %178 : vector<8x512xf32>
    %c24_193 = arith.constant 24 : index
    %c0_194 = arith.constant 0 : index
    %180 = vector.load %arg6[%c24_193, %c0_194] : memref<80x512xf32, #tpu.memory_space<vmem>>, vector<8x512xf32>
    tpu.vector_store %arg6[%c24_193, %c0_194], %179 {strides = array<i32>} : memref<80x512xf32, #tpu.memory_space<vmem>>, vector<8x512xf32>,
    %c32_195 = arith.constant 32 : index
    %c0_196 = arith.constant 0 : index
    %181 = vector.load %arg6[%c32_195, %c0_196] : memref<80x512xf32, #tpu.memory_space<vmem>>, vector<8x512xf32>
    tpu.vector_store %arg6[%c32_195, %c0_196], %164 {strides = array<i32>} : memref<80x512xf32, #tpu.memory_space<vmem>>, vector<8x512xf32>,
    %c511_i32_197 = arith.constant 511 : i32
    %182 = tpu.dynamic_rotate %164 by %c511_i32_197 dim 1 : vector<8x512xf32>, i32 -> vector<8x512xf32>
    %c40_198 = arith.constant 40 : index
    %c0_199 = arith.constant 0 : index
    %183 = vector.load %arg4[%c40_198, %c0_199] : memref<72x512xf32, #tpu.memory_space<vmem>>, vector<8x512xf32>
    %184 = arith.mulf %182, %183 : vector<8x512xf32>
    %c40_200 = arith.constant 40 : index
    %c0_201 = arith.constant 0 : index
    %185 = vector.load %arg6[%c40_200, %c0_201] : memref<80x512xf32, #tpu.memory_space<vmem>>, vector<8x512xf32>
    tpu.vector_store %arg6[%c40_200, %c0_201], %184 {strides = array<i32>} : memref<80x512xf32, #tpu.memory_space<vmem>>, vector<8x512xf32>,
    %c497_i32_202 = arith.constant 497 : i32
    %186 = tpu.dynamic_rotate %164 by %c497_i32_202 dim 1 : vector<8x512xf32>, i32 -> vector<8x512xf32>
    %c48_203 = arith.constant 48 : index
    %c0_204 = arith.constant 0 : index
    %187 = vector.load %arg4[%c48_203, %c0_204] : memref<72x512xf32, #tpu.memory_space<vmem>>, vector<8x512xf32>
    %188 = arith.mulf %186, %187 : vector<8x512xf32>
    %c48_205 = arith.constant 48 : index
    %c0_206 = arith.constant 0 : index
    %189 = vector.load %arg6[%c48_205, %c0_206] : memref<80x512xf32, #tpu.memory_space<vmem>>, vector<8x512xf32>
    tpu.vector_store %arg6[%c48_205, %c0_206], %188 {strides = array<i32>} : memref<80x512xf32, #tpu.memory_space<vmem>>, vector<8x512xf32>,
    %c496_i32_207 = arith.constant 496 : i32
    %190 = tpu.dynamic_rotate %164 by %c496_i32_207 dim 1 : vector<8x512xf32>, i32 -> vector<8x512xf32>
    %c56_208 = arith.constant 56 : index
    %c0_209 = arith.constant 0 : index
    %191 = vector.load %arg4[%c56_208, %c0_209] : memref<72x512xf32, #tpu.memory_space<vmem>>, vector<8x512xf32>
    %192 = arith.mulf %190, %191 : vector<8x512xf32>
    %c56_210 = arith.constant 56 : index
    %c0_211 = arith.constant 0 : index
    %193 = vector.load %arg6[%c56_210, %c0_211] : memref<80x512xf32, #tpu.memory_space<vmem>>, vector<8x512xf32>
    tpu.vector_store %arg6[%c56_210, %c0_211], %192 {strides = array<i32>} : memref<80x512xf32, #tpu.memory_space<vmem>>, vector<8x512xf32>,
    %c495_i32_212 = arith.constant 495 : i32
    %194 = tpu.dynamic_rotate %164 by %c495_i32_212 dim 1 : vector<8x512xf32>, i32 -> vector<8x512xf32>
    %c64_213 = arith.constant 64 : index
    %c0_214 = arith.constant 0 : index
    %195 = vector.load %arg4[%c64_213, %c0_214] : memref<72x512xf32, #tpu.memory_space<vmem>>, vector<8x512xf32>
    %196 = arith.mulf %194, %195 : vector<8x512xf32>
    %c64_215 = arith.constant 64 : index
    %c0_216 = arith.constant 0 : index
    %197 = vector.load %arg6[%c64_215, %c0_216] : memref<80x512xf32, #tpu.memory_space<vmem>>, vector<8x512xf32>
    tpu.vector_store %arg6[%c64_215, %c0_216], %196 {strides = array<i32>} : memref<80x512xf32, #tpu.memory_space<vmem>>, vector<8x512xf32>,
    %c0_217 = arith.constant 0 : index
    %c0_218 = arith.constant 0 : index
    %198 = vector.load %arg6[%c0_217, %c0_218] : memref<80x512xf32, #tpu.memory_space<vmem>>, vector<80x512xf32>
    %cst_219 = arith.constant dense<0.000000e+00> : vector<8x512xf32>
    %199 = tpu.matmul %2, %198, %cst_219 {dimension_numbers = #tpu.dot_dimension_numbers<[1], [0], [0], [1], [0, 0, 1, 1], [], []>} : vector<8x80xf32>, vector<80x512xf32>, vector<8x512xf32> -> vector<8x512xf32>
    %cst_220 = arith.constant 0.000000e+00 : f32
    %200 = vector.broadcast %cst_220 : f32 to vector<8x512xf32>
    %201 = arith.maximumf %199, %200 : vector<8x512xf32>
    %c17_i32_221 = arith.constant 17 : i32
    %202 = tpu.dynamic_rotate %201 by %c17_i32_221 dim 1 : vector<8x512xf32>, i32 -> vector<8x512xf32>
    %c0_222 = arith.constant 0 : index
    %c0_223 = arith.constant 0 : index
    %203 = vector.load %arg4[%c0_222, %c0_223] : memref<72x512xf32, #tpu.memory_space<vmem>>, vector<8x512xf32>
    %204 = arith.mulf %202, %203 : vector<8x512xf32>
    %c0_224 = arith.constant 0 : index
    %c0_225 = arith.constant 0 : index
    %205 = vector.load %arg6[%c0_224, %c0_225] : memref<80x512xf32, #tpu.memory_space<vmem>>, vector<8x512xf32>
    tpu.vector_store %arg6[%c0_224, %c0_225], %204 {strides = array<i32>} : memref<80x512xf32, #tpu.memory_space<vmem>>, vector<8x512xf32>,
    %c16_i32_226 = arith.constant 16 : i32
    %206 = tpu.dynamic_rotate %201 by %c16_i32_226 dim 1 : vector<8x512xf32>, i32 -> vector<8x512xf32>
    %c8_227 = arith.constant 8 : index
    %c0_228 = arith.constant 0 : index
    %207 = vector.load %arg4[%c8_227, %c0_228] : memref<72x512xf32, #tpu.memory_space<vmem>>, vector<8x512xf32>
    %208 = arith.mulf %206, %207 : vector<8x512xf32>
    %c8_229 = arith.constant 8 : index
    %c0_230 = arith.constant 0 : index
    %209 = vector.load %arg6[%c8_229, %c0_230] : memref<80x512xf32, #tpu.memory_space<vmem>>, vector<8x512xf32>
    tpu.vector_store %arg6[%c8_229, %c0_230], %208 {strides = array<i32>} : memref<80x512xf32, #tpu.memory_space<vmem>>, vector<8x512xf32>,
    %c15_i32_231 = arith.constant 15 : i32
    %210 = tpu.dynamic_rotate %201 by %c15_i32_231 dim 1 : vector<8x512xf32>, i32 -> vector<8x512xf32>
    %c16_232 = arith.constant 16 : index
    %c0_233 = arith.constant 0 : index
    %211 = vector.load %arg4[%c16_232, %c0_233] : memref<72x512xf32, #tpu.memory_space<vmem>>, vector<8x512xf32>
    %212 = arith.mulf %210, %211 : vector<8x512xf32>
    %c16_234 = arith.constant 16 : index
    %c0_235 = arith.constant 0 : index
    %213 = vector.load %arg6[%c16_234, %c0_235] : memref<80x512xf32, #tpu.memory_space<vmem>>, vector<8x512xf32>
    tpu.vector_store %arg6[%c16_234, %c0_235], %212 {strides = array<i32>} : memref<80x512xf32, #tpu.memory_space<vmem>>, vector<8x512xf32>,
    %c1_i32_236 = arith.constant 1 : i32
    %214 = tpu.dynamic_rotate %201 by %c1_i32_236 dim 1 : vector<8x512xf32>, i32 -> vector<8x512xf32>
    %c24_237 = arith.constant 24 : index
    %c0_238 = arith.constant 0 : index
    %215 = vector.load %arg4[%c24_237, %c0_238] : memref<72x512xf32, #tpu.memory_space<vmem>>, vector<8x512xf32>
    %216 = arith.mulf %214, %215 : vector<8x512xf32>
    %c24_239 = arith.constant 24 : index
    %c0_240 = arith.constant 0 : index
    %217 = vector.load %arg6[%c24_239, %c0_240] : memref<80x512xf32, #tpu.memory_space<vmem>>, vector<8x512xf32>
    tpu.vector_store %arg6[%c24_239, %c0_240], %216 {strides = array<i32>} : memref<80x512xf32, #tpu.memory_space<vmem>>, vector<8x512xf32>,
    %c32_241 = arith.constant 32 : index
    %c0_242 = arith.constant 0 : index
    %218 = vector.load %arg6[%c32_241, %c0_242] : memref<80x512xf32, #tpu.memory_space<vmem>>, vector<8x512xf32>
    tpu.vector_store %arg6[%c32_241, %c0_242], %201 {strides = array<i32>} : memref<80x512xf32, #tpu.memory_space<vmem>>, vector<8x512xf32>,
    %c511_i32_243 = arith.constant 511 : i32
    %219 = tpu.dynamic_rotate %201 by %c511_i32_243 dim 1 : vector<8x512xf32>, i32 -> vector<8x512xf32>
    %c40_244 = arith.constant 40 : index
    %c0_245 = arith.constant 0 : index
    %220 = vector.load %arg4[%c40_244, %c0_245] : memref<72x512xf32, #tpu.memory_space<vmem>>, vector<8x512xf32>
    %221 = arith.mulf %219, %220 : vector<8x512xf32>
    %c40_246 = arith.constant 40 : index
    %c0_247 = arith.constant 0 : index
    %222 = vector.load %arg6[%c40_246, %c0_247] : memref<80x512xf32, #tpu.memory_space<vmem>>, vector<8x512xf32>
    tpu.vector_store %arg6[%c40_246, %c0_247], %221 {strides = array<i32>} : memref<80x512xf32, #tpu.memory_space<vmem>>, vector<8x512xf32>,
    %c497_i32_248 = arith.constant 497 : i32
    %223 = tpu.dynamic_rotate %201 by %c497_i32_248 dim 1 : vector<8x512xf32>, i32 -> vector<8x512xf32>
    %c48_249 = arith.constant 48 : index
    %c0_250 = arith.constant 0 : index
    %224 = vector.load %arg4[%c48_249, %c0_250] : memref<72x512xf32, #tpu.memory_space<vmem>>, vector<8x512xf32>
    %225 = arith.mulf %223, %224 : vector<8x512xf32>
    %c48_251 = arith.constant 48 : index
    %c0_252 = arith.constant 0 : index
    %226 = vector.load %arg6[%c48_251, %c0_252] : memref<80x512xf32, #tpu.memory_space<vmem>>, vector<8x512xf32>
    tpu.vector_store %arg6[%c48_251, %c0_252], %225 {strides = array<i32>} : memref<80x512xf32, #tpu.memory_space<vmem>>, vector<8x512xf32>,
    %c496_i32_253 = arith.constant 496 : i32
    %227 = tpu.dynamic_rotate %201 by %c496_i32_253 dim 1 : vector<8x512xf32>, i32 -> vector<8x512xf32>
    %c56_254 = arith.constant 56 : index
    %c0_255 = arith.constant 0 : index
    %228 = vector.load %arg4[%c56_254, %c0_255] : memref<72x512xf32, #tpu.memory_space<vmem>>, vector<8x512xf32>
    %229 = arith.mulf %227, %228 : vector<8x512xf32>
    %c56_256 = arith.constant 56 : index
    %c0_257 = arith.constant 0 : index
    %230 = vector.load %arg6[%c56_256, %c0_257] : memref<80x512xf32, #tpu.memory_space<vmem>>, vector<8x512xf32>
    tpu.vector_store %arg6[%c56_256, %c0_257], %229 {strides = array<i32>} : memref<80x512xf32, #tpu.memory_space<vmem>>, vector<8x512xf32>,
    %c495_i32_258 = arith.constant 495 : i32
    %231 = tpu.dynamic_rotate %201 by %c495_i32_258 dim 1 : vector<8x512xf32>, i32 -> vector<8x512xf32>
    %c64_259 = arith.constant 64 : index
    %c0_260 = arith.constant 0 : index
    %232 = vector.load %arg4[%c64_259, %c0_260] : memref<72x512xf32, #tpu.memory_space<vmem>>, vector<8x512xf32>
    %233 = arith.mulf %231, %232 : vector<8x512xf32>
    %c64_261 = arith.constant 64 : index
    %c0_262 = arith.constant 0 : index
    %234 = vector.load %arg6[%c64_261, %c0_262] : memref<80x512xf32, #tpu.memory_space<vmem>>, vector<8x512xf32>
    tpu.vector_store %arg6[%c64_261, %c0_262], %233 {strides = array<i32>} : memref<80x512xf32, #tpu.memory_space<vmem>>, vector<8x512xf32>,
    %c0_263 = arith.constant 0 : index
    %c0_264 = arith.constant 0 : index
    %235 = vector.load %arg6[%c0_263, %c0_264] : memref<80x512xf32, #tpu.memory_space<vmem>>, vector<80x512xf32>
    %cst_265 = arith.constant dense<0.000000e+00> : vector<8x512xf32>
    %236 = tpu.matmul %3, %235, %cst_265 {dimension_numbers = #tpu.dot_dimension_numbers<[1], [0], [0], [1], [0, 0, 1, 1], [], []>} : vector<8x80xf32>, vector<80x512xf32>, vector<8x512xf32> -> vector<8x512xf32>
    %cst_266 = arith.constant 2.000000e-01 : f32
    %237 = vector.broadcast %cst_266 : f32 to vector<8x512xf32>
    %238 = arith.mulf %237, %236 : vector<8x512xf32>
    %239 = arith.maximumf %236, %238 : vector<8x512xf32>
    %240 = arith.addf %239, %164 : vector<8x512xf32>
    %c0_267 = arith.constant 0 : index
    %c0_268 = arith.constant 0 : index
    %c0_269 = arith.constant 0 : index
    %241 = vector.load %arg5[%c0_267, %c0_268, %c0_269] : memref<1x8x512xf32, #tpu.memory_space<vmem>>, vector<1x8x512xf32>
    %242 = vector.shape_cast %241 : vector<1x8x512xf32> to vector<8x512xf32>
    %243 = vector.shape_cast %240 : vector<8x512xf32> to vector<1x8x512xf32>
    tpu.vector_store %arg5[%c0_267, %c0_268, %c0_269], %243 {strides = array<i32>} : memref<1x8x512xf32, #tpu.memory_space<vmem>>, vector<1x8x512xf32>,
    return
  }
  func.func @transform_0(%arg0: i32) -> (i32, i32, i32) {
    %c0_i32 = arith.constant 0 : i32
    %c0_i32_0 = arith.constant 0 : i32
    %c0_i32_1 = arith.constant 0 : i32
    return %arg0, %c0_i32, %c0_i32_0 : i32, i32, i32
  }
  func.func @transform_1(%arg0: i32) -> (i32, i32) {
    %c0_i32 = arith.constant 0 : i32
    %c0_i32_0 = arith.constant 0 : i32
    %c0_i32_1 = arith.constant 0 : i32
    return %c0_i32, %c0_i32_0 : i32, i32
  }
  func.func @transform_2(%arg0: i32) -> (i32, i32) {
    %c0_i32 = arith.constant 0 : i32
    %c0_i32_0 = arith.constant 0 : i32
    %c0_i32_1 = arith.constant 0 : i32
    return %c0_i32, %c0_i32_0 : i32, i32
  }
  func.func @transform_3(%arg0: i32) -> (i32, i32) {
    %c0_i32 = arith.constant 0 : i32
    %c0_i32_0 = arith.constant 0 : i32
    %c0_i32_1 = arith.constant 0 : i32
    return %c0_i32, %c0_i32_0 : i32, i32
  }
  func.func @transform_4(%arg0: i32) -> (i32, i32, i32) {
    %c0_i32 = arith.constant 0 : i32
    %c0_i32_0 = arith.constant 0 : i32
    %c0_i32_1 = arith.constant 0 : i32
    return %arg0, %c0_i32, %c0_i32_0 : i32, i32, i32
  }
}

</mosaic_0001>

<llo_original>
// kernel: tpu_custom_call.1
$region0: #{tpu_custom_call.1}
  #allocation0 [shape = 'u32[]', space=smem, size = 0x4, offset = 0x4, fixed_abs, tag = 'smem constant byte address 0x4 - core index']
  #allocation1 [shape = 'u32[72,128]{1,0:T(1,128)}', space=vmem, size = 0x9000, scoped, tag = 'internal scratch']
  #allocation2 [shape = 'f32[80,512]{1,0:T(8,128)}', space=vmem, size = 0x28000, scoped, tag = 'scratch operand']
  %s0 = inlined_call_operand.hbm [shape: f32[1,8,512], index: 0, kind: input, shape index: {}]
  %s1 = inlined_call_operand.hbm [shape: f32[8,80], index: 1, kind: input, shape index: {}]
  %s2 = inlined_call_operand.hbm [shape: f32[8,80], index: 2, kind: input, shape index: {}]
  %s3 = inlined_call_operand.hbm [shape: f32[72,512], index: 3, kind: input, shape index: {}]
  %s4 = inlined_call_operand.hbm [shape: f32[1,8,512], index: 4, kind: output, shape index: {}]
  %s5 = sld [smem:[#allocation0]]
  $region42: #{tpu_custom_call.1} parent=0
    _
  %s7 = ssub.s32 1, %s5
  %s8 = scalar_select 0, %s7, %s5
  $region1: #{tpu_custom_call.1} parent=0
    #allocation3 [shape = 'u8[16384]{0}', space=vmem, size = 0x4000, scoped, tag = 'input window, operand 0, single buffered']
    #allocation4 [shape = 's32[1]{0}', space=sflag, size = 0x4, scoped, tag = 'scoped memory for tpu_custom_call.1']
    #allocation5 [shape = 's32[1]{0}', space=sflag, size = 0x4, scoped, tag = 'scoped memory for tpu_custom_call.1']
    #allocation6 [shape = 'u8[4096]{0}', space=vmem, size = 0x1000, scoped, tag = 'input window, operand 1, single buffered']
    #allocation7 [shape = 's32[1]{0}', space=sflag, size = 0x4, scoped, tag = 'scoped memory for tpu_custom_call.1']
    #allocation8 [shape = 'u8[4096]{0}', space=vmem, size = 0x1000, scoped, tag = 'input window, operand 2, single buffered']
    #allocation9 [shape = 'u8[147456]{0}', space=vmem, size = 0x24000, scoped, tag = 'input window, operand 3, single buffered']
    #allocation10 [shape = 's32[1]{0}', space=sflag, size = 0x4, scoped, tag = 'scoped memory for tpu_custom_call.1']
    #allocation11 [shape = 'u8[16384]{0}', space=vmem, size = 0x4000, scoped, tag = 'output window, operand 0, single buffered']
    %9 = vsyncpa [#allocation4], 0
    %10 = vsyncpa [#allocation7], 0
    %11 = vsyncpa [#allocation10], 0
    %12 = vsyncpa [#allocation5], 0
    // Predicated region
    $region2: #{tpu_custom_call.1} parent=1 // pred_check
      _
    $region3: #{tpu_custom_call.1} parent=1 // pred_check_branch
      %14 = sbr.rel (0) target = $region5
    $region4: #{tpu_custom_call.1} parent=1 // pred_region
      %16 = vsyncadd [#allocation4], 0
      %s18 = sshll.u32 %s0, 4
      %s19 = int_to_ptr.hbm [resolvable:$true] %s18
      %s20 = sshll.u32 [#allocation3], 4
      %s21 = int_to_ptr.vmem [resolvable:$true] %s20
      %23 = dma.hbm_to_vmem [thread:$0]  %s19, 512, %s21, [#allocation4]
    $region5: #{tpu_custom_call.1} parent=1 // pred_fallthru
      _
    // Predicated region
    $region6: #{tpu_custom_call.1} parent=1 // pred_check
      _
    $region7: #{tpu_custom_call.1} parent=1 // pred_check_branch
      %25 = sbr.rel (0) target = $region9
    $region8: #{tpu_custom_call.1} parent=1 // pred_region
      %27 = vsyncadd [#allocation7], 0
      %s29 = sshll.u32 %s1, 4
      %s30 = int_to_ptr.hbm [resolvable:$true] %s29
      %s31 = sshll.u32 [#allocation6], 4
      %s32 = int_to_ptr.vmem [resolvable:$true] %s31
      %34 = dma.hbm_to_vmem [thread:$0]  %s30, 128, %s32, [#allocation7]
    $region9: #{tpu_custom_call.1} parent=1 // pred_fallthru
      _
    // Predicated region
    $region10: #{tpu_custom_call.1} parent=1 // pred_check
      _
    $region11: #{tpu_custom_call.1} parent=1 // pred_check_branch
      %36 = sbr.rel (0) target = $region13
    $region12: #{tpu_custom_call.1} parent=1 // pred_region
      %38 = vsyncadd [#allocation7], 0
      %s40 = sshll.u32 %s2, 4
      %s41 = int_to_ptr.hbm [resolvable:$true] %s40
      %s42 = sshll.u32 [#allocation8], 4
      %s43 = int_to_ptr.vmem [resolvable:$true] %s42
      %45 = dma.hbm_to_vmem [thread:$0]  %s41, 128, %s43, [#allocation7]
    $region13: #{tpu_custom_call.1} parent=1 // pred_fallthru
      _
    // Predicated region
    $region14: #{tpu_custom_call.1} parent=1 // pred_check
      _
    $region15: #{tpu_custom_call.1} parent=1 // pred_check_branch
      %47 = sbr.rel (0) target = $region17
    $region16: #{tpu_custom_call.1} parent=1 // pred_region
      %49 = vsyncadd [#allocation10], 0
      %s50 = sshll.u32 %s3, 4
      %s51 = int_to_ptr.hbm [resolvable:$true] %s50
      %s52 = sshll.u32 [#allocation9], 4
      %s53 = int_to_ptr.vmem [resolvable:$true] %s52
      %58 = dma.hbm_to_vmem [thread:$0]  %s51, 4608, %s53, [#allocation10], 512, 512, 32
    $region17: #{tpu_custom_call.1} parent=1 // pred_fallthru
      _
    // Predicated region
    $region18: #{tpu_custom_call.1} parent=1 // pred_check
      _
    $region19: #{tpu_custom_call.1} parent=1 // pred_check_branch
      %60 = sbr.rel (0) target = $region21
    $region20: #{tpu_custom_call.1} parent=1 // pred_region
      %62 = dma.done [#allocation4], 512
    $region21: #{tpu_custom_call.1} parent=1 // pred_fallthru
      _
    // Predicated region
    $region22: #{tpu_custom_call.1} parent=1 // pred_check
      _
    $region23: #{tpu_custom_call.1} parent=1 // pred_check_branch
      %64 = sbr.rel (0) target = $region25
    $region24: #{tpu_custom_call.1} parent=1 // pred_region
      %66 = dma.done [#allocation7], 128
    $region25: #{tpu_custom_call.1} parent=1 // pred_fallthru
      _
    // Predicated region
    $region26: #{tpu_custom_call.1} parent=1 // pred_check
      _
    $region27: #{tpu_custom_call.1} parent=1 // pred_check_branch
      %68 = sbr.rel (0) target = $region29
    $region28: #{tpu_custom_call.1} parent=1 // pred_region
      %70 = dma.done [#allocation7], 128
    $region29: #{tpu_custom_call.1} parent=1 // pred_fallthru
      _
    // Predicated region
    $region30: #{tpu_custom_call.1} parent=1 // pred_check
      _
    $region31: #{tpu_custom_call.1} parent=1 // pred_check_branch
      %72 = sbr.rel (0) target = $region33
    $region32: #{tpu_custom_call.1} parent=1 // pred_region
      %74 = dma.done [#allocation10], 4608
    $region33: #{tpu_custom_call.1} parent=1 // pred_fallthru
      _
    %v75 = vld [vmem:[#allocation3] sm:$0xff]
    %v76 = vld [vmem:[#allocation3 + $0x8] sm:$0xff]
    %v77 = vld [vmem:[#allocation3 + $0x10] sm:$0xff]
    %v78 = vld [vmem:[#allocation3 + $0x18] sm:$0xff]
    %v79 = vld [vmem:[#allocation6] sm:$0xff]
    %v80 = vld [vmem:[#allocation8] sm:$0xff]
    %v81 = vlaneseq
    %v82 = vshrl.u32 %v81, 7
    %vm83 = vcmp.eq.s32.totalorder %v82, 0
    %v84 = vsel %vm83, 1, 0
    %v85 = vcvt.s32.f32 %v84
    %86 = vst [vmem:[#allocation2 + $0x120] sm:$0xff] %v85
    %87 = vst [vmem:[#allocation2 + $0x128] sm:$0xff] %v85
    %88 = vst [vmem:[#allocation2 + $0x130] sm:$0xff] %v85
    %89 = vst [vmem:[#allocation2 + $0x138] sm:$0xff] %v85
    %v90 = vmul.f32 %v75, 0.2
    %v91 = vmul.f32 %v76, 0.2
    %v92 = vmul.f32 %v77, 0.2
    %v93 = vmul.f32 %v78, 0.2
    %v94 = vmax.f32 %v75, %v90
    %v95 = vmax.f32 %v76, %v91
    %v96 = vmax.f32 %v77, %v92
    %v97 = vmax.f32 %v78, %v93
    %98 = vrot.lane.b32.xlu0 %v94, 17
    %v99 = vpop.permute.xlu0 %98
    %100 = vrot.lane.b32.xlu0 %v95, 17
    %v101 = vpop.permute.xlu0 %100
    %102 = vrot.lane.b32.xlu0 %v96, 17
    %v103 = vpop.permute.xlu0 %102
    %104 = vrot.lane.b32.xlu0 %v97, 17
    %v105 = vpop.permute.xlu0 %104
    %v106 = vlaneseq
    %v107 = vand.u32 %v106, 127
    %vm108 = vcmp.lt.s32.totalorder %v107, 17
    %v109 = vsel %vm108, %v103, %v105
    %v110 = vsel %vm108, %v101, %v103
    %v111 = vsel %vm108, %v99, %v101
    %v112 = vsel %vm108, %v105, %v99
    %v113 = vld [vmem:[#allocation9] sm:$0xff]
    %v114 = vld [vmem:[#allocation9 + $0x8] sm:$0xff]
    %v115 = vld [vmem:[#allocation9 + $0x10] sm:$0xff]
    %v116 = vld [vmem:[#allocation9 + $0x18] sm:$0xff]
    %v117 = vmul.f32 %v112, %v113
    %v118 = vmul.f32 %v111, %v114
    %v119 = vmul.f32 %v110, %v115
    %v120 = vmul.f32 %v109, %v116
    %121 = vst [vmem:[#allocation2] sm:$0xff] %v117
    %122 = vst [vmem:[#allocation2 + $0x8] sm:$0xff] %v118
    %123 = vst [vmem:[#allocation2 + $0x10] sm:$0xff] %v119
    %124 = vst [vmem:[#allocation2 + $0x18] sm:$0xff] %v120
    %125 = vrot.lane.b32.xlu0 %v94, 16
    %v126 = vpop.permute.xlu0 %125
    %127 = vrot.lane.b32.xlu0 %v95, 16
    %v128 = vpop.permute.xlu0 %127
    %129 = vrot.lane.b32.xlu0 %v96, 16
    %v130 = vpop.permute.xlu0 %129
    %131 = vrot.lane.b32.xlu0 %v97, 16
    %v132 = vpop.permute.xlu0 %131
    %vm133 = vcmp.lt.s32.totalorder %v107, 16
    %v134 = vsel %vm133, %v130, %v132
    %v135 = vsel %vm133, %v128, %v130
    %v136 = vsel %vm133, %v126, %v128
    %v137 = vsel %vm133, %v132, %v126
    %v138 = vld [vmem:[#allocation9 + $0x20] sm:$0xff]
    %v139 = vld [vmem:[#allocation9 + $0x28] sm:$0xff]
    %v140 = vld [vmem:[#allocation9 + $0x30] sm:$0xff]
    %v141 = vld [vmem:[#allocation9 + $0x38] sm:$0xff]
    %v142 = vmul.f32 %v137, %v138
    %v143 = vmul.f32 %v136, %v139
    %v144 = vmul.f32 %v135, %v140
    %v145 = vmul.f32 %v134, %v141
    %146 = vst [vmem:[#allocation2 + $0x20] sm:$0xff] %v142
    %147 = vst [vmem:[#allocation2 + $0x28] sm:$0xff] %v143
    %148 = vst [vmem:[#allocation2 + $0x30] sm:$0xff] %v144
    %149 = vst [vmem:[#allocation2 + $0x38] sm:$0xff] %v145
    %150 = vrot.lane.b32.xlu0 %v94, 15
    %v151 = vpop.permute.xlu0 %150
    %152 = vrot.lane.b32.xlu0 %v95, 15
    %v153 = vpop.permute.xlu0 %152
    %154 = vrot.lane.b32.xlu0 %v96, 15
    %v155 = vpop.permute.xlu0 %154
    %156 = vrot.lane.b32.xlu0 %v97, 15
    %v157 = vpop.permute.xlu0 %156
    %vm158 = vcmp.lt.s32.totalorder %v107, 15
    %v159 = vsel %vm158, %v155, %v157
    %v160 = vsel %vm158, %v153, %v155
    %v161 = vsel %vm158, %v151, %v153
    %v162 = vsel %vm158, %v157, %v151
    %v163 = vld [vmem:[#allocation9 + $0x40] sm:$0xff]
    %v164 = vld [vmem:[#allocation9 + $0x48] sm:$0xff]
    %v165 = vld [vmem:[#allocation9 + $0x50] sm:$0xff]
    %v166 = vld [vmem:[#allocation9 + $0x58] sm:$0xff]
    %v167 = vmul.f32 %v162, %v163
    %v168 = vmul.f32 %v161, %v164
    %v169 = vmul.f32 %v160, %v165
    %v170 = vmul.f32 %v159, %v166
    %171 = vst [vmem:[#allocation2 + $0x40] sm:$0xff] %v167
    %172 = vst [vmem:[#allocation2 + $0x48] sm:$0xff] %v168
    %173 = vst [vmem:[#allocation2 + $0x50] sm:$0xff] %v169
    %174 = vst [vmem:[#allocation2 + $0x58] sm:$0xff] %v170
    %175 = vrot.lane.b32.xlu0 %v94, 1
    %v176 = vpop.permute.xlu0 %175
    %177 = vrot.lane.b32.xlu0 %v95, 1
    %v178 = vpop.permute.xlu0 %177
    %179 = vrot.lane.b32.xlu0 %v96, 1
    %v180 = vpop.permute.xlu0 %179
    %181 = vrot.lane.b32.xlu0 %v97, 1
    %v182 = vpop.permute.xlu0 %181
    %vm183 = vcmp.lt.s32.totalorder %v107, 1
    %v184 = vsel %vm183, %v180, %v182
    %v185 = vsel %vm183, %v178, %v180
    %v186 = vsel %vm183, %v176, %v178
    %v187 = vsel %vm183, %v182, %v176
    %v188 = vld [vmem:[#allocation9 + $0x60] sm:$0xff]
    %v189 = vld [vmem:[#allocation9 + $0x68] sm:$0xff]
    %v190 = vld [vmem:[#allocation9 + $0x70] sm:$0xff]
    %v191 = vld [vmem:[#allocation9 + $0x78] sm:$0xff]
    %v192 = vmul.f32 %v187, %v188
    %v193 = vmul.f32 %v186, %v189
    %v194 = vmul.f32 %v185, %v190
    %v195 = vmul.f32 %v184, %v191
    %196 = vst [vmem:[#allocation2 + $0x60] sm:$0xff] %v192
    %197 = vst [vmem:[#allocation2 + $0x68] sm:$0xff] %v193
    %198 = vst [vmem:[#allocation2 + $0x70] sm:$0xff] %v194
    %199 = vst [vmem:[#allocation2 + $0x78] sm:$0xff] %v195
    %200 = vst [vmem:[#allocation2 + $0x80] sm:$0xff] %v94
    %201 = vst [vmem:[#allocation2 + $0x88] sm:$0xff] %v95
    %202 = vst [vmem:[#allocation2 + $0x90] sm:$0xff] %v96
    %203 = vst [vmem:[#allocation2 + $0x98] sm:$0xff] %v97
    %204 = vrot.lane.b32.xlu0 %v94, 127
    %v205 = vpop.permute.xlu0 %204
    %206 = vrot.lane.b32.xlu0 %v95, 127
    %v207 = vpop.permute.xlu0 %206
    %208 = vrot.lane.b32.xlu0 %v96, 127
    %v209 = vpop.permute.xlu0 %208
    %210 = vrot.lane.b32.xlu0 %v97, 127
    %v211 = vpop.permute.xlu0 %210
    %vm212 = vcmp.lt.s32.totalorder %v107, 127
    %v213 = vsel %vm212, %v209, %v211
    %v214 = vsel %vm212, %v207, %v209
    %v215 = vsel %vm212, %v205, %v207
    %v216 = vsel %vm212, %v211, %v205
    %v217 = vld [vmem:[#allocation9 + $0xa0] sm:$0xff]
    %v218 = vld [vmem:[#allocation9 + $0xa8] sm:$0xff]
    %v219 = vld [vmem:[#allocation9 + $0xb0] sm:$0xff]
    %v220 = vld [vmem:[#allocation9 + $0xb8] sm:$0xff]
    %v221 = vmul.f32 %v215, %v217
    %v222 = vmul.f32 %v214, %v218
    %v223 = vmul.f32 %v213, %v219
    %v224 = vmul.f32 %v216, %v220
    %225 = vst [vmem:[#allocation2 + $0xa0] sm:$0xff] %v221
    %226 = vst [vmem:[#allocation2 + $0xa8] sm:$0xff] %v222
    %227 = vst [vmem:[#allocation2 + $0xb0] sm:$0xff] %v223
    %228 = vst [vmem:[#allocation2 + $0xb8] sm:$0xff] %v224
    %229 = vrot.lane.b32.xlu0 %v94, 113
    %v230 = vpop.permute.xlu0 %229
    %231 = vrot.lane.b32.xlu0 %v95, 113
    %v232 = vpop.permute.xlu0 %231
    %233 = vrot.lane.b32.xlu0 %v96, 113
    %v234 = vpop.permute.xlu0 %233
    %235 = vrot.lane.b32.xlu0 %v97, 113
    %v236 = vpop.permute.xlu0 %235
    %vm237 = vcmp.lt.s32.totalorder %v107, 113
    %v238 = vsel %vm237, %v234, %v236
    %v239 = vsel %vm237, %v232, %v234
    %v240 = vsel %vm237, %v230, %v232
    %v241 = vsel %vm237, %v236, %v230
    %v242 = vld [vmem:[#allocation9 + $0xc0] sm:$0xff]
    %v243 = vld [vmem:[#allocation9 + $0xc8] sm:$0xff]
    %v244 = vld [vmem:[#allocation9 + $0xd0] sm:$0xff]
    %v245 = vld [vmem:[#allocation9 + $0xd8] sm:$0xff]
    %v246 = vmul.f32 %v240, %v242
    %v247 = vmul.f32 %v239, %v243
    %v248 = vmul.f32 %v238, %v244
    %v249 = vmul.f32 %v241, %v245
    %250 = vst [vmem:[#allocation2 + $0xc0] sm:$0xff] %v246
    %251 = vst [vmem:[#allocation2 + $0xc8] sm:$0xff] %v247
    %252 = vst [vmem:[#allocation2 + $0xd0] sm:$0xff] %v248
    %253 = vst [vmem:[#allocation2 + $0xd8] sm:$0xff] %v249
    %254 = vrot.lane.b32.xlu0 %v94, 112
    %v255 = vpop.permute.xlu0 %254
    %256 = vrot.lane.b32.xlu0 %v95, 112
    %v257 = vpop.permute.xlu0 %256
    %258 = vrot.lane.b32.xlu0 %v96, 112
    %v259 = vpop.permute.xlu0 %258
    %260 = vrot.lane.b32.xlu0 %v97, 112
    %v261 = vpop.permute.xlu0 %260
    %vm262 = vcmp.lt.s32.totalorder %v107, 112
    %v263 = vsel %vm262, %v259, %v261
    %v264 = vsel %vm262, %v257, %v259
    %v265 = vsel %vm262, %v255, %v257
    %v266 = vsel %vm262, %v261, %v255
    %v267 = vld [vmem:[#allocation9 + $0xe0] sm:$0xff]
    %v268 = vld [vmem:[#allocation9 + $0xe8] sm:$0xff]
    %v269 = vld [vmem:[#allocation9 + $0xf0] sm:$0xff]
    %v270 = vld [vmem:[#allocation9 + $0xf8] sm:$0xff]
    %v271 = vmul.f32 %v265, %v267
    %v272 = vmul.f32 %v264, %v268
    %v273 = vmul.f32 %v263, %v269
    %v274 = vmul.f32 %v266, %v270
    %275 = vst [vmem:[#allocation2 + $0xe0] sm:$0xff] %v271
    %276 = vst [vmem:[#allocation2 + $0xe8] sm:$0xff] %v272
    %277 = vst [vmem:[#allocation2 + $0xf0] sm:$0xff] %v273
    %278 = vst [vmem:[#allocation2 + $0xf8] sm:$0xff] %v274
    %279 = vrot.lane.b32.xlu0 %v94, 111
    %v280 = vpop.permute.xlu0 %279
    %281 = vrot.lane.b32.xlu0 %v95, 111
    %v282 = vpop.permute.xlu0 %281
    %283 = vrot.lane.b32.xlu0 %v96, 111
    %v284 = vpop.permute.xlu0 %283
    %285 = vrot.lane.b32.xlu0 %v97, 111
    %v286 = vpop.permute.xlu0 %285
    %vm287 = vcmp.lt.s32.totalorder %v107, 111
    %v288 = vsel %vm287, %v284, %v286
    %v289 = vsel %vm287, %v282, %v284
    %v290 = vsel %vm287, %v280, %v282
    %v291 = vsel %vm287, %v286, %v280
    %v292 = vld [vmem:[#allocation9 + $0x100] sm:$0xff]
    %v293 = vld [vmem:[#allocation9 + $0x108] sm:$0xff]
    %v294 = vld [vmem:[#allocation9 + $0x110] sm:$0xff]
    %v295 = vld [vmem:[#allocation9 + $0x118] sm:$0xff]
    %v296 = vmul.f32 %v290, %v292
    %v297 = vmul.f32 %v289, %v293
    %v298 = vmul.f32 %v288, %v294
    %v299 = vmul.f32 %v291, %v295
    %300 = vst [vmem:[#allocation2 + $0x100] sm:$0xff] %v296
    %301 = vst [vmem:[#allocation2 + $0x108] sm:$0xff] %v297
    %302 = vst [vmem:[#allocation2 + $0x110] sm:$0xff] %v298
    %303 = vst [vmem:[#allocation2 + $0x118] sm:$0xff] %v299
    %v304 = vld [vmem:[#allocation2] sm:$0xff]
    %v305 = vld [vmem:[#allocation2 + $0x8] sm:$0xff]
    %v306 = vld [vmem:[#allocation2 + $0x10] sm:$0xff]
    %v307 = vld [vmem:[#allocation2 + $0x18] sm:$0xff]
    %v308 = vld [vmem:[#allocation2 + $0x20] sm:$0xff]
    %v309 = vld [vmem:[#allocation2 + $0x28] sm:$0xff]
    %v310 = vld [vmem:[#allocation2 + $0x30] sm:$0xff]
    %v311 = vld [vmem:[#allocation2 + $0x38] sm:$0xff]
    %v312 = vld [vmem:[#allocation2 + $0x40] sm:$0xff]
    %v313 = vld [vmem:[#allocation2 + $0x48] sm:$0xff]
    %v314 = vld [vmem:[#allocation2 + $0x50] sm:$0xff]
    %v315 = vld [vmem:[#allocation2 + $0x58] sm:$0xff]
    %v316 = vld [vmem:[#allocation2 + $0x60] sm:$0xff]
    %v317 = vld [vmem:[#allocation2 + $0x68] sm:$0xff]
    %v318 = vld [vmem:[#allocation2 + $0x70] sm:$0xff]
    %v319 = vld [vmem:[#allocation2 + $0x78] sm:$0xff]
    %v320 = vld [vmem:[#allocation2 + $0x80] sm:$0xff]
    %v321 = vld [vmem:[#allocation2 + $0x88] sm:$0xff]
    %v322 = vld [vmem:[#allocation2 + $0x90] sm:$0xff]
    %v323 = vld [vmem:[#allocation2 + $0x98] sm:$0xff]
    %v324 = vld [vmem:[#allocation2 + $0xa0] sm:$0xff]
    %v325 = vld [vmem:[#allocation2 + $0xa8] sm:$0xff]
    %v326 = vld [vmem:[#allocation2 + $0xb0] sm:$0xff]
    %v327 = vld [vmem:[#allocation2 + $0xb8] sm:$0xff]
    %v328 = vld [vmem:[#allocation2 + $0xc0] sm:$0xff]
    %v329 = vld [vmem:[#allocation2 + $0xc8] sm:$0xff]
    %v330 = vld [vmem:[#allocation2 + $0xd0] sm:$0xff]
    %v331 = vld [vmem:[#allocation2 + $0xd8] sm:$0xff]
    %v332 = vld [vmem:[#allocation2 + $0xe0] sm:$0xff]
    %v333 = vld [vmem:[#allocation2 + $0xe8] sm:$0xff]
    %v334 = vld [vmem:[#allocation2 + $0xf0] sm:$0xff]
    %v335 = vld [vmem:[#allocation2 + $0xf8] sm:$0xff]
    %v336 = vld [vmem:[#allocation2 + $0x100] sm:$0xff]
    %v337 = vld [vmem:[#allocation2 + $0x108] sm:$0xff]
    %v338 = vld [vmem:[#allocation2 + $0x110] sm:$0xff]
    %v339 = vld [vmem:[#allocation2 + $0x118] sm:$0xff]
    %v340 = vld [vmem:[#allocation2 + $0x120] sm:$0xff]
    %v341 = vld [vmem:[#allocation2 + $0x128] sm:$0xff]
    %v342 = vld [vmem:[#allocation2 + $0x130] sm:$0xff]
    %v343 = vld [vmem:[#allocation2 + $0x138] sm:$0xff]
    %vm344 = vcmask 654336
    %v346 = vsel %vm344, %v79, 0
    %348 = vmatpush.msra.mxu0 0.0
    %349 = vmatpush.msra.mxu0 0.0
    %350 = vmatpush.msra.mxu0 0.0
    %351 = vmatpush.msra.mxu0 0.0
    %352 = vmatpush.msra.mxu0 0.0
    %353 = vmatpush.msra.mxu0 0.0
    %354 = vmatpush.msra.mxu0 %v340
    %355 = vmatpush.msra.mxu0 %v336
    %356 = vmatpush.msra.mxu0 %v332
    %357 = vmatpush.msra.mxu0 %v328
    %358 = vmatpush.msra.mxu0 %v324
    %359 = vmatpush.msra.mxu0 %v320
    %360 = vmatpush.msra.mxu0 %v316
    %361 = vmatpush.msra.mxu0 %v312
    %362 = vmatpush.msra.mxu0 %v308
    %363 = vmatpush.msra.mxu0 %v304
    %364 = vmatmul.f32.gmra.mxu0 %v346
    %v365 = vpop.f32.mrf.mxu0
    %v366 = vadd.f32 0.0, %v365
    %367 = vdwg.mxu0
    %368 = vmatpush.msra.mxu0 0.0
    %369 = vmatpush.msra.mxu0 0.0
    %370 = vmatpush.msra.mxu0 0.0
    %371 = vmatpush.msra.mxu0 0.0
    %372 = vmatpush.msra.mxu0 0.0
    %373 = vmatpush.msra.mxu0 0.0
    %374 = vmatpush.msra.mxu0 %v341
    %375 = vmatpush.msra.mxu0 %v337
    %376 = vmatpush.msra.mxu0 %v333
    %377 = vmatpush.msra.mxu0 %v329
    %378 = vmatpush.msra.mxu0 %v325
    %379 = vmatpush.msra.mxu0 %v321
    %380 = vmatpush.msra.mxu0 %v317
    %381 = vmatpush.msra.mxu0 %v313
    %382 = vmatpush.msra.mxu0 %v309
    %383 = vmatpush.msra.mxu0 %v305
    %384 = vmatmul.f32.gmra.mxu0 %v346
    %v385 = vpop.f32.mrf.mxu0
    %v386 = vadd.f32 0.0, %v385
    %387 = vdwg.mxu0
    %388 = vmatpush.msra.mxu0 0.0
    %389 = vmatpush.msra.mxu0 0.0
    %390 = vmatpush.msra.mxu0 0.0
    %391 = vmatpush.msra.mxu0 0.0
    %392 = vmatpush.msra.mxu0 0.0
    %393 = vmatpush.msra.mxu0 0.0
    %394 = vmatpush.msra.mxu0 %v342
    %395 = vmatpush.msra.mxu0 %v338
    %396 = vmatpush.msra.mxu0 %v334
    %397 = vmatpush.msra.mxu0 %v330
    %398 = vmatpush.msra.mxu0 %v326
    %399 = vmatpush.msra.mxu0 %v322
    %400 = vmatpush.msra.mxu0 %v318
    %401 = vmatpush.msra.mxu0 %v314
    %402 = vmatpush.msra.mxu0 %v310
    %403 = vmatpush.msra.mxu0 %v306
    %404 = vmatmul.f32.gmra.mxu0 %v346
    %v405 = vpop.f32.mrf.mxu0
    %v406 = vadd.f32 0.0, %v405
    %407 = vdwg.mxu0
    %408 = vmatpush.msra.mxu0 0.0
    %409 = vmatpush.msra.mxu0 0.0
    %410 = vmatpush.msra.mxu0 0.0
    %411 = vmatpush.msra.mxu0 0.0
    %412 = vmatpush.msra.mxu0 0.0
    %413 = vmatpush.msra.mxu0 0.0
    %414 = vmatpush.msra.mxu0 %v343
    %415 = vmatpush.msra.mxu0 %v339
    %416 = vmatpush.msra.mxu0 %v335
    %417 = vmatpush.msra.mxu0 %v331
    %418 = vmatpush.msra.mxu0 %v327
    %419 = vmatpush.msra.mxu0 %v323
    %420 = vmatpush.msra.mxu0 %v319
    %421 = vmatpush.msra.mxu0 %v315
    %422 = vmatpush.msra.mxu0 %v311
    %423 = vmatpush.msra.mxu0 %v307
    %424 = vmatmul.f32.gmra.mxu0 %v346
    %v425 = vpop.f32.mrf.mxu0
    %v426 = vadd.f32 0.0, %v425
    %427 = vdwg.mxu0
    %v428 = vmax.f32 %v366, 0.0
    %v429 = vmax.f32 %v386, 0.0
    %v430 = vmax.f32 %v406, 0.0
    %v431 = vmax.f32 %v426, 0.0
    %432 = vrot.lane.b32.xlu0 %v428, 17
    %v433 = vpop.permute.xlu0 %432
    %434 = vrot.lane.b32.xlu0 %v429, 17
    %v435 = vpop.permute.xlu0 %434
    %436 = vrot.lane.b32.xlu0 %v430, 17
    %v437 = vpop.permute.xlu0 %436
    %438 = vrot.lane.b32.xlu0 %v431, 17
    %v439 = vpop.permute.xlu0 %438
    %v440 = vsel %vm108, %v437, %v439
    %v441 = vsel %vm108, %v435, %v437
    %v442 = vsel %vm108, %v433, %v435
    %v443 = vsel %vm108, %v439, %v433
    %v444 = vld [vmem:[#allocation9] sm:$0xff]
    %v445 = vld [vmem:[#allocation9 + $0x8] sm:$0xff]
    %v446 = vld [vmem:[#allocation9 + $0x10] sm:$0xff]
    %v447 = vld [vmem:[#allocation9 + $0x18] sm:$0xff]
    %v448 = vmul.f32 %v443, %v444
    %v449 = vmul.f32 %v442, %v445
    %v450 = vmul.f32 %v441, %v446
    %v451 = vmul.f32 %v440, %v447
    %452 = vst [vmem:[#allocation2] sm:$0xff] %v448
    %453 = vst [vmem:[#allocation2 + $0x8] sm:$0xff] %v449
    %454 = vst [vmem:[#allocation2 + $0x10] sm:$0xff] %v450
    %455 = vst [vmem:[#allocation2 + $0x18] sm:$0xff] %v451
    %456 = vrot.lane.b32.xlu0 %v428, 16
    %v457 = vpop.permute.xlu0 %456
    %458 = vrot.lane.b32.xlu0 %v429, 16
    %v459 = vpop.permute.xlu0 %458
    %460 = vrot.lane.b32.xlu0 %v430, 16
    %v461 = vpop.permute.xlu0 %460
    %462 = vrot.lane.b32.xlu0 %v431, 16
    %v463 = vpop.permute.xlu0 %462
    %v464 = vsel %vm133, %v461, %v463
    %v465 = vsel %vm133, %v459, %v461
    %v466 = vsel %vm133, %v457, %v459
    %v467 = vsel %vm133, %v463, %v457
    %v468 = vld [vmem:[#allocation9 + $0x20] sm:$0xff]
    %v469 = vld [vmem:[#allocation9 + $0x28] sm:$0xff]
    %v470 = vld [vmem:[#allocation9 + $0x30] sm:$0xff]
    %v471 = vld [vmem:[#allocation9 + $0x38] sm:$0xff]
    %v472 = vmul.f32 %v467, %v468
    %v473 = vmul.f32 %v466, %v469
    %v474 = vmul.f32 %v465, %v470
    %v475 = vmul.f32 %v464, %v471
    %476 = vst [vmem:[#allocation2 + $0x20] sm:$0xff] %v472
    %477 = vst [vmem:[#allocation2 + $0x28] sm:$0xff] %v473
    %478 = vst [vmem:[#allocation2 + $0x30] sm:$0xff] %v474
    %479 = vst [vmem:[#allocation2 + $0x38] sm:$0xff] %v475
    %480 = vrot.lane.b32.xlu0 %v428, 15
    %v481 = vpop.permute.xlu0 %480
    %482 = vrot.lane.b32.xlu0 %v429, 15
    %v483 = vpop.permute.xlu0 %482
    %484 = vrot.lane.b32.xlu0 %v430, 15
    %v485 = vpop.permute.xlu0 %484
    %486 = vrot.lane.b32.xlu0 %v431, 15
    %v487 = vpop.permute.xlu0 %486
    %v488 = vsel %vm158, %v485, %v487
    %v489 = vsel %vm158, %v483, %v485
    %v490 = vsel %vm158, %v481, %v483
    %v491 = vsel %vm158, %v487, %v481
    %v492 = vld [vmem:[#allocation9 + $0x40] sm:$0xff]
    %v493 = vld [vmem:[#allocation9 + $0x48] sm:$0xff]
    %v494 = vld [vmem:[#allocation9 + $0x50] sm:$0xff]
    %v495 = vld [vmem:[#allocation9 + $0x58] sm:$0xff]
    %v496 = vmul.f32 %v491, %v492
    %v497 = vmul.f32 %v490, %v493
    %v498 = vmul.f32 %v489, %v494
    %v499 = vmul.f32 %v488, %v495
    %500 = vst [vmem:[#allocation2 + $0x40] sm:$0xff] %v496
    %501 = vst [vmem:[#allocation2 + $0x48] sm:$0xff] %v497
    %502 = vst [vmem:[#allocation2 + $0x50] sm:$0xff] %v498
    %503 = vst [vmem:[#allocation2 + $0x58] sm:$0xff] %v499
    %504 = vrot.lane.b32.xlu0 %v428, 1
    %v505 = vpop.permute.xlu0 %504
    %506 = vrot.lane.b32.xlu0 %v429, 1
    %v507 = vpop.permute.xlu0 %506
    %508 = vrot.lane.b32.xlu0 %v430, 1
    %v509 = vpop.permute.xlu0 %508
    %510 = vrot.lane.b32.xlu0 %v431, 1
    %v511 = vpop.permute.xlu0 %510
    %v512 = vsel %vm183, %v509, %v511
    %v513 = vsel %vm183, %v507, %v509
    %v514 = vsel %vm183, %v505, %v507
    %v515 = vsel %vm183, %v511, %v505
    %v516 = vld [vmem:[#allocation9 + $0x60] sm:$0xff]
    %v517 = vld [vmem:[#allocation9 + $0x68] sm:$0xff]
    %v518 = vld [vmem:[#allocation9 + $0x70] sm:$0xff]
    %v519 = vld [vmem:[#allocation9 + $0x78] sm:$0xff]
    %v520 = vmul.f32 %v515, %v516
    %v521 = vmul.f32 %v514, %v517
    %v522 = vmul.f32 %v513, %v518
    %v523 = vmul.f32 %v512, %v519
    %524 = vst [vmem:[#allocation2 + $0x60] sm:$0xff] %v520
    %525 = vst [vmem:[#allocation2 + $0x68] sm:$0xff] %v521
    %526 = vst [vmem:[#allocation2 + $0x70] sm:$0xff] %v522
    %527 = vst [vmem:[#allocation2 + $0x78] sm:$0xff] %v523
    %528 = vst [vmem:[#allocation2 + $0x80] sm:$0xff] %v428
    %529 = vst [vmem:[#allocation2 + $0x88] sm:$0xff] %v429
    %530 = vst [vmem:[#allocation2 + $0x90] sm:$0xff] %v430
    %531 = vst [vmem:[#allocation2 + $0x98] sm:$0xff] %v431
    %532 = vrot.lane.b32.xlu0 %v428, 127
    %v533 = vpop.permute.xlu0 %532
    %534 = vrot.lane.b32.xlu0 %v429, 127
    %v535 = vpop.permute.xlu0 %534
    %536 = vrot.lane.b32.xlu0 %v430, 127
    %v537 = vpop.permute.xlu0 %536
    %538 = vrot.lane.b32.xlu0 %v431, 127
    %v539 = vpop.permute.xlu0 %538
    %v540 = vsel %vm212, %v537, %v539
    %v541 = vsel %vm212, %v535, %v537
    %v542 = vsel %vm212, %v533, %v535
    %v543 = vsel %vm212, %v539, %v533
    %v544 = vld [vmem:[#allocation9 + $0xa0] sm:$0xff]
    %v545 = vld [vmem:[#allocation9 + $0xa8] sm:$0xff]
    %v546 = vld [vmem:[#allocation9 + $0xb0] sm:$0xff]
    %v547 = vld [vmem:[#allocation9 + $0xb8] sm:$0xff]
    %v548 = vmul.f32 %v542, %v544
    %v549 = vmul.f32 %v541, %v545
    %v550 = vmul.f32 %v540, %v546
    %v551 = vmul.f32 %v543, %v547
    %552 = vst [vmem:[#allocation2 + $0xa0] sm:$0xff] %v548
    %553 = vst [vmem:[#allocation2 + $0xa8] sm:$0xff] %v549
    %554 = vst [vmem:[#allocation2 + $0xb0] sm:$0xff] %v550
    %555 = vst [vmem:[#allocation2 + $0xb8] sm:$0xff] %v551
    %556 = vrot.lane.b32.xlu0 %v428, 113
    %v557 = vpop.permute.xlu0 %556
    %558 = vrot.lane.b32.xlu0 %v429, 113
    %v559 = vpop.permute.xlu0 %558
    %560 = vrot.lane.b32.xlu0 %v430, 113
    %v561 = vpop.permute.xlu0 %560
    %562 = vrot.lane.b32.xlu0 %v431, 113
    %v563 = vpop.permute.xlu0 %562
    %v564 = vsel %vm237, %v561, %v563
    %v565 = vsel %vm237, %v559, %v561
    %v566 = vsel %vm237, %v557, %v559
    %v567 = vsel %vm237, %v563, %v557
    %v568 = vld [vmem:[#allocation9 + $0xc0] sm:$0xff]
    %v569 = vld [vmem:[#allocation9 + $0xc8] sm:$0xff]
    %v570 = vld [vmem:[#allocation9 + $0xd0] sm:$0xff]
    %v571 = vld [vmem:[#allocation9 + $0xd8] sm:$0xff]
    %v572 = vmul.f32 %v566, %v568
    %v573 = vmul.f32 %v565, %v569
    %v574 = vmul.f32 %v564, %v570
    %v575 = vmul.f32 %v567, %v571
    %576 = vst [vmem:[#allocation2 + $0xc0] sm:$0xff] %v572
    %577 = vst [vmem:[#allocation2 + $0xc8] sm:$0xff] %v573
    %578 = vst [vmem:[#allocation2 + $0xd0] sm:$0xff] %v574
    %579 = vst [vmem:[#allocation2 + $0xd8] sm:$0xff] %v575
    %580 = vrot.lane.b32.xlu0 %v428, 112
    %v581 = vpop.permute.xlu0 %580
    %582 = vrot.lane.b32.xlu0 %v429, 112
    %v583 = vpop.permute.xlu0 %582
    %584 = vrot.lane.b32.xlu0 %v430, 112
    %v585 = vpop.permute.xlu0 %584
    %586 = vrot.lane.b32.xlu0 %v431, 112
    %v587 = vpop.permute.xlu0 %586
    %v588 = vsel %vm262, %v585, %v587
    %v589 = vsel %vm262, %v583, %v585
    %v590 = vsel %vm262, %v581, %v583
    %v591 = vsel %vm262, %v587, %v581
    %v592 = vld [vmem:[#allocation9 + $0xe0] sm:$0xff]
    %v593 = vld [vmem:[#allocation9 + $0xe8] sm:$0xff]
    %v594 = vld [vmem:[#allocation9 + $0xf0] sm:$0xff]
    %v595 = vld [vmem:[#allocation9 + $0xf8] sm:$0xff]
    %v596 = vmul.f32 %v590, %v592
    %v597 = vmul.f32 %v589, %v593
    %v598 = vmul.f32 %v588, %v594
    %v599 = vmul.f32 %v591, %v595
    %600 = vst [vmem:[#allocation2 + $0xe0] sm:$0xff] %v596
    %601 = vst [vmem:[#allocation2 + $0xe8] sm:$0xff] %v597
    %602 = vst [vmem:[#allocation2 + $0xf0] sm:$0xff] %v598
    %603 = vst [vmem:[#allocation2 + $0xf8] sm:$0xff] %v599
    %604 = vrot.lane.b32.xlu0 %v428, 111
    %v605 = vpop.permute.xlu0 %604
    %606 = vrot.lane.b32.xlu0 %v429, 111
    %v607 = vpop.permute.xlu0 %606
    %608 = vrot.lane.b32.xlu0 %v430, 111
    %v609 = vpop.permute.xlu0 %608
    %610 = vrot.lane.b32.xlu0 %v431, 111
    %v611 = vpop.permute.xlu0 %610
    %v612 = vsel %vm287, %v609, %v611
    %v613 = vsel %vm287, %v607, %v609
    %v614 = vsel %vm287, %v605, %v607
    %v615 = vsel %vm287, %v611, %v605
    %v616 = vld [vmem:[#allocation9 + $0x100] sm:$0xff]
    %v617 = vld [vmem:[#allocation9 + $0x108] sm:$0xff]
    %v618 = vld [vmem:[#allocation9 + $0x110] sm:$0xff]
    %v619 = vld [vmem:[#allocation9 + $0x118] sm:$0xff]
    %v620 = vmul.f32 %v614, %v616
    %v621 = vmul.f32 %v613, %v617
    %v622 = vmul.f32 %v612, %v618
    %v623 = vmul.f32 %v615, %v619
    %624 = vst [vmem:[#allocation2 + $0x100] sm:$0xff] %v620
    %625 = vst [vmem:[#allocation2 + $0x108] sm:$0xff] %v621
    %626 = vst [vmem:[#allocation2 + $0x110] sm:$0xff] %v622
    %627 = vst [vmem:[#allocation2 + $0x118] sm:$0xff] %v623
    %v628 = vld [vmem:[#allocation2] sm:$0xff]
    %v629 = vld [vmem:[#allocation2 + $0x8] sm:$0xff]
    %v630 = vld [vmem:[#allocation2 + $0x10] sm:$0xff]
    %v631 = vld [vmem:[#allocation2 + $0x18] sm:$0xff]
    %v632 = vld [vmem:[#allocation2 + $0x20] sm:$0xff]
    %v633 = vld [vmem:[#allocation2 + $0x28] sm:$0xff]
    %v634 = vld [vmem:[#allocation2 + $0x30] sm:$0xff]
    %v635 = vld [vmem:[#allocation2 + $0x38] sm:$0xff]
    %v636 = vld [vmem:[#allocation2 + $0x40] sm:$0xff]
    %v637 = vld [vmem:[#allocation2 + $0x48] sm:$0xff]
    %v638 = vld [vmem:[#allocation2 + $0x50] sm:$0xff]
    %v639 = vld [vmem:[#allocation2 + $0x58] sm:$0xff]
    %v640 = vld [vmem:[#allocation2 + $0x60] sm:$0xff]
    %v641 = vld [vmem:[#allocation2 + $0x68] sm:$0xff]
    %v642 = vld [vmem:[#allocation2 + $0x70] sm:$0xff]
    %v643 = vld [vmem:[#allocation2 + $0x78] sm:$0xff]
    %v644 = vld [vmem:[#allocation2 + $0x80] sm:$0xff]
    %v645 = vld [vmem:[#allocation2 + $0x88] sm:$0xff]
    %v646 = vld [vmem:[#allocation2 + $0x90] sm:$0xff]
    %v647 = vld [vmem:[#allocation2 + $0x98] sm:$0xff]
    %v648 = vld [vmem:[#allocation2 + $0xa0] sm:$0xff]
    %v649 = vld [vmem:[#allocation2 + $0xa8] sm:$0xff]
    %v650 = vld [vmem:[#allocation2 + $0xb0] sm:$0xff]
    %v651 = vld [vmem:[#allocation2 + $0xb8] sm:$0xff]
    %v652 = vld [vmem:[#allocation2 + $0xc0] sm:$0xff]
    %v653 = vld [vmem:[#allocation2 + $0xc8] sm:$0xff]
    %v654 = vld [vmem:[#allocation2 + $0xd0] sm:$0xff]
    %v655 = vld [vmem:[#allocation2 + $0xd8] sm:$0xff]
    %v656 = vld [vmem:[#allocation2 + $0xe0] sm:$0xff]
    %v657 = vld [vmem:[#allocation2 + $0xe8] sm:$0xff]
    %v658 = vld [vmem:[#allocation2 + $0xf0] sm:$0xff]
    %v659 = vld [vmem:[#allocation2 + $0xf8] sm:$0xff]
    %v660 = vld [vmem:[#allocation2 + $0x100] sm:$0xff]
    %v661 = vld [vmem:[#allocation2 + $0x108] sm:$0xff]
    %v662 = vld [vmem:[#allocation2 + $0x110] sm:$0xff]
    %v663 = vld [vmem:[#allocation2 + $0x118] sm:$0xff]
    %v664 = vld [vmem:[#allocation2 + $0x120] sm:$0xff]
    %v665 = vld [vmem:[#allocation2 + $0x128] sm:$0xff]
    %v666 = vld [vmem:[#allocation2 + $0x130] sm:$0xff]
    %v667 = vld [vmem:[#allocation2 + $0x138] sm:$0xff]
    %v669 = vsel %vm344, %v80, 0
    %671 = vmatpush.msra.mxu0 0.0
    %672 = vmatpush.msra.mxu0 0.0
    %673 = vmatpush.msra.mxu0 0.0
    %674 = vmatpush.msra.mxu0 0.0
    %675 = vmatpush.msra.mxu0 0.0
    %676 = vmatpush.msra.mxu0 0.0
    %677 = vmatpush.msra.mxu0 %v664
    %678 = vmatpush.msra.mxu0 %v660
    %679 = vmatpush.msra.mxu0 %v656
    %680 = vmatpush.msra.mxu0 %v652
    %681 = vmatpush.msra.mxu0 %v648
    %682 = vmatpush.msra.mxu0 %v644
    %683 = vmatpush.msra.mxu0 %v640
    %684 = vmatpush.msra.mxu0 %v636
    %685 = vmatpush.msra.mxu0 %v632
    %686 = vmatpush.msra.mxu0 %v628
    %687 = vmatmul.f32.gmra.mxu0 %v669
    %v688 = vpop.f32.mrf.mxu0
    %v689 = vadd.f32 0.0, %v688
    %690 = vdwg.mxu0
    %691 = vmatpush.msra.mxu0 0.0
    %692 = vmatpush.msra.mxu0 0.0
    %693 = vmatpush.msra.mxu0 0.0
    %694 = vmatpush.msra.mxu0 0.0
    %695 = vmatpush.msra.mxu0 0.0
    %696 = vmatpush.msra.mxu0 0.0
    %697 = vmatpush.msra.mxu0 %v665
    %698 = vmatpush.msra.mxu0 %v661
    %699 = vmatpush.msra.mxu0 %v657
    %700 = vmatpush.msra.mxu0 %v653
    %701 = vmatpush.msra.mxu0 %v649
    %702 = vmatpush.msra.mxu0 %v645
    %703 = vmatpush.msra.mxu0 %v641
    %704 = vmatpush.msra.mxu0 %v637
    %705 = vmatpush.msra.mxu0 %v633
    %706 = vmatpush.msra.mxu0 %v629
    %707 = vmatmul.f32.gmra.mxu0 %v669
    %v708 = vpop.f32.mrf.mxu0
    %v709 = vadd.f32 0.0, %v708
    %710 = vdwg.mxu0
    %711 = vmatpush.msra.mxu0 0.0
    %712 = vmatpush.msra.mxu0 0.0
    %713 = vmatpush.msra.mxu0 0.0
    %714 = vmatpush.msra.mxu0 0.0
    %715 = vmatpush.msra.mxu0 0.0
    %716 = vmatpush.msra.mxu0 0.0
    %717 = vmatpush.msra.mxu0 %v666
    %718 = vmatpush.msra.mxu0 %v662
    %719 = vmatpush.msra.mxu0 %v658
    %720 = vmatpush.msra.mxu0 %v654
    %721 = vmatpush.msra.mxu0 %v650
    %722 = vmatpush.msra.mxu0 %v646
    %723 = vmatpush.msra.mxu0 %v642
    %724 = vmatpush.msra.mxu0 %v638
    %725 = vmatpush.msra.mxu0 %v634
    %726 = vmatpush.msra.mxu0 %v630
    %727 = vmatmul.f32.gmra.mxu0 %v669
    %v728 = vpop.f32.mrf.mxu0
    %v729 = vadd.f32 0.0, %v728
    %730 = vdwg.mxu0
    %731 = vmatpush.msra.mxu0 0.0
    %732 = vmatpush.msra.mxu0 0.0
    %733 = vmatpush.msra.mxu0 0.0
    %734 = vmatpush.msra.mxu0 0.0
    %735 = vmatpush.msra.mxu0 0.0
    %736 = vmatpush.msra.mxu0 0.0
    %737 = vmatpush.msra.mxu0 %v667
    %738 = vmatpush.msra.mxu0 %v663
    %739 = vmatpush.msra.mxu0 %v659
    %740 = vmatpush.msra.mxu0 %v655
    %741 = vmatpush.msra.mxu0 %v651
    %742 = vmatpush.msra.mxu0 %v647
    %743 = vmatpush.msra.mxu0 %v643
    %744 = vmatpush.msra.mxu0 %v639
    %745 = vmatpush.msra.mxu0 %v635
    %746 = vmatpush.msra.mxu0 %v631
    %747 = vmatmul.f32.gmra.mxu0 %v669
    %v748 = vpop.f32.mrf.mxu0
    %v749 = vadd.f32 0.0, %v748
    %750 = vdwg.mxu0
    %v751 = vmul.f32 %v689, 0.2
    %v752 = vmul.f32 %v709, 0.2
    %v753 = vmul.f32 %v729, 0.2
    %v754 = vmul.f32 %v749, 0.2
    %v755 = vmax.f32 %v689, %v751
    %v756 = vmax.f32 %v709, %v752
    %v757 = vmax.f32 %v729, %v753
    %v758 = vmax.f32 %v749, %v754
    %v759 = vadd.f32 %v755, %v94
    %v760 = vadd.f32 %v756, %v95
    %v761 = vadd.f32 %v757, %v96
    %v762 = vadd.f32 %v758, %v97
    %763 = vrot.lane.b32.xlu0 %v759, 17
    %v764 = vpop.permute.xlu0 %763
    %765 = vrot.lane.b32.xlu0 %v760, 17
    %v766 = vpop.permute.xlu0 %765
    %767 = vrot.lane.b32.xlu0 %v761, 17
    %v768 = vpop.permute.xlu0 %767
    %769 = vrot.lane.b32.xlu0 %v762, 17
    %v770 = vpop.permute.xlu0 %769
    %v771 = vsel %vm108, %v768, %v770
    %v772 = vsel %vm108, %v766, %v768
    %v773 = vsel %vm108, %v764, %v766
    %v774 = vsel %vm108, %v770, %v764
    %v775 = vld [vmem:[#allocation9] sm:$0xff]
    %v776 = vld [vmem:[#allocation9 + $0x8] sm:$0xff]
    %v777 = vld [vmem:[#allocation9 + $0x10] sm:$0xff]
    %v778 = vld [vmem:[#allocation9 + $0x18] sm:$0xff]
    %v779 = vmul.f32 %v774, %v775
    %v780 = vmul.f32 %v773, %v776
    %v781 = vmul.f32 %v772, %v777
    %v782 = vmul.f32 %v771, %v778
    %783 = vst [vmem:[#allocation2] sm:$0xff] %v779
    %784 = vst [vmem:[#allocation2 + $0x8] sm:$0xff] %v780
    %785 = vst [vmem:[#allocation2 + $0x10] sm:$0xff] %v781
    %786 = vst [vmem:[#allocation2 + $0x18] sm:$0xff] %v782
    %787 = vrot.lane.b32.xlu0 %v759, 16
    %v788 = vpop.permute.xlu0 %787
    %789 = vrot.lane.b32.xlu0 %v760, 16
    %v790 = vpop.permute.xlu0 %789
    %791 = vrot.lane.b32.xlu0 %v761, 16
    %v792 = vpop.permute.xlu0 %791
    %793 = vrot.lane.b32.xlu0 %v762, 16
    %v794 = vpop.permute.xlu0 %793
    %v795 = vsel %vm133, %v792, %v794
    %v796 = vsel %vm133, %v790, %v792
    %v797 = vsel %vm133, %v788, %v790
    %v798 = vsel %vm133, %v794, %v788
    %v799 = vld [vmem:[#allocation9 + $0x20] sm:$0xff]
    %v800 = vld [vmem:[#allocation9 + $0x28] sm:$0xff]
    %v801 = vld [vmem:[#allocation9 + $0x30] sm:$0xff]
    %v802 = vld [vmem:[#allocation9 + $0x38] sm:$0xff]
    %v803 = vmul.f32 %v798, %v799
    %v804 = vmul.f32 %v797, %v800
    %v805 = vmul.f32 %v796, %v801
    %v806 = vmul.f32 %v795, %v802
    %807 = vst [vmem:[#allocation2 + $0x20] sm:$0xff] %v803
    %808 = vst [vmem:[#allocation2 + $0x28] sm:$0xff] %v804
    %809 = vst [vmem:[#allocation2 + $0x30] sm:$0xff] %v805
    %810 = vst [vmem:[#allocation2 + $0x38] sm:$0xff] %v806
    %811 = vrot.lane.b32.xlu0 %v759, 15
    %v812 = vpop.permute.xlu0 %811
    %813 = vrot.lane.b32.xlu0 %v760, 15
    %v814 = vpop.permute.xlu0 %813
    %815 = vrot.lane.b32.xlu0 %v761, 15
    %v816 = vpop.permute.xlu0 %815
    %817 = vrot.lane.b32.xlu0 %v762, 15
    %v818 = vpop.permute.xlu0 %817
    %v819 = vsel %vm158, %v816, %v818
    %v820 = vsel %vm158, %v814, %v816
    %v821 = vsel %vm158, %v812, %v814
    %v822 = vsel %vm158, %v818, %v812
    %v823 = vld [vmem:[#allocation9 + $0x40] sm:$0xff]
    %v824 = vld [vmem:[#allocation9 + $0x48] sm:$0xff]
    %v825 = vld [vmem:[#allocation9 + $0x50] sm:$0xff]
    %v826 = vld [vmem:[#allocation9 + $0x58] sm:$0xff]
    %v827 = vmul.f32 %v822, %v823
    %v828 = vmul.f32 %v821, %v824
    %v829 = vmul.f32 %v820, %v825
    %v830 = vmul.f32 %v819, %v826
    %831 = vst [vmem:[#allocation2 + $0x40] sm:$0xff] %v827
    %832 = vst [vmem:[#allocation2 + $0x48] sm:$0xff] %v828
    %833 = vst [vmem:[#allocation2 + $0x50] sm:$0xff] %v829
    %834 = vst [vmem:[#allocation2 + $0x58] sm:$0xff] %v830
    %835 = vrot.lane.b32.xlu0 %v759, 1
    %v836 = vpop.permute.xlu0 %835
    %837 = vrot.lane.b32.xlu0 %v760, 1
    %v838 = vpop.permute.xlu0 %837
    %839 = vrot.lane.b32.xlu0 %v761, 1
    %v840 = vpop.permute.xlu0 %839
    %841 = vrot.lane.b32.xlu0 %v762, 1
    %v842 = vpop.permute.xlu0 %841
    %v843 = vsel %vm183, %v840, %v842
    %v844 = vsel %vm183, %v838, %v840
    %v845 = vsel %vm183, %v836, %v838
    %v846 = vsel %vm183, %v842, %v836
    %v847 = vld [vmem:[#allocation9 + $0x60] sm:$0xff]
    %v848 = vld [vmem:[#allocation9 + $0x68] sm:$0xff]
    %v849 = vld [vmem:[#allocation9 + $0x70] sm:$0xff]
    %v850 = vld [vmem:[#allocation9 + $0x78] sm:$0xff]
    %v851 = vmul.f32 %v846, %v847
    %v852 = vmul.f32 %v845, %v848
    %v853 = vmul.f32 %v844, %v849
    %v854 = vmul.f32 %v843, %v850
    %855 = vst [vmem:[#allocation2 + $0x60] sm:$0xff] %v851
    %856 = vst [vmem:[#allocation2 + $0x68] sm:$0xff] %v852
    %857 = vst [vmem:[#allocation2 + $0x70] sm:$0xff] %v853
    %858 = vst [vmem:[#allocation2 + $0x78] sm:$0xff] %v854
    %859 = vst [vmem:[#allocation2 + $0x80] sm:$0xff] %v759
    %860 = vst [vmem:[#allocation2 + $0x88] sm:$0xff] %v760
    %861 = vst [vmem:[#allocation2 + $0x90] sm:$0xff] %v761
    %862 = vst [vmem:[#allocation2 + $0x98] sm:$0xff] %v762
    %863 = vrot.lane.b32.xlu0 %v759, 127
    %v864 = vpop.permute.xlu0 %863
    %865 = vrot.lane.b32.xlu0 %v760, 127
    %v866 = vpop.permute.xlu0 %865
    %867 = vrot.lane.b32.xlu0 %v761, 127
    %v868 = vpop.permute.xlu0 %867
    %869 = vrot.lane.b32.xlu0 %v762, 127
    %v870 = vpop.permute.xlu0 %869
    %v871 = vsel %vm212, %v868, %v870
    %v872 = vsel %vm212, %v866, %v868
    %v873 = vsel %vm212, %v864, %v866
    %v874 = vsel %vm212, %v870, %v864
    %v875 = vld [vmem:[#allocation9 + $0xa0] sm:$0xff]
    %v876 = vld [vmem:[#allocation9 + $0xa8] sm:$0xff]
    %v877 = vld [vmem:[#allocation9 + $0xb0] sm:$0xff]
    %v878 = vld [vmem:[#allocation9 + $0xb8] sm:$0xff]
    %v879 = vmul.f32 %v873, %v875
    %v880 = vmul.f32 %v872, %v876
    %v881 = vmul.f32 %v871, %v877
    %v882 = vmul.f32 %v874, %v878
    %883 = vst [vmem:[#allocation2 + $0xa0] sm:$0xff] %v879
    %884 = vst [vmem:[#allocation2 + $0xa8] sm:$0xff] %v880
    %885 = vst [vmem:[#allocation2 + $0xb0] sm:$0xff] %v881
    %886 = vst [vmem:[#allocation2 + $0xb8] sm:$0xff] %v882
    %887 = vrot.lane.b32.xlu0 %v759, 113
    %v888 = vpop.permute.xlu0 %887
    %889 = vrot.lane.b32.xlu0 %v760, 113
    %v890 = vpop.permute.xlu0 %889
    %891 = vrot.lane.b32.xlu0 %v761, 113
    %v892 = vpop.permute.xlu0 %891
    %893 = vrot.lane.b32.xlu0 %v762, 113
    %v894 = vpop.permute.xlu0 %893
    %v895 = vsel %vm237, %v892, %v894
    %v896 = vsel %vm237, %v890, %v892
    %v897 = vsel %vm237, %v888, %v890
    %v898 = vsel %vm237, %v894, %v888
    %v899 = vld [vmem:[#allocation9 + $0xc0] sm:$0xff]
    %v900 = vld [vmem:[#allocation9 + $0xc8] sm:$0xff]
    %v901 = vld [vmem:[#allocation9 + $0xd0] sm:$0xff]
    %v902 = vld [vmem:[#allocation9 + $0xd8] sm:$0xff]
    %v903 = vmul.f32 %v897, %v899
    %v904 = vmul.f32 %v896, %v900
    %v905 = vmul.f32 %v895, %v901
    %v906 = vmul.f32 %v898, %v902
    %907 = vst [vmem:[#allocation2 + $0xc0] sm:$0xff] %v903
    %908 = vst [vmem:[#allocation2 + $0xc8] sm:$0xff] %v904
    %909 = vst [vmem:[#allocation2 + $0xd0] sm:$0xff] %v905
    %910 = vst [vmem:[#allocation2 + $0xd8] sm:$0xff] %v906
    %911 = vrot.lane.b32.xlu0 %v759, 112
    %v912 = vpop.permute.xlu0 %911
    %913 = vrot.lane.b32.xlu0 %v760, 112
    %v914 = vpop.permute.xlu0 %913
    %915 = vrot.lane.b32.xlu0 %v761, 112
    %v916 = vpop.permute.xlu0 %915
    %917 = vrot.lane.b32.xlu0 %v762, 112
    %v918 = vpop.permute.xlu0 %917
    %v919 = vsel %vm262, %v916, %v918
    %v920 = vsel %vm262, %v914, %v916
    %v921 = vsel %vm262, %v912, %v914
    %v922 = vsel %vm262, %v918, %v912
    %v923 = vld [vmem:[#allocation9 + $0xe0] sm:$0xff]
    %v924 = vld [vmem:[#allocation9 + $0xe8] sm:$0xff]
    %v925 = vld [vmem:[#allocation9 + $0xf0] sm:$0xff]
    %v926 = vld [vmem:[#allocation9 + $0xf8] sm:$0xff]
    %v927 = vmul.f32 %v921, %v923
    %v928 = vmul.f32 %v920, %v924
    %v929 = vmul.f32 %v919, %v925
    %v930 = vmul.f32 %v922, %v926
    %931 = vst [vmem:[#allocation2 + $0xe0] sm:$0xff] %v927
    %932 = vst [vmem:[#allocation2 + $0xe8] sm:$0xff] %v928
    %933 = vst [vmem:[#allocation2 + $0xf0] sm:$0xff] %v929
    %934 = vst [vmem:[#allocation2 + $0xf8] sm:$0xff] %v930
    %935 = vrot.lane.b32.xlu0 %v759, 111
    %v936 = vpop.permute.xlu0 %935
    %937 = vrot.lane.b32.xlu0 %v760, 111
    %v938 = vpop.permute.xlu0 %937
    %939 = vrot.lane.b32.xlu0 %v761, 111
    %v940 = vpop.permute.xlu0 %939
    %941 = vrot.lane.b32.xlu0 %v762, 111
    %v942 = vpop.permute.xlu0 %941
    %v943 = vsel %vm287, %v940, %v942
    %v944 = vsel %vm287, %v938, %v940
    %v945 = vsel %vm287, %v936, %v938
    %v946 = vsel %vm287, %v942, %v936
    %v947 = vld [vmem:[#allocation9 + $0x100] sm:$0xff]
    %v948 = vld [vmem:[#allocation9 + $0x108] sm:$0xff]
    %v949 = vld [vmem:[#allocation9 + $0x110] sm:$0xff]
    %v950 = vld [vmem:[#allocation9 + $0x118] sm:$0xff]
    %v951 = vmul.f32 %v945, %v947
    %v952 = vmul.f32 %v944, %v948
    %v953 = vmul.f32 %v943, %v949
    %v954 = vmul.f32 %v946, %v950
    %955 = vst [vmem:[#allocation2 + $0x100] sm:$0xff] %v951
    %956 = vst [vmem:[#allocation2 + $0x108] sm:$0xff] %v952
    %957 = vst [vmem:[#allocation2 + $0x110] sm:$0xff] %v953
    %958 = vst [vmem:[#allocation2 + $0x118] sm:$0xff] %v954
    %v959 = vld [vmem:[#allocation2] sm:$0xff]
    %v960 = vld [vmem:[#allocation2 + $0x8] sm:$0xff]
    %v961 = vld [vmem:[#allocation2 + $0x10] sm:$0xff]
    %v962 = vld [vmem:[#allocation2 + $0x18] sm:$0xff]
    %v963 = vld [vmem:[#allocation2 + $0x20] sm:$0xff]
    %v964 = vld [vmem:[#allocation2 + $0x28] sm:$0xff]
    %v965 = vld [vmem:[#allocation2 + $0x30] sm:$0xff]
    %v966 = vld [vmem:[#allocation2 + $0x38] sm:$0xff]
    %v967 = vld [vmem:[#allocation2 + $0x40] sm:$0xff]
    %v968 = vld [vmem:[#allocation2 + $0x48] sm:$0xff]
    %v969 = vld [vmem:[#allocation2 + $0x50] sm:$0xff]
    %v970 = vld [vmem:[#allocation2 + $0x58] sm:$0xff]
    %v971 = vld [vmem:[#allocation2 + $0x60] sm:$0xff]
    %v972 = vld [vmem:[#allocation2 + $0x68] sm:$0xff]
    %v973 = vld [vmem:[#allocation2 + $0x70] sm:$0xff]
    %v974 = vld [vmem:[#allocation2 + $0x78] sm:$0xff]
    %v975 = vld [vmem:[#allocation2 + $0x80] sm:$0xff]
    %v976 = vld [vmem:[#allocation2 + $0x88] sm:$0xff]
    %v977 = vld [vmem:[#allocation2 + $0x90] sm:$0xff]
    %v978 = vld [vmem:[#allocation2 + $0x98] sm:$0xff]
    %v979 = vld [vmem:[#allocation2 + $0xa0] sm:$0xff]
    %v980 = vld [vmem:[#allocation2 + $0xa8] sm:$0xff]
    %v981 = vld [vmem:[#allocation2 + $0xb0] sm:$0xff]
    %v982 = vld [vmem:[#allocation2 + $0xb8] sm:$0xff]
    %v983 = vld [vmem:[#allocation2 + $0xc0] sm:$0xff]
    %v984 = vld [vmem:[#allocation2 + $0xc8] sm:$0xff]
    %v985 = vld [vmem:[#allocation2 + $0xd0] sm:$0xff]
    %v986 = vld [vmem:[#allocation2 + $0xd8] sm:$0xff]
    %v987 = vld [vmem:[#allocation2 + $0xe0] sm:$0xff]
    %v988 = vld [vmem:[#allocation2 + $0xe8] sm:$0xff]
    %v989 = vld [vmem:[#allocation2 + $0xf0] sm:$0xff]
    %v990 = vld [vmem:[#allocation2 + $0xf8] sm:$0xff]
    %v991 = vld [vmem:[#allocation2 + $0x100] sm:$0xff]
    %v992 = vld [vmem:[#allocation2 + $0x108] sm:$0xff]
    %v993 = vld [vmem:[#allocation2 + $0x110] sm:$0xff]
    %v994 = vld [vmem:[#allocation2 + $0x118] sm:$0xff]
    %v995 = vld [vmem:[#allocation2 + $0x120] sm:$0xff]
    %v996 = vld [vmem:[#allocation2 + $0x128] sm:$0xff]
    %v997 = vld [vmem:[#allocation2 + $0x130] sm:$0xff]
    %v998 = vld [vmem:[#allocation2 + $0x138] sm:$0xff]
    %999 = vmatpush.msra.mxu0 0.0
    %1000 = vmatpush.msra.mxu0 0.0
    %1001 = vmatpush.msra.mxu0 0.0
    %1002 = vmatpush.msra.mxu0 0.0
    %1003 = vmatpush.msra.mxu0 0.0
    %1004 = vmatpush.msra.mxu0 0.0
    %1005 = vmatpush.msra.mxu0 %v995
    %1006 = vmatpush.msra.mxu0 %v991
    %1007 = vmatpush.msra.mxu0 %v987
    %1008 = vmatpush.msra.mxu0 %v983
    %1009 = vmatpush.msra.mxu0 %v979
    %1010 = vmatpush.msra.mxu0 %v975
    %1011 = vmatpush.msra.mxu0 %v971
    %1012 = vmatpush.msra.mxu0 %v967
    %1013 = vmatpush.msra.mxu0 %v963
    %1014 = vmatpush.msra.mxu0 %v959
    %1015 = vmatmul.f32.gmra.mxu0 %v346
    %v1016 = vpop.f32.mrf.mxu0
    %v1017 = vadd.f32 0.0, %v1016
    %1018 = vdwg.mxu0
    %1019 = vmatpush.msra.mxu0 0.0
    %1020 = vmatpush.msra.mxu0 0.0
    %1021 = vmatpush.msra.mxu0 0.0
    %1022 = vmatpush.msra.mxu0 0.0
    %1023 = vmatpush.msra.mxu0 0.0
    %1024 = vmatpush.msra.mxu0 0.0
    %1025 = vmatpush.msra.mxu0 %v996
    %1026 = vmatpush.msra.mxu0 %v992
    %1027 = vmatpush.msra.mxu0 %v988
    %1028 = vmatpush.msra.mxu0 %v984
    %1029 = vmatpush.msra.mxu0 %v980
    %1030 = vmatpush.msra.mxu0 %v976
    %1031 = vmatpush.msra.mxu0 %v972
    %1032 = vmatpush.msra.mxu0 %v968
    %1033 = vmatpush.msra.mxu0 %v964
    %1034 = vmatpush.msra.mxu0 %v960
    %1035 = vmatmul.f32.gmra.mxu0 %v346
    %v1036 = vpop.f32.mrf.mxu0
    %v1037 = vadd.f32 0.0, %v1036
    %1038 = vdwg.mxu0
    %1039 = vmatpush.msra.mxu0 0.0
    %1040 = vmatpush.msra.mxu0 0.0
    %1041 = vmatpush.msra.mxu0 0.0
    %1042 = vmatpush.msra.mxu0 0.0
    %1043 = vmatpush.msra.mxu0 0.0
    %1044 = vmatpush.msra.mxu0 0.0
    %1045 = vmatpush.msra.mxu0 %v997
    %1046 = vmatpush.msra.mxu0 %v993
    %1047 = vmatpush.msra.mxu0 %v989
    %1048 = vmatpush.msra.mxu0 %v985
    %1049 = vmatpush.msra.mxu0 %v981
    %1050 = vmatpush.msra.mxu0 %v977
    %1051 = vmatpush.msra.mxu0 %v973
    %1052 = vmatpush.msra.mxu0 %v969
    %1053 = vmatpush.msra.mxu0 %v965
    %1054 = vmatpush.msra.mxu0 %v961
    %1055 = vmatmul.f32.gmra.mxu0 %v346
    %v1056 = vpop.f32.mrf.mxu0
    %v1057 = vadd.f32 0.0, %v1056
    %1058 = vdwg.mxu0
    %1059 = vmatpush.msra.mxu0 0.0
    %1060 = vmatpush.msra.mxu0 0.0
    %1061 = vmatpush.msra.mxu0 0.0
    %1062 = vmatpush.msra.mxu0 0.0
    %1063 = vmatpush.msra.mxu0 0.0
    %1064 = vmatpush.msra.mxu0 0.0
    %1065 = vmatpush.msra.mxu0 %v998
    %1066 = vmatpush.msra.mxu0 %v994
    %1067 = vmatpush.msra.mxu0 %v990
    %1068 = vmatpush.msra.mxu0 %v986
    %1069 = vmatpush.msra.mxu0 %v982
    %1070 = vmatpush.msra.mxu0 %v978
    %1071 = vmatpush.msra.mxu0 %v974
    %1072 = vmatpush.msra.mxu0 %v970
    %1073 = vmatpush.msra.mxu0 %v966
    %1074 = vmatpush.msra.mxu0 %v962
    %1075 = vmatmul.f32.gmra.mxu0 %v346
    %v1076 = vpop.f32.mrf.mxu0
    %v1077 = vadd.f32 0.0, %v1076
    %1078 = vdwg.mxu0
    %v1079 = vmax.f32 %v1017, 0.0
    %v1080 = vmax.f32 %v1037, 0.0
    %v1081 = vmax.f32 %v1057, 0.0
    %v1082 = vmax.f32 %v1077, 0.0
    %1083 = vrot.lane.b32.xlu0 %v1079, 17
    %v1084 = vpop.permute.xlu0 %1083
    %1085 = vrot.lane.b32.xlu0 %v1080, 17
    %v1086 = vpop.permute.xlu0 %1085
    %1087 = vrot.lane.b32.xlu0 %v1081, 17
    %v1088 = vpop.permute.xlu0 %1087
    %1089 = vrot.lane.b32.xlu0 %v1082, 17
    %v1090 = vpop.permute.xlu0 %1089
    %v1091 = vsel %vm108, %v1088, %v1090
    %v1092 = vsel %vm108, %v1086, %v1088
    %v1093 = vsel %vm108, %v1084, %v1086
    %v1094 = vsel %vm108, %v1090, %v1084
    %v1095 = vld [vmem:[#allocation9] sm:$0xff]
    %v1096 = vld [vmem:[#allocation9 + $0x8] sm:$0xff]
    %v1097 = vld [vmem:[#allocation9 + $0x10] sm:$0xff]
    %v1098 = vld [vmem:[#allocation9 + $0x18] sm:$0xff]
    %v1099 = vmul.f32 %v1094, %v1095
    %v1100 = vmul.f32 %v1093, %v1096
    %v1101 = vmul.f32 %v1092, %v1097
    %v1102 = vmul.f32 %v1091, %v1098
    %1103 = vst [vmem:[#allocation2] sm:$0xff] %v1099
    %1104 = vst [vmem:[#allocation2 + $0x8] sm:$0xff] %v1100
    %1105 = vst [vmem:[#allocation2 + $0x10] sm:$0xff] %v1101
    %1106 = vst [vmem:[#allocation2 + $0x18] sm:$0xff] %v1102
    %1107 = vrot.lane.b32.xlu0 %v1079, 16
    %v1108 = vpop.permute.xlu0 %1107
    %1109 = vrot.lane.b32.xlu0 %v1080, 16
    %v1110 = vpop.permute.xlu0 %1109
    %1111 = vrot.lane.b32.xlu0 %v1081, 16
    %v1112 = vpop.permute.xlu0 %1111
    %1113 = vrot.lane.b32.xlu0 %v1082, 16
    %v1114 = vpop.permute.xlu0 %1113
    %v1115 = vsel %vm133, %v1112, %v1114
    %v1116 = vsel %vm133, %v1110, %v1112
    %v1117 = vsel %vm133, %v1108, %v1110
    %v1118 = vsel %vm133, %v1114, %v1108
    %v1119 = vld [vmem:[#allocation9 + $0x20] sm:$0xff]
    %v1120 = vld [vmem:[#allocation9 + $0x28] sm:$0xff]
    %v1121 = vld [vmem:[#allocation9 + $0x30] sm:$0xff]
    %v1122 = vld [vmem:[#allocation9 + $0x38] sm:$0xff]
    %v1123 = vmul.f32 %v1118, %v1119
    %v1124 = vmul.f32 %v1117, %v1120
    %v1125 = vmul.f32 %v1116, %v1121
    %v1126 = vmul.f32 %v1115, %v1122
    %1127 = vst [vmem:[#allocation2 + $0x20] sm:$0xff] %v1123
    %1128 = vst [vmem:[#allocation2 + $0x28] sm:$0xff] %v1124
    %1129 = vst [vmem:[#allocation2 + $0x30] sm:$0xff] %v1125
    %1130 = vst [vmem:[#allocation2 + $0x38] sm:$0xff] %v1126
    %1131 = vrot.lane.b32.xlu0 %v1079, 15
    %v1132 = vpop.permute.xlu0 %1131
    %1133 = vrot.lane.b32.xlu0 %v1080, 15
    %v1134 = vpop.permute.xlu0 %1133
    %1135 = vrot.lane.b32.xlu0 %v1081, 15
    %v1136 = vpop.permute.xlu0 %1135
    %1137 = vrot.lane.b32.xlu0 %v1082, 15
    %v1138 = vpop.permute.xlu0 %1137
    %v1139 = vsel %vm158, %v1136, %v1138
    %v1140 = vsel %vm158, %v1134, %v1136
    %v1141 = vsel %vm158, %v1132, %v1134
    %v1142 = vsel %vm158, %v1138, %v1132
    %v1143 = vld [vmem:[#allocation9 + $0x40] sm:$0xff]
    %v1144 = vld [vmem:[#allocation9 + $0x48] sm:$0xff]
    %v1145 = vld [vmem:[#allocation9 + $0x50] sm:$0xff]
    %v1146 = vld [vmem:[#allocation9 + $0x58] sm:$0xff]
    %v1147 = vmul.f32 %v1142, %v1143
    %v1148 = vmul.f32 %v1141, %v1144
    %v1149 = vmul.f32 %v1140, %v1145
    %v1150 = vmul.f32 %v1139, %v1146
    %1151 = vst [vmem:[#allocation2 + $0x40] sm:$0xff] %v1147
    %1152 = vst [vmem:[#allocation2 + $0x48] sm:$0xff] %v1148
    %1153 = vst [vmem:[#allocation2 + $0x50] sm:$0xff] %v1149
    %1154 = vst [vmem:[#allocation2 + $0x58] sm:$0xff] %v1150
    %1155 = vrot.lane.b32.xlu0 %v1079, 1
    %v1156 = vpop.permute.xlu0 %1155
    %1157 = vrot.lane.b32.xlu0 %v1080, 1
    %v1158 = vpop.permute.xlu0 %1157
    %1159 = vrot.lane.b32.xlu0 %v1081, 1
    %v1160 = vpop.permute.xlu0 %1159
    %1161 = vrot.lane.b32.xlu0 %v1082, 1
    %v1162 = vpop.permute.xlu0 %1161
    %v1163 = vsel %vm183, %v1160, %v1162
    %v1164 = vsel %vm183, %v1158, %v1160
    %v1165 = vsel %vm183, %v1156, %v1158
    %v1166 = vsel %vm183, %v1162, %v1156
    %v1167 = vld [vmem:[#allocation9 + $0x60] sm:$0xff]
    %v1168 = vld [vmem:[#allocation9 + $0x68] sm:$0xff]
    %v1169 = vld [vmem:[#allocation9 + $0x70] sm:$0xff]
    %v1170 = vld [vmem:[#allocation9 + $0x78] sm:$0xff]
    %v1171 = vmul.f32 %v1166, %v1167
    %v1172 = vmul.f32 %v1165, %v1168
    %v1173 = vmul.f32 %v1164, %v1169
    %v1174 = vmul.f32 %v1163, %v1170
    %1175 = vst [vmem:[#allocation2 + $0x60] sm:$0xff] %v1171
    %1176 = vst [vmem:[#allocation2 + $0x68] sm:$0xff] %v1172
    %1177 = vst [vmem:[#allocation2 + $0x70] sm:$0xff] %v1173
    %1178 = vst [vmem:[#allocation2 + $0x78] sm:$0xff] %v1174
    %1179 = vst [vmem:[#allocation2 + $0x80] sm:$0xff] %v1079
    %1180 = vst [vmem:[#allocation2 + $0x88] sm:$0xff] %v1080
    %1181 = vst [vmem:[#allocation2 + $0x90] sm:$0xff] %v1081
    %1182 = vst [vmem:[#allocation2 + $0x98] sm:$0xff] %v1082
    %1183 = vrot.lane.b32.xlu0 %v1079, 127
    %v1184 = vpop.permute.xlu0 %1183
    %1185 = vrot.lane.b32.xlu0 %v1080, 127
    %v1186 = vpop.permute.xlu0 %1185
    %1187 = vrot.lane.b32.xlu0 %v1081, 127
    %v1188 = vpop.permute.xlu0 %1187
    %1189 = vrot.lane.b32.xlu0 %v1082, 127
    %v1190 = vpop.permute.xlu0 %1189
    %v1191 = vsel %vm212, %v1188, %v1190
    %v1192 = vsel %vm212, %v1186, %v1188
    %v1193 = vsel %vm212, %v1184, %v1186
    %v1194 = vsel %vm212, %v1190, %v1184
    %v1195 = vld [vmem:[#allocation9 + $0xa0] sm:$0xff]
    %v1196 = vld [vmem:[#allocation9 + $0xa8] sm:$0xff]
    %v1197 = vld [vmem:[#allocation9 + $0xb0] sm:$0xff]
    %v1198 = vld [vmem:[#allocation9 + $0xb8] sm:$0xff]
    %v1199 = vmul.f32 %v1193, %v1195
    %v1200 = vmul.f32 %v1192, %v1196
    %v1201 = vmul.f32 %v1191, %v1197
    %v1202 = vmul.f32 %v1194, %v1198
    %1203 = vst [vmem:[#allocation2 + $0xa0] sm:$0xff] %v1199
    %1204 = vst [vmem:[#allocation2 + $0xa8] sm:$0xff] %v1200
    %1205 = vst [vmem:[#allocation2 + $0xb0] sm:$0xff] %v1201
    %1206 = vst [vmem:[#allocation2 + $0xb8] sm:$0xff] %v1202
    %1207 = vrot.lane.b32.xlu0 %v1079, 113
    %v1208 = vpop.permute.xlu0 %1207
    %1209 = vrot.lane.b32.xlu0 %v1080, 113
    %v1210 = vpop.permute.xlu0 %1209
    %1211 = vrot.lane.b32.xlu0 %v1081, 113
    %v1212 = vpop.permute.xlu0 %1211
    %1213 = vrot.lane.b32.xlu0 %v1082, 113
    %v1214 = vpop.permute.xlu0 %1213
    %v1215 = vsel %vm237, %v1212, %v1214
    %v1216 = vsel %vm237, %v1210, %v1212
    %v1217 = vsel %vm237, %v1208, %v1210
    %v1218 = vsel %vm237, %v1214, %v1208
    %v1219 = vld [vmem:[#allocation9 + $0xc0] sm:$0xff]
    %v1220 = vld [vmem:[#allocation9 + $0xc8] sm:$0xff]
    %v1221 = vld [vmem:[#allocation9 + $0xd0] sm:$0xff]
    %v1222 = vld [vmem:[#allocation9 + $0xd8] sm:$0xff]
    %v1223 = vmul.f32 %v1217, %v1219
    %v1224 = vmul.f32 %v1216, %v1220
    %v1225 = vmul.f32 %v1215, %v1221
    %v1226 = vmul.f32 %v1218, %v1222
    %1227 = vst [vmem:[#allocation2 + $0xc0] sm:$0xff] %v1223
    %1228 = vst [vmem:[#allocation2 + $0xc8] sm:$0xff] %v1224
    %1229 = vst [vmem:[#allocation2 + $0xd0] sm:$0xff] %v1225
    %1230 = vst [vmem:[#allocation2 + $0xd8] sm:$0xff] %v1226
    %1231 = vrot.lane.b32.xlu0 %v1079, 112
    %v1232 = vpop.permute.xlu0 %1231
    %1233 = vrot.lane.b32.xlu0 %v1080, 112
    %v1234 = vpop.permute.xlu0 %1233
    %1235 = vrot.lane.b32.xlu0 %v1081, 112
    %v1236 = vpop.permute.xlu0 %1235
    %1237 = vrot.lane.b32.xlu0 %v1082, 112
    %v1238 = vpop.permute.xlu0 %1237
    %v1239 = vsel %vm262, %v1236, %v1238
    %v1240 = vsel %vm262, %v1234, %v1236
    %v1241 = vsel %vm262, %v1232, %v1234
    %v1242 = vsel %vm262, %v1238, %v1232
    %v1243 = vld [vmem:[#allocation9 + $0xe0] sm:$0xff]
    %v1244 = vld [vmem:[#allocation9 + $0xe8] sm:$0xff]
    %v1245 = vld [vmem:[#allocation9 + $0xf0] sm:$0xff]
    %v1246 = vld [vmem:[#allocation9 + $0xf8] sm:$0xff]
    %v1247 = vmul.f32 %v1241, %v1243
    %v1248 = vmul.f32 %v1240, %v1244
    %v1249 = vmul.f32 %v1239, %v1245
    %v1250 = vmul.f32 %v1242, %v1246
    %1251 = vst [vmem:[#allocation2 + $0xe0] sm:$0xff] %v1247
    %1252 = vst [vmem:[#allocation2 + $0xe8] sm:$0xff] %v1248
    %1253 = vst [vmem:[#allocation2 + $0xf0] sm:$0xff] %v1249
    %1254 = vst [vmem:[#allocation2 + $0xf8] sm:$0xff] %v1250
    %1255 = vrot.lane.b32.xlu0 %v1079, 111
    %v1256 = vpop.permute.xlu0 %1255
    %1257 = vrot.lane.b32.xlu0 %v1080, 111
    %v1258 = vpop.permute.xlu0 %1257
    %1259 = vrot.lane.b32.xlu0 %v1081, 111
    %v1260 = vpop.permute.xlu0 %1259
    %1261 = vrot.lane.b32.xlu0 %v1082, 111
    %v1262 = vpop.permute.xlu0 %1261
    %v1263 = vsel %vm287, %v1260, %v1262
    %v1264 = vsel %vm287, %v1258, %v1260
    %v1265 = vsel %vm287, %v1256, %v1258
    %v1266 = vsel %vm287, %v1262, %v1256
    %v1267 = vld [vmem:[#allocation9 + $0x100] sm:$0xff]
    %v1268 = vld [vmem:[#allocation9 + $0x108] sm:$0xff]
    %v1269 = vld [vmem:[#allocation9 + $0x110] sm:$0xff]
    %v1270 = vld [vmem:[#allocation9 + $0x118] sm:$0xff]
    %v1271 = vmul.f32 %v1265, %v1267
    %v1272 = vmul.f32 %v1264, %v1268
    %v1273 = vmul.f32 %v1263, %v1269
    %v1274 = vmul.f32 %v1266, %v1270
    %1275 = vst [vmem:[#allocation2 + $0x100] sm:$0xff] %v1271
    %1276 = vst [vmem:[#allocation2 + $0x108] sm:$0xff] %v1272
    %1277 = vst [vmem:[#allocation2 + $0x110] sm:$0xff] %v1273
    %1278 = vst [vmem:[#allocation2 + $0x118] sm:$0xff] %v1274
    %v1279 = vld [vmem:[#allocation2] sm:$0xff]
    %v1280 = vld [vmem:[#allocation2 + $0x8] sm:$0xff]
    %v1281 = vld [vmem:[#allocation2 + $0x10] sm:$0xff]
    %v1282 = vld [vmem:[#allocation2 + $0x18] sm:$0xff]
    %v1283 = vld [vmem:[#allocation2 + $0x20] sm:$0xff]
    %v1284 = vld [vmem:[#allocation2 + $0x28] sm:$0xff]
    %v1285 = vld [vmem:[#allocation2 + $0x30] sm:$0xff]
    %v1286 = vld [vmem:[#allocation2 + $0x38] sm:$0xff]
    %v1287 = vld [vmem:[#allocation2 + $0x40] sm:$0xff]
    %v1288 = vld [vmem:[#allocation2 + $0x48] sm:$0xff]
    %v1289 = vld [vmem:[#allocation2 + $0x50] sm:$0xff]
    %v1290 = vld [vmem:[#allocation2 + $0x58] sm:$0xff]
    %v1291 = vld [vmem:[#allocation2 + $0x60] sm:$0xff]
    %v1292 = vld [vmem:[#allocation2 + $0x68] sm:$0xff]
    %v1293 = vld [vmem:[#allocation2 + $0x70] sm:$0xff]
    %v1294 = vld [vmem:[#allocation2 + $0x78] sm:$0xff]
    %v1295 = vld [vmem:[#allocation2 + $0x80] sm:$0xff]
    %v1296 = vld [vmem:[#allocation2 + $0x88] sm:$0xff]
    %v1297 = vld [vmem:[#allocation2 + $0x90] sm:$0xff]
    %v1298 = vld [vmem:[#allocation2 + $0x98] sm:$0xff]
    %v1299 = vld [vmem:[#allocation2 + $0xa0] sm:$0xff]
    %v1300 = vld [vmem:[#allocation2 + $0xa8] sm:$0xff]
    %v1301 = vld [vmem:[#allocation2 + $0xb0] sm:$0xff]
    %v1302 = vld [vmem:[#allocation2 + $0xb8] sm:$0xff]
    %v1303 = vld [vmem:[#allocation2 + $0xc0] sm:$0xff]
    %v1304 = vld [vmem:[#allocation2 + $0xc8] sm:$0xff]
    %v1305 = vld [vmem:[#allocation2 + $0xd0] sm:$0xff]
    %v1306 = vld [vmem:[#allocation2 + $0xd8] sm:$0xff]
    %v1307 = vld [vmem:[#allocation2 + $0xe0] sm:$0xff]
    %v1308 = vld [vmem:[#allocation2 + $0xe8] sm:$0xff]
    %v1309 = vld [vmem:[#allocation2 + $0xf0] sm:$0xff]
    %v1310 = vld [vmem:[#allocation2 + $0xf8] sm:$0xff]
    %v1311 = vld [vmem:[#allocation2 + $0x100] sm:$0xff]
    %v1312 = vld [vmem:[#allocation2 + $0x108] sm:$0xff]
    %v1313 = vld [vmem:[#allocation2 + $0x110] sm:$0xff]
    %v1314 = vld [vmem:[#allocation2 + $0x118] sm:$0xff]
    %v1315 = vld [vmem:[#allocation2 + $0x120] sm:$0xff]
    %v1316 = vld [vmem:[#allocation2 + $0x128] sm:$0xff]
    %v1317 = vld [vmem:[#allocation2 + $0x130] sm:$0xff]
    %v1318 = vld [vmem:[#allocation2 + $0x138] sm:$0xff]
    %1319 = vmatpush.msra.mxu0 0.0
    %1320 = vmatpush.msra.mxu0 0.0
    %1321 = vmatpush.msra.mxu0 0.0
    %1322 = vmatpush.msra.mxu0 0.0
    %1323 = vmatpush.msra.mxu0 0.0
    %1324 = vmatpush.msra.mxu0 0.0
    %1325 = vmatpush.msra.mxu0 %v1315
    %1326 = vmatpush.msra.mxu0 %v1311
    %1327 = vmatpush.msra.mxu0 %v1307
    %1328 = vmatpush.msra.mxu0 %v1303
    %1329 = vmatpush.msra.mxu0 %v1299
    %1330 = vmatpush.msra.mxu0 %v1295
    %1331 = vmatpush.msra.mxu0 %v1291
    %1332 = vmatpush.msra.mxu0 %v1287
    %1333 = vmatpush.msra.mxu0 %v1283
    %1334 = vmatpush.msra.mxu0 %v1279
    %1335 = vmatmul.f32.gmra.mxu0 %v669
    %v1336 = vpop.f32.mrf.mxu0
    %v1337 = vadd.f32 0.0, %v1336
    %1338 = vdwg.mxu0
    %1339 = vmatpush.msra.mxu0 0.0
    %1340 = vmatpush.msra.mxu0 0.0
    %1341 = vmatpush.msra.mxu0 0.0
    %1342 = vmatpush.msra.mxu0 0.0
    %1343 = vmatpush.msra.mxu0 0.0
    %1344 = vmatpush.msra.mxu0 0.0
    %1345 = vmatpush.msra.mxu0 %v1316
    %1346 = vmatpush.msra.mxu0 %v1312
    %1347 = vmatpush.msra.mxu0 %v1308
    %1348 = vmatpush.msra.mxu0 %v1304
    %1349 = vmatpush.msra.mxu0 %v1300
    %1350 = vmatpush.msra.mxu0 %v1296
    %1351 = vmatpush.msra.mxu0 %v1292
    %1352 = vmatpush.msra.mxu0 %v1288
    %1353 = vmatpush.msra.mxu0 %v1284
    %1354 = vmatpush.msra.mxu0 %v1280
    %1355 = vmatmul.f32.gmra.mxu0 %v669
    %v1356 = vpop.f32.mrf.mxu0
    %v1357 = vadd.f32 0.0, %v1356
    %1358 = vdwg.mxu0
    %1359 = vmatpush.msra.mxu0 0.0
    %1360 = vmatpush.msra.mxu0 0.0
    %1361 = vmatpush.msra.mxu0 0.0
    %1362 = vmatpush.msra.mxu0 0.0
    %1363 = vmatpush.msra.mxu0 0.0
    %1364 = vmatpush.msra.mxu0 0.0
    %1365 = vmatpush.msra.mxu0 %v1317
    %1366 = vmatpush.msra.mxu0 %v1313
    %1367 = vmatpush.msra.mxu0 %v1309
    %1368 = vmatpush.msra.mxu0 %v1305
    %1369 = vmatpush.msra.mxu0 %v1301
    %1370 = vmatpush.msra.mxu0 %v1297
    %1371 = vmatpush.msra.mxu0 %v1293
    %1372 = vmatpush.msra.mxu0 %v1289
    %1373 = vmatpush.msra.mxu0 %v1285
    %1374 = vmatpush.msra.mxu0 %v1281
    %1375 = vmatmul.f32.gmra.mxu0 %v669
    %v1376 = vpop.f32.mrf.mxu0
    %v1377 = vadd.f32 0.0, %v1376
    %1378 = vdwg.mxu0
    %1379 = vmatpush.msra.mxu0 0.0
    %1380 = vmatpush.msra.mxu0 0.0
    %1381 = vmatpush.msra.mxu0 0.0
    %1382 = vmatpush.msra.mxu0 0.0
    %1383 = vmatpush.msra.mxu0 0.0
    %1384 = vmatpush.msra.mxu0 0.0
    %1385 = vmatpush.msra.mxu0 %v1318
    %1386 = vmatpush.msra.mxu0 %v1314
    %1387 = vmatpush.msra.mxu0 %v1310
    %1388 = vmatpush.msra.mxu0 %v1306
    %1389 = vmatpush.msra.mxu0 %v1302
    %1390 = vmatpush.msra.mxu0 %v1298
    %1391 = vmatpush.msra.mxu0 %v1294
    %1392 = vmatpush.msra.mxu0 %v1290
    %1393 = vmatpush.msra.mxu0 %v1286
    %1394 = vmatpush.msra.mxu0 %v1282
    %1395 = vmatmul.f32.gmra.mxu0 %v669
    %v1396 = vpop.f32.mrf.mxu0
    %v1397 = vadd.f32 0.0, %v1396
    %1398 = vdwg.mxu0
    %v1399 = vmul.f32 %v1337, 0.2
    %v1400 = vmul.f32 %v1357, 0.2
    %v1401 = vmul.f32 %v1377, 0.2
    %v1402 = vmul.f32 %v1397, 0.2
    %v1403 = vmax.f32 %v1337, %v1399
    %v1404 = vmax.f32 %v1357, %v1400
    %v1405 = vmax.f32 %v1377, %v1401
    %v1406 = vmax.f32 %v1397, %v1402
    %v1407 = vadd.f32 %v1403, %v759
    %v1408 = vadd.f32 %v1404, %v760
    %v1409 = vadd.f32 %v1405, %v761
    %v1410 = vadd.f32 %v1406, %v762
    %1411 = vrot.lane.b32.xlu0 %v1407, 17
    %v1412 = vpop.permute.xlu0 %1411
    %1413 = vrot.lane.b32.xlu0 %v1408, 17
    %v1414 = vpop.permute.xlu0 %1413
    %1415 = vrot.lane.b32.xlu0 %v1409, 17
    %v1416 = vpop.permute.xlu0 %1415
    %1417 = vrot.lane.b32.xlu0 %v1410, 17
    %v1418 = vpop.permute.xlu0 %1417
    %v1419 = vsel %vm108, %v1416, %v1418
    %v1420 = vsel %vm108, %v1414, %v1416
    %v1421 = vsel %vm108, %v1412, %v1414
    %v1422 = vsel %vm108, %v1418, %v1412
    %v1423 = vld [vmem:[#allocation9] sm:$0xff]
    %v1424 = vld [vmem:[#allocation9 + $0x8] sm:$0xff]
    %v1425 = vld [vmem:[#allocation9 + $0x10] sm:$0xff]
    %v1426 = vld [vmem:[#allocation9 + $0x18] sm:$0xff]
    %v1427 = vmul.f32 %v1422, %v1423
    %v1428 = vmul.f32 %v1421, %v1424
    %v1429 = vmul.f32 %v1420, %v1425
    %v1430 = vmul.f32 %v1419, %v1426
    %1431 = vst [vmem:[#allocation2] sm:$0xff] %v1427
    %1432 = vst [vmem:[#allocation2 + $0x8] sm:$0xff] %v1428
    %1433 = vst [vmem:[#allocation2 + $0x10] sm:$0xff] %v1429
    %1434 = vst [vmem:[#allocation2 + $0x18] sm:$0xff] %v1430
    %1435 = vrot.lane.b32.xlu0 %v1407, 16
    %v1436 = vpop.permute.xlu0 %1435
    %1437 = vrot.lane.b32.xlu0 %v1408, 16
    %v1438 = vpop.permute.xlu0 %1437
    %1439 = vrot.lane.b32.xlu0 %v1409, 16
    %v1440 = vpop.permute.xlu0 %1439
    %1441 = vrot.lane.b32.xlu0 %v1410, 16
    %v1442 = vpop.permute.xlu0 %1441
    %v1443 = vsel %vm133, %v1440, %v1442
    %v1444 = vsel %vm133, %v1438, %v1440
    %v1445 = vsel %vm133, %v1436, %v1438
    %v1446 = vsel %vm133, %v1442, %v1436
    %v1447 = vld [vmem:[#allocation9 + $0x20] sm:$0xff]
    %v1448 = vld [vmem:[#allocation9 + $0x28] sm:$0xff]
    %v1449 = vld [vmem:[#allocation9 + $0x30] sm:$0xff]
    %v1450 = vld [vmem:[#allocation9 + $0x38] sm:$0xff]
    %v1451 = vmul.f32 %v1446, %v1447
    %v1452 = vmul.f32 %v1445, %v1448
    %v1453 = vmul.f32 %v1444, %v1449
    %v1454 = vmul.f32 %v1443, %v1450
    %1455 = vst [vmem:[#allocation2 + $0x20] sm:$0xff] %v1451
    %1456 = vst [vmem:[#allocation2 + $0x28] sm:$0xff] %v1452
    %1457 = vst [vmem:[#allocation2 + $0x30] sm:$0xff] %v1453
    %1458 = vst [vmem:[#allocation2 + $0x38] sm:$0xff] %v1454
    %1459 = vrot.lane.b32.xlu0 %v1407, 15
    %v1460 = vpop.permute.xlu0 %1459
    %1461 = vrot.lane.b32.xlu0 %v1408, 15
    %v1462 = vpop.permute.xlu0 %1461
    %1463 = vrot.lane.b32.xlu0 %v1409, 15
    %v1464 = vpop.permute.xlu0 %1463
    %1465 = vrot.lane.b32.xlu0 %v1410, 15
    %v1466 = vpop.permute.xlu0 %1465
    %v1467 = vsel %vm158, %v1464, %v1466
    %v1468 = vsel %vm158, %v1462, %v1464
    %v1469 = vsel %vm158, %v1460, %v1462
    %v1470 = vsel %vm158, %v1466, %v1460
    %v1471 = vld [vmem:[#allocation9 + $0x40] sm:$0xff]
    %v1472 = vld [vmem:[#allocation9 + $0x48] sm:$0xff]
    %v1473 = vld [vmem:[#allocation9 + $0x50] sm:$0xff]
    %v1474 = vld [vmem:[#allocation9 + $0x58] sm:$0xff]
    %v1475 = vmul.f32 %v1470, %v1471
    %v1476 = vmul.f32 %v1469, %v1472
    %v1477 = vmul.f32 %v1468, %v1473
    %v1478 = vmul.f32 %v1467, %v1474
    %1479 = vst [vmem:[#allocation2 + $0x40] sm:$0xff] %v1475
    %1480 = vst [vmem:[#allocation2 + $0x48] sm:$0xff] %v1476
    %1481 = vst [vmem:[#allocation2 + $0x50] sm:$0xff] %v1477
    %1482 = vst [vmem:[#allocation2 + $0x58] sm:$0xff] %v1478
    %1483 = vrot.lane.b32.xlu0 %v1407, 1
    %v1484 = vpop.permute.xlu0 %1483
    %1485 = vrot.lane.b32.xlu0 %v1408, 1
    %v1486 = vpop.permute.xlu0 %1485
    %1487 = vrot.lane.b32.xlu0 %v1409, 1
    %v1488 = vpop.permute.xlu0 %1487
    %1489 = vrot.lane.b32.xlu0 %v1410, 1
    %v1490 = vpop.permute.xlu0 %1489
    %v1491 = vsel %vm183, %v1488, %v1490
    %v1492 = vsel %vm183, %v1486, %v1488
    %v1493 = vsel %vm183, %v1484, %v1486
    %v1494 = vsel %vm183, %v1490, %v1484
    %v1495 = vld [vmem:[#allocation9 + $0x60] sm:$0xff]
    %v1496 = vld [vmem:[#allocation9 + $0x68] sm:$0xff]
    %v1497 = vld [vmem:[#allocation9 + $0x70] sm:$0xff]
    %v1498 = vld [vmem:[#allocation9 + $0x78] sm:$0xff]
    %v1499 = vmul.f32 %v1494, %v1495
    %v1500 = vmul.f32 %v1493, %v1496
    %v1501 = vmul.f32 %v1492, %v1497
    %v1502 = vmul.f32 %v1491, %v1498
    %1503 = vst [vmem:[#allocation2 + $0x60] sm:$0xff] %v1499
    %1504 = vst [vmem:[#allocation2 + $0x68] sm:$0xff] %v1500
    %1505 = vst [vmem:[#allocation2 + $0x70] sm:$0xff] %v1501
    %1506 = vst [vmem:[#allocation2 + $0x78] sm:$0xff] %v1502
    %1507 = vst [vmem:[#allocation2 + $0x80] sm:$0xff] %v1407
    %1508 = vst [vmem:[#allocation2 + $0x88] sm:$0xff] %v1408
    %1509 = vst [vmem:[#allocation2 + $0x90] sm:$0xff] %v1409
    %1510 = vst [vmem:[#allocation2 + $0x98] sm:$0xff] %v1410
    %1511 = vrot.lane.b32.xlu0 %v1407, 127
    %v1512 = vpop.permute.xlu0 %1511
    %1513 = vrot.lane.b32.xlu0 %v1408, 127
    %v1514 = vpop.permute.xlu0 %1513
    %1515 = vrot.lane.b32.xlu0 %v1409, 127
    %v1516 = vpop.permute.xlu0 %1515
    %1517 = vrot.lane.b32.xlu0 %v1410, 127
    %v1518 = vpop.permute.xlu0 %1517
    %v1519 = vsel %vm212, %v1516, %v1518
    %v1520 = vsel %vm212, %v1514, %v1516
    %v1521 = vsel %vm212, %v1512, %v1514
    %v1522 = vsel %vm212, %v1518, %v1512
    %v1523 = vld [vmem:[#allocation9 + $0xa0] sm:$0xff]
    %v1524 = vld [vmem:[#allocation9 + $0xa8] sm:$0xff]
    %v1525 = vld [vmem:[#allocation9 + $0xb0] sm:$0xff]
    %v1526 = vld [vmem:[#allocation9 + $0xb8] sm:$0xff]
    %v1527 = vmul.f32 %v1521, %v1523
    %v1528 = vmul.f32 %v1520, %v1524
    %v1529 = vmul.f32 %v1519, %v1525
    %v1530 = vmul.f32 %v1522, %v1526
    %1531 = vst [vmem:[#allocation2 + $0xa0] sm:$0xff] %v1527
    %1532 = vst [vmem:[#allocation2 + $0xa8] sm:$0xff] %v1528
    %1533 = vst [vmem:[#allocation2 + $0xb0] sm:$0xff] %v1529
    %1534 = vst [vmem:[#allocation2 + $0xb8] sm:$0xff] %v1530
    %1535 = vrot.lane.b32.xlu0 %v1407, 113
    %v1536 = vpop.permute.xlu0 %1535
    %1537 = vrot.lane.b32.xlu0 %v1408, 113
    %v1538 = vpop.permute.xlu0 %1537
    %1539 = vrot.lane.b32.xlu0 %v1409, 113
    %v1540 = vpop.permute.xlu0 %1539
    %1541 = vrot.lane.b32.xlu0 %v1410, 113
    %v1542 = vpop.permute.xlu0 %1541
    %v1543 = vsel %vm237, %v1540, %v1542
    %v1544 = vsel %vm237, %v1538, %v1540
    %v1545 = vsel %vm237, %v1536, %v1538
    %v1546 = vsel %vm237, %v1542, %v1536
    %v1547 = vld [vmem:[#allocation9 + $0xc0] sm:$0xff]
    %v1548 = vld [vmem:[#allocation9 + $0xc8] sm:$0xff]
    %v1549 = vld [vmem:[#allocation9 + $0xd0] sm:$0xff]
    %v1550 = vld [vmem:[#allocation9 + $0xd8] sm:$0xff]
    %v1551 = vmul.f32 %v1545, %v1547
    %v1552 = vmul.f32 %v1544, %v1548
    %v1553 = vmul.f32 %v1543, %v1549
    %v1554 = vmul.f32 %v1546, %v1550
    %1555 = vst [vmem:[#allocation2 + $0xc0] sm:$0xff] %v1551
    %1556 = vst [vmem:[#allocation2 + $0xc8] sm:$0xff] %v1552
    %1557 = vst [vmem:[#allocation2 + $0xd0] sm:$0xff] %v1553
    %1558 = vst [vmem:[#allocation2 + $0xd8] sm:$0xff] %v1554
    %1559 = vrot.lane.b32.xlu0 %v1407, 112
    %v1560 = vpop.permute.xlu0 %1559
    %1561 = vrot.lane.b32.xlu0 %v1408, 112
    %v1562 = vpop.permute.xlu0 %1561
    %1563 = vrot.lane.b32.xlu0 %v1409, 112
    %v1564 = vpop.permute.xlu0 %1563
    %1565 = vrot.lane.b32.xlu0 %v1410, 112
    %v1566 = vpop.permute.xlu0 %1565
    %v1567 = vsel %vm262, %v1564, %v1566
    %v1568 = vsel %vm262, %v1562, %v1564
    %v1569 = vsel %vm262, %v1560, %v1562
    %v1570 = vsel %vm262, %v1566, %v1560
    %v1571 = vld [vmem:[#allocation9 + $0xe0] sm:$0xff]
    %v1572 = vld [vmem:[#allocation9 + $0xe8] sm:$0xff]
    %v1573 = vld [vmem:[#allocation9 + $0xf0] sm:$0xff]
    %v1574 = vld [vmem:[#allocation9 + $0xf8] sm:$0xff]
    %v1575 = vmul.f32 %v1569, %v1571
    %v1576 = vmul.f32 %v1568, %v1572
    %v1577 = vmul.f32 %v1567, %v1573
    %v1578 = vmul.f32 %v1570, %v1574
    %1579 = vst [vmem:[#allocation2 + $0xe0] sm:$0xff] %v1575
    %1580 = vst [vmem:[#allocation2 + $0xe8] sm:$0xff] %v1576
    %1581 = vst [vmem:[#allocation2 + $0xf0] sm:$0xff] %v1577
    %1582 = vst [vmem:[#allocation2 + $0xf8] sm:$0xff] %v1578
    %1583 = vrot.lane.b32.xlu0 %v1407, 111
    %v1584 = vpop.permute.xlu0 %1583
    %1585 = vrot.lane.b32.xlu0 %v1408, 111
    %v1586 = vpop.permute.xlu0 %1585
    %1587 = vrot.lane.b32.xlu0 %v1409, 111
    %v1588 = vpop.permute.xlu0 %1587
    %1589 = vrot.lane.b32.xlu0 %v1410, 111
    %v1590 = vpop.permute.xlu0 %1589
    %v1591 = vsel %vm287, %v1588, %v1590
    %v1592 = vsel %vm287, %v1586, %v1588
    %v1593 = vsel %vm287, %v1584, %v1586
    %v1594 = vsel %vm287, %v1590, %v1584
    %v1595 = vld [vmem:[#allocation9 + $0x100] sm:$0xff]
    %v1596 = vld [vmem:[#allocation9 + $0x108] sm:$0xff]
    %v1597 = vld [vmem:[#allocation9 + $0x110] sm:$0xff]
    %v1598 = vld [vmem:[#allocation9 + $0x118] sm:$0xff]
    %v1599 = vmul.f32 %v1593, %v1595
    %v1600 = vmul.f32 %v1592, %v1596
    %v1601 = vmul.f32 %v1591, %v1597
    %v1602 = vmul.f32 %v1594, %v1598
    %1603 = vst [vmem:[#allocation2 + $0x100] sm:$0xff] %v1599
    %1604 = vst [vmem:[#allocation2 + $0x108] sm:$0xff] %v1600
    %1605 = vst [vmem:[#allocation2 + $0x110] sm:$0xff] %v1601
    %1606 = vst [vmem:[#allocation2 + $0x118] sm:$0xff] %v1602
    %v1607 = vld [vmem:[#allocation2] sm:$0xff]
    %v1608 = vld [vmem:[#allocation2 + $0x8] sm:$0xff]
    %v1609 = vld [vmem:[#allocation2 + $0x10] sm:$0xff]
    %v1610 = vld [vmem:[#allocation2 + $0x18] sm:$0xff]
    %v1611 = vld [vmem:[#allocation2 + $0x20] sm:$0xff]
    %v1612 = vld [vmem:[#allocation2 + $0x28] sm:$0xff]
    %v1613 = vld [vmem:[#allocation2 + $0x30] sm:$0xff]
    %v1614 = vld [vmem:[#allocation2 + $0x38] sm:$0xff]
    %v1615 = vld [vmem:[#allocation2 + $0x40] sm:$0xff]
    %v1616 = vld [vmem:[#allocation2 + $0x48] sm:$0xff]
    %v1617 = vld [vmem:[#allocation2 + $0x50] sm:$0xff]
    %v1618 = vld [vmem:[#allocation2 + $0x58] sm:$0xff]
    %v1619 = vld [vmem:[#allocation2 + $0x60] sm:$0xff]
    %v1620 = vld [vmem:[#allocation2 + $0x68] sm:$0xff]
    %v1621 = vld [vmem:[#allocation2 + $0x70] sm:$0xff]
    %v1622 = vld [vmem:[#allocation2 + $0x78] sm:$0xff]
    %v1623 = vld [vmem:[#allocation2 + $0x80] sm:$0xff]
    %v1624 = vld [vmem:[#allocation2 + $0x88] sm:$0xff]
    %v1625 = vld [vmem:[#allocation2 + $0x90] sm:$0xff]
    %v1626 = vld [vmem:[#allocation2 + $0x98] sm:$0xff]
    %v1627 = vld [vmem:[#allocation2 + $0xa0] sm:$0xff]
    %v1628 = vld [vmem:[#allocation2 + $0xa8] sm:$0xff]
    %v1629 = vld [vmem:[#allocation2 + $0xb0] sm:$0xff]
    %v1630 = vld [vmem:[#allocation2 + $0xb8] sm:$0xff]
    %v1631 = vld [vmem:[#allocation2 + $0xc0] sm:$0xff]
    %v1632 = vld [vmem:[#allocation2 + $0xc8] sm:$0xff]
    %v1633 = vld [vmem:[#allocation2 + $0xd0] sm:$0xff]
    %v1634 = vld [vmem:[#allocation2 + $0xd8] sm:$0xff]
    %v1635 = vld [vmem:[#allocation2 + $0xe0] sm:$0xff]
    %v1636 = vld [vmem:[#allocation2 + $0xe8] sm:$0xff]
    %v1637 = vld [vmem:[#allocation2 + $0xf0] sm:$0xff]
    %v1638 = vld [vmem:[#allocation2 + $0xf8] sm:$0xff]
    %v1639 = vld [vmem:[#allocation2 + $0x100] sm:$0xff]
    %v1640 = vld [vmem:[#allocation2 + $0x108] sm:$0xff]
    %v1641 = vld [vmem:[#allocation2 + $0x110] sm:$0xff]
    %v1642 = vld [vmem:[#allocation2 + $0x118] sm:$0xff]
    %v1643 = vld [vmem:[#allocation2 + $0x120] sm:$0xff]
    %v1644 = vld [vmem:[#allocation2 + $0x128] sm:$0xff]
    %v1645 = vld [vmem:[#allocation2 + $0x130] sm:$0xff]
    %v1646 = vld [vmem:[#allocation2 + $0x138] sm:$0xff]
    %1647 = vmatpush.msra.mxu0 0.0
    %1648 = vmatpush.msra.mxu0 0.0
    %1649 = vmatpush.msra.mxu0 0.0
    %1650 = vmatpush.msra.mxu0 0.0
    %1651 = vmatpush.msra.mxu0 0.0
    %1652 = vmatpush.msra.mxu0 0.0
    %1653 = vmatpush.msra.mxu0 %v1643
    %1654 = vmatpush.msra.mxu0 %v1639
    %1655 = vmatpush.msra.mxu0 %v1635
    %1656 = vmatpush.msra.mxu0 %v1631
    %1657 = vmatpush.msra.mxu0 %v1627
    %1658 = vmatpush.msra.mxu0 %v1623
    %1659 = vmatpush.msra.mxu0 %v1619
    %1660 = vmatpush.msra.mxu0 %v1615
    %1661 = vmatpush.msra.mxu0 %v1611
    %1662 = vmatpush.msra.mxu0 %v1607
    %1663 = vmatmul.f32.gmra.mxu0 %v346
    %v1664 = vpop.f32.mrf.mxu0
    %v1665 = vadd.f32 0.0, %v1664
    %1666 = vdwg.mxu0
    %1667 = vmatpush.msra.mxu0 0.0
    %1668 = vmatpush.msra.mxu0 0.0
    %1669 = vmatpush.msra.mxu0 0.0
    %1670 = vmatpush.msra.mxu0 0.0
    %1671 = vmatpush.msra.mxu0 0.0
    %1672 = vmatpush.msra.mxu0 0.0
    %1673 = vmatpush.msra.mxu0 %v1644
    %1674 = vmatpush.msra.mxu0 %v1640
    %1675 = vmatpush.msra.mxu0 %v1636
    %1676 = vmatpush.msra.mxu0 %v1632
    %1677 = vmatpush.msra.mxu0 %v1628
    %1678 = vmatpush.msra.mxu0 %v1624
    %1679 = vmatpush.msra.mxu0 %v1620
    %1680 = vmatpush.msra.mxu0 %v1616
    %1681 = vmatpush.msra.mxu0 %v1612
    %1682 = vmatpush.msra.mxu0 %v1608
    %1683 = vmatmul.f32.gmra.mxu0 %v346
    %v1684 = vpop.f32.mrf.mxu0
    %v1685 = vadd.f32 0.0, %v1684
    %1686 = vdwg.mxu0
    %1687 = vmatpush.msra.mxu0 0.0
    %1688 = vmatpush.msra.mxu0 0.0
    %1689 = vmatpush.msra.mxu0 0.0
    %1690 = vmatpush.msra.mxu0 0.0
    %1691 = vmatpush.msra.mxu0 0.0
    %1692 = vmatpush.msra.mxu0 0.0
    %1693 = vmatpush.msra.mxu0 %v1645
    %1694 = vmatpush.msra.mxu0 %v1641
    %1695 = vmatpush.msra.mxu0 %v1637
    %1696 = vmatpush.msra.mxu0 %v1633
    %1697 = vmatpush.msra.mxu0 %v1629
    %1698 = vmatpush.msra.mxu0 %v1625
    %1699 = vmatpush.msra.mxu0 %v1621
    %1700 = vmatpush.msra.mxu0 %v1617
    %1701 = vmatpush.msra.mxu0 %v1613
    %1702 = vmatpush.msra.mxu0 %v1609
    %1703 = vmatmul.f32.gmra.mxu0 %v346
    %v1704 = vpop.f32.mrf.mxu0
    %v1705 = vadd.f32 0.0, %v1704
    %1706 = vdwg.mxu0
    %1707 = vmatpush.msra.mxu0 0.0
    %1708 = vmatpush.msra.mxu0 0.0
    %1709 = vmatpush.msra.mxu0 0.0
    %1710 = vmatpush.msra.mxu0 0.0
    %1711 = vmatpush.msra.mxu0 0.0
    %1712 = vmatpush.msra.mxu0 0.0
    %1713 = vmatpush.msra.mxu0 %v1646
    %1714 = vmatpush.msra.mxu0 %v1642
    %1715 = vmatpush.msra.mxu0 %v1638
    %1716 = vmatpush.msra.mxu0 %v1634
    %1717 = vmatpush.msra.mxu0 %v1630
    %1718 = vmatpush.msra.mxu0 %v1626
    %1719 = vmatpush.msra.mxu0 %v1622
    %1720 = vmatpush.msra.mxu0 %v1618
    %1721 = vmatpush.msra.mxu0 %v1614
    %1722 = vmatpush.msra.mxu0 %v1610
    %1723 = vmatmul.f32.gmra.mxu0 %v346
    %v1724 = vpop.f32.mrf.mxu0
    %v1725 = vadd.f32 0.0, %v1724
    %1726 = vdwg.mxu0
    %v1727 = vmax.f32 %v1665, 0.0
    %v1728 = vmax.f32 %v1685, 0.0
    %v1729 = vmax.f32 %v1705, 0.0
    %v1730 = vmax.f32 %v1725, 0.0
    %1731 = vrot.lane.b32.xlu0 %v1727, 17
    %v1732 = vpop.permute.xlu0 %1731
    %1733 = vrot.lane.b32.xlu0 %v1728, 17
    %v1734 = vpop.permute.xlu0 %1733
    %1735 = vrot.lane.b32.xlu0 %v1729, 17
    %v1736 = vpop.permute.xlu0 %1735
    %1737 = vrot.lane.b32.xlu0 %v1730, 17
    %v1738 = vpop.permute.xlu0 %1737
    %v1739 = vsel %vm108, %v1736, %v1738
    %v1740 = vsel %vm108, %v1734, %v1736
    %v1741 = vsel %vm108, %v1732, %v1734
    %v1742 = vsel %vm108, %v1738, %v1732
    %v1743 = vld [vmem:[#allocation9] sm:$0xff]
    %v1744 = vld [vmem:[#allocation9 + $0x8] sm:$0xff]
    %v1745 = vld [vmem:[#allocation9 + $0x10] sm:$0xff]
    %v1746 = vld [vmem:[#allocation9 + $0x18] sm:$0xff]
    %v1747 = vmul.f32 %v1742, %v1743
    %v1748 = vmul.f32 %v1741, %v1744
    %v1749 = vmul.f32 %v1740, %v1745
    %v1750 = vmul.f32 %v1739, %v1746
    %1751 = vst [vmem:[#allocation2] sm:$0xff] %v1747
    %1752 = vst [vmem:[#allocation2 + $0x8] sm:$0xff] %v1748
    %1753 = vst [vmem:[#allocation2 + $0x10] sm:$0xff] %v1749
    %1754 = vst [vmem:[#allocation2 + $0x18] sm:$0xff] %v1750
    %1755 = vrot.lane.b32.xlu0 %v1727, 16
    %v1756 = vpop.permute.xlu0 %1755
    %1757 = vrot.lane.b32.xlu0 %v1728, 16
    %v1758 = vpop.permute.xlu0 %1757
    %1759 = vrot.lane.b32.xlu0 %v1729, 16
    %v1760 = vpop.permute.xlu0 %1759
    %1761 = vrot.lane.b32.xlu0 %v1730, 16
    %v1762 = vpop.permute.xlu0 %1761
    %v1763 = vsel %vm133, %v1760, %v1762
    %v1764 = vsel %vm133, %v1758, %v1760
    %v1765 = vsel %vm133, %v1756, %v1758
    %v1766 = vsel %vm133, %v1762, %v1756
    %v1767 = vld [vmem:[#allocation9 + $0x20] sm:$0xff]
    %v1768 = vld [vmem:[#allocation9 + $0x28] sm:$0xff]
    %v1769 = vld [vmem:[#allocation9 + $0x30] sm:$0xff]
    %v1770 = vld [vmem:[#allocation9 + $0x38] sm:$0xff]
    %v1771 = vmul.f32 %v1766, %v1767
    %v1772 = vmul.f32 %v1765, %v1768
    %v1773 = vmul.f32 %v1764, %v1769
    %v1774 = vmul.f32 %v1763, %v1770
    %1775 = vst [vmem:[#allocation2 + $0x20] sm:$0xff] %v1771
    %1776 = vst [vmem:[#allocation2 + $0x28] sm:$0xff] %v1772
    %1777 = vst [vmem:[#allocation2 + $0x30] sm:$0xff] %v1773
    %1778 = vst [vmem:[#allocation2 + $0x38] sm:$0xff] %v1774
    %1779 = vrot.lane.b32.xlu0 %v1727, 15
    %v1780 = vpop.permute.xlu0 %1779
    %1781 = vrot.lane.b32.xlu0 %v1728, 15
    %v1782 = vpop.permute.xlu0 %1781
    %1783 = vrot.lane.b32.xlu0 %v1729, 15
    %v1784 = vpop.permute.xlu0 %1783
    %1785 = vrot.lane.b32.xlu0 %v1730, 15
    %v1786 = vpop.permute.xlu0 %1785
    %v1787 = vsel %vm158, %v1784, %v1786
    %v1788 = vsel %vm158, %v1782, %v1784
    %v1789 = vsel %vm158, %v1780, %v1782
    %v1790 = vsel %vm158, %v1786, %v1780
    %v1791 = vld [vmem:[#allocation9 + $0x40] sm:$0xff]
    %v1792 = vld [vmem:[#allocation9 + $0x48] sm:$0xff]
    %v1793 = vld [vmem:[#allocation9 + $0x50] sm:$0xff]
    %v1794 = vld [vmem:[#allocation9 + $0x58] sm:$0xff]
    %v1795 = vmul.f32 %v1790, %v1791
    %v1796 = vmul.f32 %v1789, %v1792
    %v1797 = vmul.f32 %v1788, %v1793
    %v1798 = vmul.f32 %v1787, %v1794
    %1799 = vst [vmem:[#allocation2 + $0x40] sm:$0xff] %v1795
    %1800 = vst [vmem:[#allocation2 + $0x48] sm:$0xff] %v1796
    %1801 = vst [vmem:[#allocation2 + $0x50] sm:$0xff] %v1797
    %1802 = vst [vmem:[#allocation2 + $0x58] sm:$0xff] %v1798
    %1803 = vrot.lane.b32.xlu0 %v1727, 1
    %v1804 = vpop.permute.xlu0 %1803
    %1805 = vrot.lane.b32.xlu0 %v1728, 1
    %v1806 = vpop.permute.xlu0 %1805
    %1807 = vrot.lane.b32.xlu0 %v1729, 1
    %v1808 = vpop.permute.xlu0 %1807
    %1809 = vrot.lane.b32.xlu0 %v1730, 1
    %v1810 = vpop.permute.xlu0 %1809
    %v1811 = vsel %vm183, %v1808, %v1810
    %v1812 = vsel %vm183, %v1806, %v1808
    %v1813 = vsel %vm183, %v1804, %v1806
    %v1814 = vsel %vm183, %v1810, %v1804
    %v1815 = vld [vmem:[#allocation9 + $0x60] sm:$0xff]
    %v1816 = vld [vmem:[#allocation9 + $0x68] sm:$0xff]
    %v1817 = vld [vmem:[#allocation9 + $0x70] sm:$0xff]
    %v1818 = vld [vmem:[#allocation9 + $0x78] sm:$0xff]
    %v1819 = vmul.f32 %v1814, %v1815
    %v1820 = vmul.f32 %v1813, %v1816
    %v1821 = vmul.f32 %v1812, %v1817
    %v1822 = vmul.f32 %v1811, %v1818
    %1823 = vst [vmem:[#allocation2 + $0x60] sm:$0xff] %v1819
    %1824 = vst [vmem:[#allocation2 + $0x68] sm:$0xff] %v1820
    %1825 = vst [vmem:[#allocation2 + $0x70] sm:$0xff] %v1821
    %1826 = vst [vmem:[#allocation2 + $0x78] sm:$0xff] %v1822
    %1827 = vst [vmem:[#allocation2 + $0x80] sm:$0xff] %v1727
    %1828 = vst [vmem:[#allocation2 + $0x88] sm:$0xff] %v1728
    %1829 = vst [vmem:[#allocation2 + $0x90] sm:$0xff] %v1729
    %1830 = vst [vmem:[#allocation2 + $0x98] sm:$0xff] %v1730
    %1831 = vrot.lane.b32.xlu0 %v1727, 127
    %v1832 = vpop.permute.xlu0 %1831
    %1833 = vrot.lane.b32.xlu0 %v1728, 127
    %v1834 = vpop.permute.xlu0 %1833
    %1835 = vrot.lane.b32.xlu0 %v1729, 127
    %v1836 = vpop.permute.xlu0 %1835
    %1837 = vrot.lane.b32.xlu0 %v1730, 127
    %v1838 = vpop.permute.xlu0 %1837
    %v1839 = vsel %vm212, %v1836, %v1838
    %v1840 = vsel %vm212, %v1834, %v1836
    %v1841 = vsel %vm212, %v1832, %v1834
    %v1842 = vsel %vm212, %v1838, %v1832
    %v1843 = vld [vmem:[#allocation9 + $0xa0] sm:$0xff]
    %v1844 = vld [vmem:[#allocation9 + $0xa8] sm:$0xff]
    %v1845 = vld [vmem:[#allocation9 + $0xb0] sm:$0xff]
    %v1846 = vld [vmem:[#allocation9 + $0xb8] sm:$0xff]
    %v1847 = vmul.f32 %v1841, %v1843
    %v1848 = vmul.f32 %v1840, %v1844
    %v1849 = vmul.f32 %v1839, %v1845
    %v1850 = vmul.f32 %v1842, %v1846
    %1851 = vst [vmem:[#allocation2 + $0xa0] sm:$0xff] %v1847
    %1852 = vst [vmem:[#allocation2 + $0xa8] sm:$0xff] %v1848
    %1853 = vst [vmem:[#allocation2 + $0xb0] sm:$0xff] %v1849
    %1854 = vst [vmem:[#allocation2 + $0xb8] sm:$0xff] %v1850
    %1855 = vrot.lane.b32.xlu0 %v1727, 113
    %v1856 = vpop.permute.xlu0 %1855
    %1857 = vrot.lane.b32.xlu0 %v1728, 113
    %v1858 = vpop.permute.xlu0 %1857
    %1859 = vrot.lane.b32.xlu0 %v1729, 113
    %v1860 = vpop.permute.xlu0 %1859
    %1861 = vrot.lane.b32.xlu0 %v1730, 113
    %v1862 = vpop.permute.xlu0 %1861
    %v1863 = vsel %vm237, %v1860, %v1862
    %v1864 = vsel %vm237, %v1858, %v1860
    %v1865 = vsel %vm237, %v1856, %v1858
    %v1866 = vsel %vm237, %v1862, %v1856
    %v1867 = vld [vmem:[#allocation9 + $0xc0] sm:$0xff]
    %v1868 = vld [vmem:[#allocation9 + $0xc8] sm:$0xff]
    %v1869 = vld [vmem:[#allocation9 + $0xd0] sm:$0xff]
    %v1870 = vld [vmem:[#allocation9 + $0xd8] sm:$0xff]
    %v1871 = vmul.f32 %v1865, %v1867
    %v1872 = vmul.f32 %v1864, %v1868
    %v1873 = vmul.f32 %v1863, %v1869
    %v1874 = vmul.f32 %v1866, %v1870
    %1875 = vst [vmem:[#allocation2 + $0xc0] sm:$0xff] %v1871
    %1876 = vst [vmem:[#allocation2 + $0xc8] sm:$0xff] %v1872
    %1877 = vst [vmem:[#allocation2 + $0xd0] sm:$0xff] %v1873
    %1878 = vst [vmem:[#allocation2 + $0xd8] sm:$0xff] %v1874
    %1879 = vrot.lane.b32.xlu0 %v1727, 112
    %v1880 = vpop.permute.xlu0 %1879
    %1881 = vrot.lane.b32.xlu0 %v1728, 112
    %v1882 = vpop.permute.xlu0 %1881
    %1883 = vrot.lane.b32.xlu0 %v1729, 112
    %v1884 = vpop.permute.xlu0 %1883
    %1885 = vrot.lane.b32.xlu0 %v1730, 112
    %v1886 = vpop.permute.xlu0 %1885
    %v1887 = vsel %vm262, %v1884, %v1886
    %v1888 = vsel %vm262, %v1882, %v1884
    %v1889 = vsel %vm262, %v1880, %v1882
    %v1890 = vsel %vm262, %v1886, %v1880
    %v1891 = vld [vmem:[#allocation9 + $0xe0] sm:$0xff]
    %v1892 = vld [vmem:[#allocation9 + $0xe8] sm:$0xff]
    %v1893 = vld [vmem:[#allocation9 + $0xf0] sm:$0xff]
    %v1894 = vld [vmem:[#allocation9 + $0xf8] sm:$0xff]
    %v1895 = vmul.f32 %v1889, %v1891
    %v1896 = vmul.f32 %v1888, %v1892
    %v1897 = vmul.f32 %v1887, %v1893
    %v1898 = vmul.f32 %v1890, %v1894
    %1899 = vst [vmem:[#allocation2 + $0xe0] sm:$0xff] %v1895
    %1900 = vst [vmem:[#allocation2 + $0xe8] sm:$0xff] %v1896
    %1901 = vst [vmem:[#allocation2 + $0xf0] sm:$0xff] %v1897
    %1902 = vst [vmem:[#allocation2 + $0xf8] sm:$0xff] %v1898
    %1903 = vrot.lane.b32.xlu0 %v1727, 111
    %v1904 = vpop.permute.xlu0 %1903
    %1905 = vrot.lane.b32.xlu0 %v1728, 111
    %v1906 = vpop.permute.xlu0 %1905
    %1907 = vrot.lane.b32.xlu0 %v1729, 111
    %v1908 = vpop.permute.xlu0 %1907
    %1909 = vrot.lane.b32.xlu0 %v1730, 111
    %v1910 = vpop.permute.xlu0 %1909
    %v1911 = vsel %vm287, %v1908, %v1910
    %v1912 = vsel %vm287, %v1906, %v1908
    %v1913 = vsel %vm287, %v1904, %v1906
    %v1914 = vsel %vm287, %v1910, %v1904
    %v1915 = vld [vmem:[#allocation9 + $0x100] sm:$0xff]
    %v1916 = vld [vmem:[#allocation9 + $0x108] sm:$0xff]
    %v1917 = vld [vmem:[#allocation9 + $0x110] sm:$0xff]
    %v1918 = vld [vmem:[#allocation9 + $0x118] sm:$0xff]
    %v1919 = vmul.f32 %v1913, %v1915
    %v1920 = vmul.f32 %v1912, %v1916
    %v1921 = vmul.f32 %v1911, %v1917
    %v1922 = vmul.f32 %v1914, %v1918
    %1923 = vst [vmem:[#allocation2 + $0x100] sm:$0xff] %v1919
    %1924 = vst [vmem:[#allocation2 + $0x108] sm:$0xff] %v1920
    %1925 = vst [vmem:[#allocation2 + $0x110] sm:$0xff] %v1921
    %1926 = vst [vmem:[#allocation2 + $0x118] sm:$0xff] %v1922
    %v1927 = vld [vmem:[#allocation2] sm:$0xff]
    %v1928 = vld [vmem:[#allocation2 + $0x8] sm:$0xff]
    %v1929 = vld [vmem:[#allocation2 + $0x10] sm:$0xff]
    %v1930 = vld [vmem:[#allocation2 + $0x18] sm:$0xff]
    %v1931 = vld [vmem:[#allocation2 + $0x20] sm:$0xff]
    %v1932 = vld [vmem:[#allocation2 + $0x28] sm:$0xff]
    %v1933 = vld [vmem:[#allocation2 + $0x30] sm:$0xff]
    %v1934 = vld [vmem:[#allocation2 + $0x38] sm:$0xff]
    %v1935 = vld [vmem:[#allocation2 + $0x40] sm:$0xff]
    %v1936 = vld [vmem:[#allocation2 + $0x48] sm:$0xff]
    %v1937 = vld [vmem:[#allocation2 + $0x50] sm:$0xff]
    %v1938 = vld [vmem:[#allocation2 + $0x58] sm:$0xff]
    %v1939 = vld [vmem:[#allocation2 + $0x60] sm:$0xff]
    %v1940 = vld [vmem:[#allocation2 + $0x68] sm:$0xff]
    %v1941 = vld [vmem:[#allocation2 + $0x70] sm:$0xff]
    %v1942 = vld [vmem:[#allocation2 + $0x78] sm:$0xff]
    %v1943 = vld [vmem:[#allocation2 + $0x80] sm:$0xff]
    %v1944 = vld [vmem:[#allocation2 + $0x88] sm:$0xff]
    %v1945 = vld [vmem:[#allocation2 + $0x90] sm:$0xff]
    %v1946 = vld [vmem:[#allocation2 + $0x98] sm:$0xff]
    %v1947 = vld [vmem:[#allocation2 + $0xa0] sm:$0xff]
    %v1948 = vld [vmem:[#allocation2 + $0xa8] sm:$0xff]
    %v1949 = vld [vmem:[#allocation2 + $0xb0] sm:$0xff]
    %v1950 = vld [vmem:[#allocation2 + $0xb8] sm:$0xff]
    %v1951 = vld [vmem:[#allocation2 + $0xc0] sm:$0xff]
    %v1952 = vld [vmem:[#allocation2 + $0xc8] sm:$0xff]
    %v1953 = vld [vmem:[#allocation2 + $0xd0] sm:$0xff]
    %v1954 = vld [vmem:[#allocation2 + $0xd8] sm:$0xff]
    %v1955 = vld [vmem:[#allocation2 + $0xe0] sm:$0xff]
    %v1956 = vld [vmem:[#allocation2 + $0xe8] sm:$0xff]
    %v1957 = vld [vmem:[#allocation2 + $0xf0] sm:$0xff]
    %v1958 = vld [vmem:[#allocation2 + $0xf8] sm:$0xff]
    %v1959 = vld [vmem:[#allocation2 + $0x100] sm:$0xff]
    %v1960 = vld [vmem:[#allocation2 + $0x108] sm:$0xff]
    %v1961 = vld [vmem:[#allocation2 + $0x110] sm:$0xff]
    %v1962 = vld [vmem:[#allocation2 + $0x118] sm:$0xff]
    %v1963 = vld [vmem:[#allocation2 + $0x120] sm:$0xff]
    %v1964 = vld [vmem:[#allocation2 + $0x128] sm:$0xff]
    %v1965 = vld [vmem:[#allocation2 + $0x130] sm:$0xff]
    %v1966 = vld [vmem:[#allocation2 + $0x138] sm:$0xff]
    %1967 = vmatpush.msra.mxu0 0.0
    %1968 = vmatpush.msra.mxu0 0.0
    %1969 = vmatpush.msra.mxu0 0.0
    %1970 = vmatpush.msra.mxu0 0.0
    %1971 = vmatpush.msra.mxu0 0.0
    %1972 = vmatpush.msra.mxu0 0.0
    %1973 = vmatpush.msra.mxu0 %v1963
    %1974 = vmatpush.msra.mxu0 %v1959
    %1975 = vmatpush.msra.mxu0 %v1955
    %1976 = vmatpush.msra.mxu0 %v1951
    %1977 = vmatpush.msra.mxu0 %v1947
    %1978 = vmatpush.msra.mxu0 %v1943
    %1979 = vmatpush.msra.mxu0 %v1939
    %1980 = vmatpush.msra.mxu0 %v1935
    %1981 = vmatpush.msra.mxu0 %v1931
    %1982 = vmatpush.msra.mxu0 %v1927
    %1983 = vmatmul.f32.gmra.mxu0 %v669
    %v1984 = vpop.f32.mrf.mxu0
    %v1985 = vadd.f32 0.0, %v1984
    %1986 = vdwg.mxu0
    %1987 = vmatpush.msra.mxu0 0.0
    %1988 = vmatpush.msra.mxu0 0.0
    %1989 = vmatpush.msra.mxu0 0.0
    %1990 = vmatpush.msra.mxu0 0.0
    %1991 = vmatpush.msra.mxu0 0.0
    %1992 = vmatpush.msra.mxu0 0.0
    %1993 = vmatpush.msra.mxu0 %v1964
    %1994 = vmatpush.msra.mxu0 %v1960
    %1995 = vmatpush.msra.mxu0 %v1956
    %1996 = vmatpush.msra.mxu0 %v1952
    %1997 = vmatpush.msra.mxu0 %v1948
    %1998 = vmatpush.msra.mxu0 %v1944
    %1999 = vmatpush.msra.mxu0 %v1940
    %2000 = vmatpush.msra.mxu0 %v1936
    %2001 = vmatpush.msra.mxu0 %v1932
    %2002 = vmatpush.msra.mxu0 %v1928
    %2003 = vmatmul.f32.gmra.mxu0 %v669
    %v2004 = vpop.f32.mrf.mxu0
    %v2005 = vadd.f32 0.0, %v2004
    %2006 = vdwg.mxu0
    %2007 = vmatpush.msra.mxu0 0.0
    %2008 = vmatpush.msra.mxu0 0.0
    %2009 = vmatpush.msra.mxu0 0.0
    %2010 = vmatpush.msra.mxu0 0.0
    %2011 = vmatpush.msra.mxu0 0.0
    %2012 = vmatpush.msra.mxu0 0.0
    %2013 = vmatpush.msra.mxu0 %v1965
    %2014 = vmatpush.msra.mxu0 %v1961
    %2015 = vmatpush.msra.mxu0 %v1957
    %2016 = vmatpush.msra.mxu0 %v1953
    %2017 = vmatpush.msra.mxu0 %v1949
    %2018 = vmatpush.msra.mxu0 %v1945
    %2019 = vmatpush.msra.mxu0 %v1941
    %2020 = vmatpush.msra.mxu0 %v1937
    %2021 = vmatpush.msra.mxu0 %v1933
    %2022 = vmatpush.msra.mxu0 %v1929
    %2023 = vmatmul.f32.gmra.mxu0 %v669
    %v2024 = vpop.f32.mrf.mxu0
    %v2025 = vadd.f32 0.0, %v2024
    %2026 = vdwg.mxu0
    %2027 = vmatpush.msra.mxu0 0.0
    %2028 = vmatpush.msra.mxu0 0.0
    %2029 = vmatpush.msra.mxu0 0.0
    %2030 = vmatpush.msra.mxu0 0.0
    %2031 = vmatpush.msra.mxu0 0.0
    %2032 = vmatpush.msra.mxu0 0.0
    %2033 = vmatpush.msra.mxu0 %v1966
    %2034 = vmatpush.msra.mxu0 %v1962
    %2035 = vmatpush.msra.mxu0 %v1958
    %2036 = vmatpush.msra.mxu0 %v1954
    %2037 = vmatpush.msra.mxu0 %v1950
    %2038 = vmatpush.msra.mxu0 %v1946
    %2039 = vmatpush.msra.mxu0 %v1942
    %2040 = vmatpush.msra.mxu0 %v1938
    %2041 = vmatpush.msra.mxu0 %v1934
    %2042 = vmatpush.msra.mxu0 %v1930
    %2043 = vmatmul.f32.gmra.mxu0 %v669
    %v2044 = vpop.f32.mrf.mxu0
    %v2045 = vadd.f32 0.0, %v2044
    %2046 = vdwg.mxu0
    %v2047 = vmul.f32 %v1985, 0.2
    %v2048 = vmul.f32 %v2005, 0.2
    %v2049 = vmul.f32 %v2025, 0.2
    %v2050 = vmul.f32 %v2045, 0.2
    %v2051 = vmax.f32 %v1985, %v2047
    %v2052 = vmax.f32 %v2005, %v2048
    %v2053 = vmax.f32 %v2025, %v2049
    %v2054 = vmax.f32 %v2045, %v2050
    %v2055 = vadd.f32 %v2051, %v1407
    %v2056 = vadd.f32 %v2052, %v1408
    %v2057 = vadd.f32 %v2053, %v1409
    %v2058 = vadd.f32 %v2054, %v1410
    %2059 = vst [vmem:[#allocation11] sm:$0xff] %v2055
    %2060 = vst [vmem:[#allocation11 + $0x8] sm:$0xff] %v2056
    %2061 = vst [vmem:[#allocation11 + $0x10] sm:$0xff] %v2057
    %2062 = vst [vmem:[#allocation11 + $0x18] sm:$0xff] %v2058
    // Predicated region
    $region34: #{tpu_custom_call.1} parent=1 // pred_check
      _
    $region35: #{tpu_custom_call.1} parent=1 // pred_check_branch
      %2064 = sbr.rel (0) target = $region37
    $region36: #{tpu_custom_call.1} parent=1 // pred_region
      %2066 = vsyncadd [#allocation5], 0
      %s2068 = sshll.u32 [#allocation11], 4
      %s2069 = int_to_ptr.vmem [resolvable:$true] %s2068
      %s2070 = sshll.u32 %s4, 4
      %s2071 = int_to_ptr.hbm [resolvable:$true] %s2070
      %2073 = dma.vmem_to_hbm [thread:$0]  %s2069, 512, %s2071, [#allocation5]
    $region37: #{tpu_custom_call.1} parent=1 // pred_fallthru
      _
    // Predicated region
    $region38: #{tpu_custom_call.1} parent=1 // pred_check
      _
    $region39: #{tpu_custom_call.1} parent=1 // pred_check_branch
      %2075 = sbr.rel (0) target = $region41
    $region40: #{tpu_custom_call.1} parent=1 // pred_region
      %2077 = dma.done [#allocation5], 512
    $region41: #{tpu_custom_call.1} parent=1 // pred_fallthru
      _
    %2078 = vsyncpa [#allocation4], 1
    %2079 = vsyncpa [#allocation7], 1
    %2080 = vsyncpa [#allocation10], 1
    %2081 = vsyncpa [#allocation5], 1

</llo_original>
